<compile_context>
chip_gen: v5e
topology: v5e:2x2
jax: 0.10.0
libtpu: 0.0.40
codegen_flags: <defaults>
</compile_context>

<pallas_src>
import math

import jax
import jax.numpy as jnp
from jax.experimental import pallas as pl
from jax.experimental.pallas import tpu as pltpu

EPS = 1e-5  # nn.InstanceNorm2d default eps


# ----------------------------------------------------------------------------
# Fused Pallas kernel: embedding conv + gamma/beta conv + norm-apply/modulate
# ----------------------------------------------------------------------------
def _spade_fused_kernel(seg_ref, x_ref, stats_ref, w_emb_ref, b_emb_ref,
                        w_gb_ref, b_gb_ref, out_ref, emb_scr):
    """One grid step handles one (batch, H-row-tile).

    seg_ref:   (1, H+4, W, 3*Cs) bf16  dw-lane-folded seg taps, 2-row zero pad
                                       (resident per batch across row tiles)
    x_ref:     (1, TH, W, Cpad)        input activations (channels 0-padded)
    stats_ref: (1, 2, Cpad) f32        [mean, inv_std] per (batch, channel)
    w_emb_ref: (3, 3*Cs, E) bf16       embedding conv weights, dh-major
    b_emb_ref: (1, E) f32
    w_gb_ref:  (3, 3*E, 2*Cpad) bf16   gamma||beta conv weights, dh-major
    b_gb_ref:  (1, 2*Cpad) f32
    out_ref:   (1, TH, W, Cpad)
    emb_scr:   (TH+2, W, 3*E) bf16 VMEM  dw-lane-folded embedding staging
    """
    th = out_ref.shape[1]
    w = out_ref.shape[2]
    cpad = out_ref.shape[3]
    k1 = w_emb_ref.shape[1]          # 3 * Cs
    e = w_emb_ref.shape[2]           # 128
    thp = th + 2

    t = pl.program_id(1)
    last_t = pl.num_programs(1) - 1
    row0 = t * th                    # first padded-seg row needed by this tile

    # --- embedding conv3x3 + bias + ReLU: 3 dh-dots over dw-folded taps -----
    seg_tile = seg_ref[0, pl.ds(row0, thp + 2)]        # (thp+2, W, 3Cs) bf16
    emb = jnp.zeros((thp * w, e), jnp.float32)
    for dh in range(3):
        tap = seg_tile[dh:dh + thp].reshape(thp * w, k1)
        emb = emb + jnp.dot(tap, w_emb_ref[dh],
                            preferred_element_type=jnp.float32)
    emb = jnp.maximum(emb + b_emb_ref[...], 0.0).reshape(thp, w, e)

    # --- fold the W-neighbours into lanes (zero at the W conv edges) --------
    zcol = jnp.zeros((thp, 1, e), jnp.float32)
    left = jnp.concatenate([zcol, emb[:, 0:w - 1, :]], axis=1)   # emb[w-1]
    right = jnp.concatenate([emb[:, 1:w, :], zcol], axis=1)      # emb[w+1]
    emb_scr[:, :, 0:e] = left.astype(jnp.bfloat16)               # dw = 0
    emb_scr[:, :, e:2 * e] = emb.astype(jnp.bfloat16)            # dw = 1
    emb_scr[:, :, 2 * e:3 * e] = right.astype(jnp.bfloat16)      # dw = 2

    # conv zero padding of the embedding above row 0 / below row H-1
    # (must trace AFTER the scratch stores above)
    @pl.when(t == 0)
    def _():
        emb_scr[0:1] = jnp.zeros((1, w, 3 * e), jnp.bfloat16)

    @pl.when(t == last_t)
    def _():
        emb_scr[thp - 1:thp] = jnp.zeros((1, w, 3 * e), jnp.bfloat16)

    # --- gamma/beta conv3x3: 3 accumulating dots, K = 3E ---------------------
    # TODO(synk): for very large C (e.g. 1024) tile the 2*Cpad output-channel
    # axis (or shrink block_h) to bound this accumulator on v7x's 64 MiB VMEM.
    acc = jnp.zeros((th * w, 2 * cpad), jnp.float32)
    for dh in range(3):
        tap = emb_scr[dh:dh + th].reshape(th * w, 3 * e)         # bf16, aligned
        acc = acc + jnp.dot(tap, w_gb_ref[dh],
                            preferred_element_type=jnp.float32)
    gb = acc + b_gb_ref[...]                                     # (TH*W, 2Cpad)
    gamma = gb[:, 0:cpad].reshape(th, w, cpad)
    beta = gb[:, cpad:2 * cpad].reshape(th, w, cpad)

    # --- instance-norm apply + SPADE modulation (f32) ------------------------
    mean = stats_ref[0, 0:1, :]                                  # (1, Cpad)
    inv_std = stats_ref[0, 1:2, :]                               # (1, Cpad)
    xn = (x_ref[0].astype(jnp.float32) - mean) * inv_std
    out_ref[0] = (xn * (1.0 + gamma) + beta).astype(out_ref.dtype)


# ----------------------------------------------------------------------------
# JAX glue
# ----------------------------------------------------------------------------
def _nearest_upsample_nchw(seg_nchw, H, W):
    """F.interpolate(..., mode='nearest'): src = floor(dst * in / out)."""
    Hs, Ws = seg_nchw.shape[2], seg_nchw.shape[3]
    hi = (jnp.arange(H) * Hs) // H
    wi = (jnp.arange(W) * Ws) // W
    return seg_nchw[:, :, hi[:, None], wi[None, :]]               # (B,Cs,H,W)


def _vmem_capacity_bytes():
    try:
        info = pltpu.get_tpu_info()
        cap = getattr(info, "vmem_capacity_bytes", None)
        if cap:
            return int(cap)
    except Exception:
        pass
    return 64 * 1024 * 1024            # conservative fallback (v7x-sized)


def _estimate_vmem(bh, H, W, Cs, Cpad, E):
    """Rough per-step VMEM working set (double-buffered blocks + temps)."""
    thp = bh + 2
    b_x = 2 * bh * W * Cpad * 4
    b_out = 2 * bh * W * Cpad * 4
    b_seg = 2 * (H + 4) * W * 3 * Cs * 2
    b_wts = 2 * (3 * 3 * Cs * E * 2 + E * 4
                 + 3 * 3 * E * 2 * Cpad * 2 + 2 * Cpad * 4 + 2 * Cpad * 4)
    b_scr = thp * W * 3 * E * 2
    b_tmp = 4 * thp * W * E * 4 + 2 * bh * W * 2 * Cpad * 4 + 2 * bh * W * Cpad * 4
    return b_x + b_out + b_seg + b_wts + b_scr + b_tmp


def _pick_block_h(B, H, W, Cs, Cpad, E, budget):
    divisors = sorted((d for d in range(1, H + 1) if H % d == 0), reverse=True)
    for d in divisors:
        if B == 1 and H // d < 2 and H > 1:
            continue                   # keep both v7x TensorCores busy
        if _estimate_vmem(d, H, W, Cs, Cpad, E) <= budget:
            return d
    return divisors[-1]


def spade_forward(x_nchw, seg_nchw, params, *, block_h=None):
    B, C, H, W = x_nchw.shape
    Cs = seg_nchw.shape[1]
    E = params["w_emb"].shape[-1]                                 # 128
    Cpad = ((C + 127) // 128) * 128                               # lane-dense C

    cap = _vmem_capacity_bytes()
    vmem_limit = max(32 << 20, min(int(cap * 0.75), cap - (8 << 20)))

    if block_h is None:
        block_h = _pick_block_h(B, H, W, Cs, Cpad, E, int(vmem_limit * 0.6))
    assert H % block_h == 0, "H must be divisible by block_h"
    nT = H // block_h
    K1 = 3 * Cs

    # ---- instance-norm statistics: single-pass f32 reduction ----------------
    xf = x_nchw.astype(jnp.float32)
    m1 = jnp.mean(xf, axis=(2, 3))                                # (B, C)
    m2 = jnp.mean(xf * xf, axis=(2, 3))
    var = jnp.maximum(m2 - m1 * m1, 0.0)
    inv_std = jax.lax.rsqrt(var + EPS)
    if Cpad != C:
        m1 = jnp.pad(m1, ((0, 0), (0, Cpad - C)))
        inv_std = jnp.pad(inv_std, ((0, 0), (0, Cpad - C)), constant_values=1.0)
    stats = jnp.stack([m1, inv_std], axis=1)                      # (B, 2, Cpad)

    # ---- segmap: nearest upsample, fold only the 3 dw taps into lanes -------
    # TODO(synk): for very large H*W*seg_nch, switch the per-batch resident
    # seg block to pl.Element row windows (or manual DMA) to bound its VMEM use.
    seg_up = _nearest_upsample_nchw(seg_nchw, H, W)               # (B,Cs,H,W)
    seg_nhwc = jnp.transpose(seg_up, (0, 2, 3, 1)).astype(jnp.bfloat16)
    segp = jnp.pad(seg_nhwc, ((0, 0), (0, 0), (1, 1), (0, 0)))    # W zero pad
    seg_fold = jnp.concatenate(
        [segp[:, :, 0:W, :], segp[:, :, 1:W + 1, :], segp[:, :, 2:W + 2, :]],
        axis=-1)                                                  # (B,H,W,3Cs)
    seg_fold = jnp.pad(seg_fold, ((0, 0), (2, 2), (0, 0), (0, 0)))  # H zero pad

    # ---- weights: dh-major, dw folded into K; gamma||beta fused; C padded ---
    w_emb = params["w_emb"].reshape(3, K1, E).astype(jnp.bfloat16)
    b_emb = params["b_emb"].reshape(1, E).astype(jnp.float32)
    wg = params["w_gamma"].reshape(3, 3 * E, C)
    wb = params["w_beta"].reshape(3, 3 * E, C)
    w_gb = jnp.zeros((3, 3 * E, 2 * Cpad), jnp.float32)
    w_gb = w_gb.at[:, :, 0:C].set(wg).at[:, :, Cpad:Cpad + C].set(wb)
    w_gb = w_gb.astype(jnp.bfloat16)
    b_gb = jnp.zeros((2 * Cpad,), jnp.float32)
    b_gb = b_gb.at[0:C].set(params["b_gamma"]).at[Cpad:Cpad + C].set(params["b_beta"])
    b_gb = b_gb.reshape(1, 2 * Cpad)

    # ---- x: NHWC, channels zero-padded to a 128-lane multiple ---------------
    x_nhwc = jnp.transpose(x_nchw, (0, 2, 3, 1))                  # (B, H, W, C)
    if Cpad != C:
        x_nhwc = jnp.pad(x_nhwc, ((0, 0), (0, 0), (0, 0), (0, Cpad - C)))

    itemsize = x_nhwc.dtype.itemsize
    flops = 2 * B * H * W * 9 * E * (Cs + 2 * Cpad)
    bytes_accessed = (seg_fold.size * 2
                      + x_nhwc.size * itemsize + B * H * W * Cpad * itemsize
                      + w_emb.size * 2 + w_gb.size * 2
                      + (stats.size + b_emb.size + b_gb.size) * 4)

    # TODO(synk): single-buffer the constant weight/bias/stats blocks (e.g.
    # pl.Buffered(1) or a one-shot scratch copy) to reclaim VMEM on v7x for
    # very large C.
    out_nhwc = pl.pallas_call(
        _spade_fused_kernel,
        out_shape=jax.ShapeDtypeStruct((B, H, W, Cpad), x_nchw.dtype),
        grid=(B, nT),
        in_specs=[
            pl.BlockSpec((1, H + 4, W, K1), lambda b, t: (b, 0, 0, 0)),
            pl.BlockSpec((1, block_h, W, Cpad), lambda b, t: (b, t, 0, 0)),
            pl.BlockSpec((1, 2, Cpad), lambda b, t: (b, 0, 0)),
            pl.BlockSpec((3, K1, E), lambda b, t: (0, 0, 0)),
            pl.BlockSpec((1, E), lambda b, t: (0, 0)),
            pl.BlockSpec((3, 3 * E, 2 * Cpad), lambda b, t: (0, 0, 0)),
            pl.BlockSpec((1, 2 * Cpad), lambda b, t: (0, 0)),
        ],
        out_specs=pl.BlockSpec((1, block_h, W, Cpad), lambda b, t: (b, t, 0, 0)),
        scratch_shapes=[pltpu.VMEM((block_h + 2, W, 3 * E), jnp.bfloat16)],
        compiler_params=pltpu.CompilerParams(
            dimension_semantics=("parallel", "parallel"),
            vmem_limit_bytes=int(vmem_limit)),
        cost_estimate=pl.CostEstimate(
            flops=flops, transcendentals=0, bytes_accessed=bytes_accessed),
    )(seg_fold, x_nhwc, stats, w_emb, b_emb, w_gb, b_gb)

    out = out_nhwc[..., :C] if Cpad != C else out_nhwc
    return jnp.transpose(out, (0, 3, 1, 2))


# ----------------------------------------------------------------------------
# Parameter init (deterministic, mirrors Conv2d fan-in uniform init)
# ----------------------------------------------------------------------------
def init_params(key, seg_nch, output_nch, embed_nch=128):
    keys = jax.random.split(key, 6)

    def conv_w(k, cin, cout):
        bound = 1.0 / math.sqrt(cin * 9)
        return jax.random.uniform(k, (3, 3, cin, cout), jnp.float32,
                                  -bound, bound)

    def conv_b(k, cin, cout):
        bound = 1.0 / math.sqrt(cin * 9)
        return jax.random.uniform(k, (cout,), jnp.float32, -bound, bound)

    return {
        "w_emb": conv_w(keys[0], seg_nch, embed_nch),
        "b_emb": conv_b(keys[1], seg_nch, embed_nch),
        "w_gamma": conv_w(keys[2], embed_nch, output_nch),
        "b_gamma": conv_b(keys[3], embed_nch, output_nch),
        "w_beta": conv_w(keys[4], embed_nch, output_nch),
        "b_beta": conv_b(keys[5], embed_nch, output_nch),
    }


# ----------------------------------------------------------------------------
# Pure-JAX reference (for correctness check)
# ----------------------------------------------------------------------------
def _conv3x3_ref(x_nhwc, w_hwio, b):
    out = jax.lax.conv_general_dilated(
        x_nhwc, w_hwio, window_strides=(1, 1), padding=((1, 1), (1, 1)),
        dimension_numbers=("NHWC", "HWIO", "NHWC"))
    return out + b.reshape(1, 1, 1, -1)


def ref_spade(x_nchw, seg_nchw, params):
    B, C, H, W = x_nchw.shape
    mean = x_nchw.mean(axis=(2, 3), keepdims=True)
    var = ((x_nchw - mean) ** 2).mean(axis=(2, 3), keepdims=True)
    xn = (x_nchw - mean) / jnp.sqrt(var + EPS)

    seg_up = _nearest_upsample_nchw(seg_nchw, H, W)
    seg_nhwc = jnp.transpose(seg_up, (0, 2, 3, 1))
    emb = jax.nn.relu(_conv3x3_ref(seg_nhwc, params["w_emb"], params["b_emb"]))
    gamma = _conv3x3_ref(emb, params["w_gamma"], params["b_gamma"])
    beta = _conv3x3_ref(emb, params["w_beta"], params["b_beta"])
    gamma = jnp.transpose(gamma, (0, 3, 1, 2))
    beta = jnp.transpose(beta, (0, 3, 1, 2))
    return xn * (1 + gamma) + beta


# ----------------------------------------------------------------------------
if __name__ == "__main__":
    seg_nch, output_nch = 4, 4
    B, H, W = 2, 16, 16
    Hs, Ws = 8, 8

    key = jax.random.PRNGKey(0)
    kx, ks, kp = jax.random.split(key, 3)
    x = jax.random.normal(kx, (B, output_nch, H, W), jnp.float32)
    segmap = jax.random.normal(ks, (B, seg_nch, Hs, Ws), jnp.float32)
    params = init_params(kp, seg_nch, output_nch)

    out = jax.block_until_ready(jax.jit(spade_forward)(x, segmap, params))
    ref = jax.block_until_ready(ref_spade(x, segmap, params))

    assert out.shape == (B, output_nch, H, W)
    max_err = float(jnp.max(jnp.abs(out - ref)))
    # bf16 matmul operands -> loosened tolerance
    assert max_err < 5e-2, f"max abs err {max_err}"
    print("KERNEL_OK")
</pallas_src>

<mosaic_0001>
module attributes {stable_mosaic.version = 11 : i64} {
  func.func @_spade_fused_kernel(%arg0: i32, %arg1: i32, %arg2: memref<1x20x16x12xbf16, #tpu.memory_space<vmem>>, %arg3: memref<1x16x16x128xf32, #tpu.memory_space<vmem>>, %arg4: memref<1x2x128xf32, #tpu.memory_space<vmem>>, %arg5: memref<3x12x128xbf16, #tpu.memory_space<vmem>>, %arg6: memref<1x128xf32, #tpu.memory_space<vmem>>, %arg7: memref<3x384x256xbf16, #tpu.memory_space<vmem>>, %arg8: memref<1x256xf32, #tpu.memory_space<vmem>>, %arg9: memref<1x16x16x128xf32, #tpu.memory_space<vmem>>, %arg10: memref<18x16x384xbf16, #tpu.memory_space<vmem>>) attributes {dimension_semantics = [#tpu.dimension_semantics<parallel>, #tpu.dimension_semantics<parallel>], iteration_bounds = array<i64: 2, 1>, scalar_prefetch = 0 : i64, scratch_operands = 1 : i64, tpu.core_type = #tpu.core_type<tc>, window_params = [{transform_indices = @transform_0, window_bounds = array<i64: 1, 20, 16, 12>}, {transform_indices = @transform_1, window_bounds = array<i64: 1, 16, 16, 128>}, {transform_indices = @transform_2, window_bounds = array<i64: 1, 2, 128>}, {pipeline_mode = #tpu.pipeline_mode<synchronous>, transform_indices = @transform_3, window_bounds = array<i64: 3, 12, 128>}, {pipeline_mode = #tpu.pipeline_mode<synchronous>, transform_indices = @transform_4, window_bounds = array<i64: 1, 128>}, {pipeline_mode = #tpu.pipeline_mode<synchronous>, transform_indices = @transform_5, window_bounds = array<i64: 3, 384, 256>}, {pipeline_mode = #tpu.pipeline_mode<synchronous>, transform_indices = @transform_6, window_bounds = array<i64: 1, 256>}, {transform_indices = @transform_7, window_bounds = array<i64: 1, 16, 16, 128>}]} {
    %c16_i32 = arith.constant 16 : i32
    %0 = arith.muli %arg1, %c16_i32 : i32
    %c0 = arith.constant 0 : index
    %1 = arith.index_cast %0 : i32 to index
    %c0_0 = arith.constant 0 : index
    %c0_1 = arith.constant 0 : index
    %2 = vector.load %arg2[%c0, %1, %c0_0, %c0_1] : memref<1x20x16x12xbf16, #tpu.memory_space<vmem>>, vector<1x20x16x12xbf16>
    %3 = vector.shape_cast %2 : vector<1x20x16x12xbf16> to vector<20x16x12xbf16>
    %cst = arith.constant 0.000000e+00 : f32
    %4 = vector.broadcast %cst : f32 to vector<288x128xf32>
    %5 = vector.extract_strided_slice %3 {offsets = [0, 0, 0], sizes = [18, 16, 12], strides = [1, 1, 1]} : vector<20x16x12xbf16> to vector<18x16x12xbf16>
    %6 = vector.shape_cast %5 : vector<18x16x12xbf16> to vector<288x12xbf16>
    %c0_2 = arith.constant 0 : index
    %c0_3 = arith.constant 0 : index
    %c0_4 = arith.constant 0 : index
    %7 = vector.load %arg5[%c0_2, %c0_3, %c0_4] : memref<3x12x128xbf16, #tpu.memory_space<vmem>>, vector<1x12x128xbf16>
    %8 = vector.shape_cast %7 : vector<1x12x128xbf16> to vector<12x128xbf16>
    %cst_5 = arith.constant dense<0.000000e+00> : vector<288x128xf32>
    %9 = tpu.matmul %6, %8, %cst_5 {dimension_numbers = #tpu.dot_dimension_numbers<[1], [0], [0], [1], [0, 0, 1, 1], [], []>} : vector<288x12xbf16>, vector<12x128xbf16>, vector<288x128xf32> -> vector<288x128xf32>
    %10 = arith.addf %4, %9 : vector<288x128xf32>
    %11 = vector.extract_strided_slice %3 {offsets = [1, 0, 0], sizes = [18, 16, 12], strides = [1, 1, 1]} : vector<20x16x12xbf16> to vector<18x16x12xbf16>
    %12 = vector.shape_cast %11 : vector<18x16x12xbf16> to vector<288x12xbf16>
    %c1 = arith.constant 1 : index
    %c0_6 = arith.constant 0 : index
    %c0_7 = arith.constant 0 : index
    %13 = vector.load %arg5[%c1, %c0_6, %c0_7] : memref<3x12x128xbf16, #tpu.memory_space<vmem>>, vector<1x12x128xbf16>
    %14 = vector.shape_cast %13 : vector<1x12x128xbf16> to vector<12x128xbf16>
    %cst_8 = arith.constant dense<0.000000e+00> : vector<288x128xf32>
    %15 = tpu.matmul %12, %14, %cst_8 {dimension_numbers = #tpu.dot_dimension_numbers<[1], [0], [0], [1], [0, 0, 1, 1], [], []>} : vector<288x12xbf16>, vector<12x128xbf16>, vector<288x128xf32> -> vector<288x128xf32>
    %16 = arith.addf %10, %15 : vector<288x128xf32>
    %17 = vector.extract_strided_slice %3 {offsets = [2, 0, 0], sizes = [18, 16, 12], strides = [1, 1, 1]} : vector<20x16x12xbf16> to vector<18x16x12xbf16>
    %18 = vector.shape_cast %17 : vector<18x16x12xbf16> to vector<288x12xbf16>
    %c2 = arith.constant 2 : index
    %c0_9 = arith.constant 0 : index
    %c0_10 = arith.constant 0 : index
    %19 = vector.load %arg5[%c2, %c0_9, %c0_10] : memref<3x12x128xbf16, #tpu.memory_space<vmem>>, vector<1x12x128xbf16>
    %20 = vector.shape_cast %19 : vector<1x12x128xbf16> to vector<12x128xbf16>
    %cst_11 = arith.constant dense<0.000000e+00> : vector<288x128xf32>
    %21 = tpu.matmul %18, %20, %cst_11 {dimension_numbers = #tpu.dot_dimension_numbers<[1], [0], [0], [1], [0, 0, 1, 1], [], []>} : vector<288x12xbf16>, vector<12x128xbf16>, vector<288x128xf32> -> vector<288x128xf32>
    %22 = arith.addf %16, %21 : vector<288x128xf32>
    %c0_12 = arith.constant 0 : index
    %c0_13 = arith.constant 0 : index
    %23 = vector.load %arg6[%c0_12, %c0_13] : memref<1x128xf32, #tpu.memory_space<vmem>>, vector<1x128xf32>
    %24 = vector.broadcast %23 : vector<1x128xf32> to vector<288x128xf32>
    %25 = arith.addf %22, %24 : vector<288x128xf32>
    %cst_14 = arith.constant 0.000000e+00 : f32
    %26 = vector.broadcast %cst_14 : f32 to vector<288x128xf32>
    %27 = arith.maximumf %25, %26 : vector<288x128xf32>
    %28 = vector.shape_cast %27 : vector<288x128xf32> to vector<18x16x128xf32>
    %cst_15 = arith.constant 0.000000e+00 : f32
    %29 = vector.broadcast %cst_15 : f32 to vector<18x1x128xf32>
    %30 = vector.extract_strided_slice %28 {offsets = [0, 0, 0], sizes = [18, 15, 128], strides = [1, 1, 1]} : vector<18x16x128xf32> to vector<18x15x128xf32>
    %31 = tpu.concatenate %29, %30 in 1 : vector<18x1x128xf32>, vector<18x15x128xf32> -> vector<18x16x128xf32>
    %32 = vector.extract_strided_slice %28 {offsets = [0, 1, 0], sizes = [18, 15, 128], strides = [1, 1, 1]} : vector<18x16x128xf32> to vector<18x15x128xf32>
    %33 = tpu.concatenate %32, %29 in 1 : vector<18x15x128xf32>, vector<18x1x128xf32> -> vector<18x16x128xf32>
    %34 = arith.truncf %31 : vector<18x16x128xf32> to vector<18x16x128xbf16>
    %c0_16 = arith.constant 0 : index
    %c0_17 = arith.constant 0 : index
    %c0_18 = arith.constant 0 : index
    %35 = vector.load %arg10[%c0_16, %c0_17, %c0_18] : memref<18x16x384xbf16, #tpu.memory_space<vmem>>, vector<18x16x128xbf16>
    tpu.vector_store %arg10[%c0_16, %c0_17, %c0_18], %34 {strides = array<i32>} : memref<18x16x384xbf16, #tpu.memory_space<vmem>>, vector<18x16x128xbf16>,
    %36 = arith.truncf %28 : vector<18x16x128xf32> to vector<18x16x128xbf16>
    %c0_19 = arith.constant 0 : index
    %c0_20 = arith.constant 0 : index
    %c128 = arith.constant 128 : index
    %37 = vector.load %arg10[%c0_19, %c0_20, %c128] : memref<18x16x384xbf16, #tpu.memory_space<vmem>>, vector<18x16x128xbf16>
    tpu.vector_store %arg10[%c0_19, %c0_20, %c128], %36 {strides = array<i32>} : memref<18x16x384xbf16, #tpu.memory_space<vmem>>, vector<18x16x128xbf16>,
    %38 = arith.truncf %33 : vector<18x16x128xf32> to vector<18x16x128xbf16>
    %c0_21 = arith.constant 0 : index
    %c0_22 = arith.constant 0 : index
    %c256 = arith.constant 256 : index
    %39 = vector.load %arg10[%c0_21, %c0_22, %c256] : memref<18x16x384xbf16, #tpu.memory_space<vmem>>, vector<18x16x128xbf16>
    tpu.vector_store %arg10[%c0_21, %c0_22, %c256], %38 {strides = array<i32>} : memref<18x16x384xbf16, #tpu.memory_space<vmem>>, vector<18x16x128xbf16>,
    %c0_i32 = arith.constant 0 : i32
    %40 = arith.cmpi eq, %arg1, %c0_i32 : i32
    %41 = arith.extui %40 : i1 to i32
    %c0_i32_23 = arith.constant 0 : i32
    %42 = arith.cmpi ne, %41, %c0_i32_23 : i32
    scf.if %42 {
      %cst_65 = arith.constant 0.000000e+00 : bf16
      %91 = vector.broadcast %cst_65 : bf16 to vector<1x16x384xbf16>
      %c0_66 = arith.constant 0 : index
      %c0_67 = arith.constant 0 : index
      %c0_68 = arith.constant 0 : index
      %92 = vector.load %arg10[%c0_66, %c0_67, %c0_68] : memref<18x16x384xbf16, #tpu.memory_space<vmem>>, vector<1x16x384xbf16>
      tpu.vector_store %arg10[%c0_66, %c0_67, %c0_68], %91 {strides = array<i32>} : memref<18x16x384xbf16, #tpu.memory_space<vmem>>, vector<1x16x384xbf16>,
    } else {
    }
    %c0_i32_24 = arith.constant 0 : i32
    %43 = arith.cmpi eq, %arg1, %c0_i32_24 : i32
    %44 = arith.extui %43 : i1 to i32
    %c0_i32_25 = arith.constant 0 : i32
    %45 = arith.cmpi ne, %44, %c0_i32_25 : i32
    scf.if %45 {
      %cst_65 = arith.constant 0.000000e+00 : bf16
      %91 = vector.broadcast %cst_65 : bf16 to vector<1x16x384xbf16>
      %c17 = arith.constant 17 : index
      %c0_66 = arith.constant 0 : index
      %c0_67 = arith.constant 0 : index
      %92 = vector.load %arg10[%c17, %c0_66, %c0_67] : memref<18x16x384xbf16, #tpu.memory_space<vmem>>, vector<1x16x384xbf16>
      tpu.vector_store %arg10[%c17, %c0_66, %c0_67], %91 {strides = array<i32>} : memref<18x16x384xbf16, #tpu.memory_space<vmem>>, vector<1x16x384xbf16>,
    } else {
    }
    %cst_26 = arith.constant 0.000000e+00 : f32
    %46 = vector.broadcast %cst_26 : f32 to vector<256x256xf32>
    %c0_27 = arith.constant 0 : index
    %c0_28 = arith.constant 0 : index
    %c0_29 = arith.constant 0 : index
    %47 = vector.load %arg10[%c0_27, %c0_28, %c0_29] : memref<18x16x384xbf16, #tpu.memory_space<vmem>>, vector<16x16x384xbf16>
    %48 = vector.shape_cast %47 : vector<16x16x384xbf16> to vector<256x384xbf16>
    %c0_30 = arith.constant 0 : index
    %c0_31 = arith.constant 0 : index
    %c0_32 = arith.constant 0 : index
    %49 = vector.load %arg7[%c0_30, %c0_31, %c0_32] : memref<3x384x256xbf16, #tpu.memory_space<vmem>>, vector<1x384x256xbf16>
    %50 = vector.shape_cast %49 : vector<1x384x256xbf16> to vector<384x256xbf16>
    %cst_33 = arith.constant dense<0.000000e+00> : vector<256x256xf32>
    %51 = tpu.matmul %48, %50, %cst_33 {dimension_numbers = #tpu.dot_dimension_numbers<[1], [0], [0], [1], [0, 0, 1, 1], [], []>} : vector<256x384xbf16>, vector<384x256xbf16>, vector<256x256xf32> -> vector<256x256xf32>
    %52 = arith.addf %46, %51 : vector<256x256xf32>
    %c1_34 = arith.constant 1 : index
    %c0_35 = arith.constant 0 : index
    %c0_36 = arith.constant 0 : index
    %53 = vector.load %arg10[%c1_34, %c0_35, %c0_36] : memref<18x16x384xbf16, #tpu.memory_space<vmem>>, vector<16x16x384xbf16>
    %54 = vector.shape_cast %53 : vector<16x16x384xbf16> to vector<256x384xbf16>
    %c1_37 = arith.constant 1 : index
    %c0_38 = arith.constant 0 : index
    %c0_39 = arith.constant 0 : index
    %55 = vector.load %arg7[%c1_37, %c0_38, %c0_39] : memref<3x384x256xbf16, #tpu.memory_space<vmem>>, vector<1x384x256xbf16>
    %56 = vector.shape_cast %55 : vector<1x384x256xbf16> to vector<384x256xbf16>
    %cst_40 = arith.constant dense<0.000000e+00> : vector<256x256xf32>
    %57 = tpu.matmul %54, %56, %cst_40 {dimension_numbers = #tpu.dot_dimension_numbers<[1], [0], [0], [1], [0, 0, 1, 1], [], []>} : vector<256x384xbf16>, vector<384x256xbf16>, vector<256x256xf32> -> vector<256x256xf32>
    %58 = arith.addf %52, %57 : vector<256x256xf32>
    %c2_41 = arith.constant 2 : index
    %c0_42 = arith.constant 0 : index
    %c0_43 = arith.constant 0 : index
    %59 = vector.load %arg10[%c2_41, %c0_42, %c0_43] : memref<18x16x384xbf16, #tpu.memory_space<vmem>>, vector<16x16x384xbf16>
    %60 = vector.shape_cast %59 : vector<16x16x384xbf16> to vector<256x384xbf16>
    %c2_44 = arith.constant 2 : index
    %c0_45 = arith.constant 0 : index
    %c0_46 = arith.constant 0 : index
    %61 = vector.load %arg7[%c2_44, %c0_45, %c0_46] : memref<3x384x256xbf16, #tpu.memory_space<vmem>>, vector<1x384x256xbf16>
    %62 = vector.shape_cast %61 : vector<1x384x256xbf16> to vector<384x256xbf16>
    %cst_47 = arith.constant dense<0.000000e+00> : vector<256x256xf32>
    %63 = tpu.matmul %60, %62, %cst_47 {dimension_numbers = #tpu.dot_dimension_numbers<[1], [0], [0], [1], [0, 0, 1, 1], [], []>} : vector<256x384xbf16>, vector<384x256xbf16>, vector<256x256xf32> -> vector<256x256xf32>
    %64 = arith.addf %58, %63 : vector<256x256xf32>
    %c0_48 = arith.constant 0 : index
    %c0_49 = arith.constant 0 : index
    %65 = vector.load %arg8[%c0_48, %c0_49] : memref<1x256xf32, #tpu.memory_space<vmem>>, vector<1x256xf32>
    %66 = vector.broadcast %65 : vector<1x256xf32> to vector<256x256xf32>
    %67 = arith.addf %64, %66 : vector<256x256xf32>
    %68 = vector.extract_strided_slice %67 {offsets = [0, 0], sizes = [256, 128], strides = [1, 1]} : vector<256x256xf32> to vector<256x128xf32>
    %69 = vector.shape_cast %68 : vector<256x128xf32> to vector<16x16x128xf32>
    %70 = vector.extract_strided_slice %67 {offsets = [0, 128], sizes = [256, 128], strides = [1, 1]} : vector<256x256xf32> to vector<256x128xf32>
    %71 = vector.shape_cast %70 : vector<256x128xf32> to vector<16x16x128xf32>
    %c0_50 = arith.constant 0 : index
    %c0_51 = arith.constant 0 : index
    %c0_52 = arith.constant 0 : index
    %72 = vector.load %arg4[%c0_50, %c0_51, %c0_52] : memref<1x2x128xf32, #tpu.memory_space<vmem>>, vector<1x1x128xf32>
    %73 = vector.shape_cast %72 : vector<1x1x128xf32> to vector<1x128xf32>
    %c0_53 = arith.constant 0 : index
    %c1_54 = arith.constant 1 : index
    %c0_55 = arith.constant 0 : index
    %74 = vector.load %arg4[%c0_53, %c1_54, %c0_55] : memref<1x2x128xf32, #tpu.memory_space<vmem>>, vector<1x1x128xf32>
    %75 = vector.shape_cast %74 : vector<1x1x128xf32> to vector<1x128xf32>
    %c0_56 = arith.constant 0 : index
    %c0_57 = arith.constant 0 : index
    %c0_58 = arith.constant 0 : index
    %c0_59 = arith.constant 0 : index
    %76 = vector.load %arg3[%c0_56, %c0_57, %c0_58, %c0_59] : memref<1x16x16x128xf32, #tpu.memory_space<vmem>>, vector<1x16x16x128xf32>
    %77 = vector.shape_cast %76 : vector<1x16x16x128xf32> to vector<16x16x128xf32>
    %78 = vector.shape_cast %73 : vector<1x128xf32> to vector<1x1x128xf32>
    %79 = vector.broadcast %78 : vector<1x1x128xf32> to vector<16x16x128xf32>
    %80 = arith.subf %77, %79 : vector<16x16x128xf32>
    %81 = vector.shape_cast %75 : vector<1x128xf32> to vector<1x1x128xf32>
    %82 = vector.broadcast %81 : vector<1x1x128xf32> to vector<16x16x128xf32>
    %83 = arith.mulf %80, %82 : vector<16x16x128xf32>
    %cst_60 = arith.constant 1.000000e+00 : f32
    %84 = vector.broadcast %cst_60 : f32 to vector<16x16x128xf32>
    %85 = arith.addf %84, %69 : vector<16x16x128xf32>
    %86 = arith.mulf %83, %85 : vector<16x16x128xf32>
    %87 = arith.addf %86, %71 : vector<16x16x128xf32>
    %c0_61 = arith.constant 0 : index
    %c0_62 = arith.constant 0 : index
    %c0_63 = arith.constant 0 : index
    %c0_64 = arith.constant 0 : index
    %88 = vector.load %arg9[%c0_61, %c0_62, %c0_63, %c0_64] : memref<1x16x16x128xf32, #tpu.memory_space<vmem>>, vector<1x16x16x128xf32>
    %89 = vector.shape_cast %88 : vector<1x16x16x128xf32> to vector<16x16x128xf32>
    %90 = vector.shape_cast %87 : vector<16x16x128xf32> to vector<1x16x16x128xf32>
    tpu.vector_store %arg9[%c0_61, %c0_62, %c0_63, %c0_64], %90 {strides = array<i32>} : memref<1x16x16x128xf32, #tpu.memory_space<vmem>>, vector<1x16x16x128xf32>,
    return
  }
  func.func @transform_0(%arg0: i32, %arg1: i32) -> (i32, i32, i32, i32) {
    %c0_i32 = arith.constant 0 : i32
    %c0_i32_0 = arith.constant 0 : i32
    %c0_i32_1 = arith.constant 0 : i32
    %c0_i32_2 = arith.constant 0 : i32
    return %arg0, %c0_i32, %c0_i32_0, %c0_i32_1 : i32, i32, i32, i32
  }
  func.func @transform_1(%arg0: i32, %arg1: i32) -> (i32, i32, i32, i32) {
    %c0_i32 = arith.constant 0 : i32
    %c0_i32_0 = arith.constant 0 : i32
    %c0_i32_1 = arith.constant 0 : i32
    return %arg0, %arg1, %c0_i32, %c0_i32_0 : i32, i32, i32, i32
  }
  func.func @transform_2(%arg0: i32, %arg1: i32) -> (i32, i32, i32) {
    %c0_i32 = arith.constant 0 : i32
    %c0_i32_0 = arith.constant 0 : i32
    %c0_i32_1 = arith.constant 0 : i32
    return %arg0, %c0_i32, %c0_i32_0 : i32, i32, i32
  }
  func.func @transform_3(%arg0: i32, %arg1: i32) -> (i32, i32, i32) {
    %c0_i32 = arith.constant 0 : i32
    %c0_i32_0 = arith.constant 0 : i32
    %c0_i32_1 = arith.constant 0 : i32
    %c0_i32_2 = arith.constant 0 : i32
    return %c0_i32, %c0_i32_0, %c0_i32_1 : i32, i32, i32
  }
  func.func @transform_4(%arg0: i32, %arg1: i32) -> (i32, i32) {
    %c0_i32 = arith.constant 0 : i32
    %c0_i32_0 = arith.constant 0 : i32
    %c0_i32_1 = arith.constant 0 : i32
    return %c0_i32, %c0_i32_0 : i32, i32
  }
  func.func @transform_5(%arg0: i32, %arg1: i32) -> (i32, i32, i32) {
    %c0_i32 = arith.constant 0 : i32
    %c0_i32_0 = arith.constant 0 : i32
    %c0_i32_1 = arith.constant 0 : i32
    %c0_i32_2 = arith.constant 0 : i32
    return %c0_i32, %c0_i32_0, %c0_i32_1 : i32, i32, i32
  }
  func.func @transform_6(%arg0: i32, %arg1: i32) -> (i32, i32) {
    %c0_i32 = arith.constant 0 : i32
    %c0_i32_0 = arith.constant 0 : i32
    %c0_i32_1 = arith.constant 0 : i32
    return %c0_i32, %c0_i32_0 : i32, i32
  }
  func.func @transform_7(%arg0: i32, %arg1: i32) -> (i32, i32, i32, i32) {
    %c0_i32 = arith.constant 0 : i32
    %c0_i32_0 = arith.constant 0 : i32
    %c0_i32_1 = arith.constant 0 : i32
    return %arg0, %arg1, %c0_i32, %c0_i32_0 : i32, i32, i32, i32
  }
}

</mosaic_0001>

<llo_original>
// kernel: spade_forward.1
$region0: #{spade_forward.1}
  #allocation0 [shape = 'u32[]', space=smem, size = 0x4, offset = 0x4, fixed_abs, tag = 'smem constant byte address 0x4 - core index']
  #allocation1 [shape = 'u32[72,128]{1,0:T(1,128)}', space=vmem, size = 0x9000, scoped, tag = 'internal scratch']
  #allocation2 [shape = 'bf16[18,16,384]{2,1,0:T(8,128)(2,1)}', space=vmem, size = 0x36000, scoped, tag = 'scratch operand']
  %s0 = inlined_call_operand.vmem [shape: bf16[2,20,16,12], index: 0, kind: input, shape index: {}]
  %s1 = inlined_call_operand.vmem [shape: f32[2,16,16,128], index: 1, kind: input, shape index: {}]
  %s2 = inlined_call_operand.vmem [shape: f32[2,2,128], index: 2, kind: input, shape index: {}]
  %s3 = inlined_call_operand.vmem [shape: bf16[3,12,128], index: 3, kind: input, shape index: {}]
  %s4 = inlined_call_operand.vmem [shape: f32[1,128], index: 4, kind: input, shape index: {}]
  %s5 = inlined_call_operand.vmem [shape: bf16[3,384,256], index: 5, kind: input, shape index: {}]
  %s6 = inlined_call_operand.vmem [shape: f32[1,256], index: 6, kind: input, shape index: {}]
  %s7 = inlined_call_operand.vmem [shape: f32[2,16,16,128], index: 7, kind: output, shape index: {}]
  %s8 = sld [smem:[#allocation0]]
  $region65: #{spade_forward.1} parent=0
    _
  %s10 = ssub.s32 1, %s8
  %s11 = scalar_select 0, %s10, %s8
  loop: start=0, step=1, limit=4
  $region2: #{spade_forward.1} parent=0 // loop_pre_header
    _
  $region3: #{spade_forward.1} parent=0 // loop_header
    %s13 = sphi 0, %s17
    %p14 = scmp.ge.s32.totalorder %s13, 4
    %s20 = sphi 0, %s32
    %s21 = sphi 0, %s28
    %s22 = sphi 0, %s20
    %s23 = sphi 0, %s21
    %s24 = sphi 0, %s22
    %s25 = sphi 0, %s23
    %s35 = sphi 0, %s37
    %s38 = sphi 0, %s35
    %s39 = sphi 0, %s38
    %s55 = sphi 0, %s39
    %s63 = sphi 0, %s65
    %s66 = sphi 0, %s63
    %s67 = sphi 0, %s66
    %s83 = sphi 0, %s67
    %s89 = sphi 0, %s91
    %s92 = sphi 0, %s89
    %s93 = sphi 0, %s92
    %s109 = sphi 0, %s93
    %s113 = sphi 0, %s113
    %s115 = sphi 0, %s113
    %s116 = sphi 0, %s115
    %s130 = sphi 0, %s116
    %s134 = sphi 0, %s134
    %s136 = sphi 0, %s134
    %s137 = sphi 0, %s136
    %s151 = sphi 0, %s137
    %s155 = sphi 0, %s155
    %s157 = sphi 0, %s155
    %s158 = sphi 0, %s157
    %s172 = sphi 0, %s158
    %s176 = sphi 0, %s176
    %s178 = sphi 0, %s176
    %s179 = sphi 0, %s178
    %s193 = sphi 0, %s179
    %s201 = sphi 0, %s203
    %s204 = sphi 0, %s201
    %s205 = sphi 0, %s204
    %s221 = sphi 0, %s205
  $region4: #{spade_forward.1} parent=0 // loop_header_branch
    %16 = sbr.rel (%p14) target = $region8
  $region5: #{spade_forward.1} parent=0 // loop_body
    %s18 = ssub.s32 %s13, 1
    %s19 = ssub.s32 %s13, 2
    %s26 = sadd.s32 1, %s21
    %p27 = scmp.ge.s32.totalorder %s26, 1
    %s28 = scalar_select %p27, 0, %s26
    %s29 = sadd.s32 1, %s20
    %s30 = scalar_select %p27, %s29, %s20
    %p31 = scmp.ge.s32.totalorder %s30, 2
    %s32 = scalar_select %p31, 0, %s30
    %s33 = ssub.s32 %s20, %s32
    %p34 = scmp.eq.s32.totalorder %s33, 0
    %s36 = sadd.s32 %s35, 1
    %s37 = scalar_select %p34, %s35, %s36
    %p40 = pneg %p34
    %p41 = scmp.eq.s32.totalorder %s13, 1
    %p42 = por %p40, %p41
    %p43 = scmp.ne.s32.totalorder %s35, %s38
    %p44 = scmp.eq.s32.totalorder %s13, 0
    %p45 = por %p43, %p44
    %p46 = scmp.ne.s32.totalorder %s35, %s38
    %p47 = scmp.eq.s32.totalorder %s18, 1
    %p48 = por %p46, %p47
    %p49 = scmp.ne.s32.totalorder %s38, %s39
    %p50 = scmp.eq.s32.totalorder %s18, 0
    %p51 = por %p49, %p50
    %p52 = scmp.ne.s32.totalorder %s38, %s39
    %p53 = scmp.eq.s32.totalorder %s19, 1
    %p54 = por %p52, %p53
    %p56 = scmp.ne.s32.totalorder %s39, %s55
    %p57 = scmp.eq.s32.totalorder %s19, 0
    %p58 = por %p56, %p57
    %s59 = ssub.s32 %s20, %s32
    %s60 = ssub.s32 %s21, %s28
    %s61 = sor.u32 %s59, %s60
    %p62 = scmp.eq.s32.totalorder %s61, 0
    %s64 = sadd.s32 %s63, 1
    %s65 = scalar_select %p62, %s63, %s64
    %p68 = pneg %p62
    %p69 = scmp.eq.s32.totalorder %s13, 1
    %p70 = por %p68, %p69
    %p71 = scmp.ne.s32.totalorder %s63, %s66
    %p72 = scmp.eq.s32.totalorder %s13, 0
    %p73 = por %p71, %p72
    %p74 = scmp.ne.s32.totalorder %s63, %s66
    %p75 = scmp.eq.s32.totalorder %s18, 1
    %p76 = por %p74, %p75
    %p77 = scmp.ne.s32.totalorder %s66, %s67
    %p78 = scmp.eq.s32.totalorder %s18, 0
    %p79 = por %p77, %p78
    %p80 = scmp.ne.s32.totalorder %s66, %s67
    %p81 = scmp.eq.s32.totalorder %s19, 1
    %p82 = por %p80, %p81
    %p84 = scmp.ne.s32.totalorder %s67, %s83
    %p85 = scmp.eq.s32.totalorder %s19, 0
    %p86 = por %p84, %p85
    %s87 = ssub.s32 %s20, %s32
    %p88 = scmp.eq.s32.totalorder %s87, 0
    %s90 = sadd.s32 %s89, 1
    %s91 = scalar_select %p88, %s89, %s90
    %p94 = pneg %p88
    %p95 = scmp.eq.s32.totalorder %s13, 1
    %p96 = por %p94, %p95
    %p97 = scmp.ne.s32.totalorder %s89, %s92
    %p98 = scmp.eq.s32.totalorder %s13, 0
    %p99 = por %p97, %p98
    %p100 = scmp.ne.s32.totalorder %s89, %s92
    %p101 = scmp.eq.s32.totalorder %s18, 1
    %p102 = por %p100, %p101
    %p103 = scmp.ne.s32.totalorder %s92, %s93
    %p104 = scmp.eq.s32.totalorder %s18, 0
    %p105 = por %p103, %p104
    %p106 = scmp.ne.s32.totalorder %s92, %s93
    %p107 = scmp.eq.s32.totalorder %s19, 1
    %p108 = por %p106, %p107
    %p110 = scmp.ne.s32.totalorder %s93, %s109
    %p111 = scmp.eq.s32.totalorder %s19, 0
    %p112 = por %p110, %p111
    %s114 = sadd.s32 %s113, 1
    %p117 = scmp.eq.s32.totalorder %s13, 1
    %p118 = scmp.ne.s32.totalorder %s113, %s115
    %p119 = scmp.eq.s32.totalorder %s13, 0
    %p120 = por %p118, %p119
    %p121 = scmp.ne.s32.totalorder %s113, %s115
    %p122 = scmp.eq.s32.totalorder %s18, 1
    %p123 = por %p121, %p122
    %p124 = scmp.ne.s32.totalorder %s115, %s116
    %p125 = scmp.eq.s32.totalorder %s18, 0
    %p126 = por %p124, %p125
    %p127 = scmp.ne.s32.totalorder %s115, %s116
    %p128 = scmp.eq.s32.totalorder %s19, 1
    %p129 = por %p127, %p128
    %p131 = scmp.ne.s32.totalorder %s116, %s130
    %p132 = scmp.eq.s32.totalorder %s19, 0
    %p133 = por %p131, %p132
    %s135 = sadd.s32 %s134, 1
    %p138 = scmp.eq.s32.totalorder %s13, 1
    %p139 = scmp.ne.s32.totalorder %s134, %s136
    %p140 = scmp.eq.s32.totalorder %s13, 0
    %p141 = por %p139, %p140
    %p142 = scmp.ne.s32.totalorder %s134, %s136
    %p143 = scmp.eq.s32.totalorder %s18, 1
    %p144 = por %p142, %p143
    %p145 = scmp.ne.s32.totalorder %s136, %s137
    %p146 = scmp.eq.s32.totalorder %s18, 0
    %p147 = por %p145, %p146
    %p148 = scmp.ne.s32.totalorder %s136, %s137
    %p149 = scmp.eq.s32.totalorder %s19, 1
    %p150 = por %p148, %p149
    %p152 = scmp.ne.s32.totalorder %s137, %s151
    %p153 = scmp.eq.s32.totalorder %s19, 0
    %p154 = por %p152, %p153
    %s156 = sadd.s32 %s155, 1
    %p159 = scmp.eq.s32.totalorder %s13, 1
    %p160 = scmp.ne.s32.totalorder %s155, %s157
    %p161 = scmp.eq.s32.totalorder %s13, 0
    %p162 = por %p160, %p161
    %p163 = scmp.ne.s32.totalorder %s155, %s157
    %p164 = scmp.eq.s32.totalorder %s18, 1
    %p165 = por %p163, %p164
    %p166 = scmp.ne.s32.totalorder %s157, %s158
    %p167 = scmp.eq.s32.totalorder %s18, 0
    %p168 = por %p166, %p167
    %p169 = scmp.ne.s32.totalorder %s157, %s158
    %p170 = scmp.eq.s32.totalorder %s19, 1
    %p171 = por %p169, %p170
    %p173 = scmp.ne.s32.totalorder %s158, %s172
    %p174 = scmp.eq.s32.totalorder %s19, 0
    %p175 = por %p173, %p174
    %s177 = sadd.s32 %s176, 1
    %p180 = scmp.eq.s32.totalorder %s13, 1
    %p181 = scmp.ne.s32.totalorder %s176, %s178
    %p182 = scmp.eq.s32.totalorder %s13, 0
    %p183 = por %p181, %p182
    %p184 = scmp.ne.s32.totalorder %s176, %s178
    %p185 = scmp.eq.s32.totalorder %s18, 1
    %p186 = por %p184, %p185
    %p187 = scmp.ne.s32.totalorder %s178, %s179
    %p188 = scmp.eq.s32.totalorder %s18, 0
    %p189 = por %p187, %p188
    %p190 = scmp.ne.s32.totalorder %s178, %s179
    %p191 = scmp.eq.s32.totalorder %s19, 1
    %p192 = por %p190, %p191
    %p194 = scmp.ne.s32.totalorder %s179, %s193
    %p195 = scmp.eq.s32.totalorder %s19, 0
    %p196 = por %p194, %p195
    %s197 = ssub.s32 %s20, %s32
    %s198 = ssub.s32 %s21, %s28
    %s199 = sor.u32 %s197, %s198
    %p200 = scmp.eq.s32.totalorder %s199, 0
    %s202 = sadd.s32 %s201, 1
    %s203 = scalar_select %p200, %s201, %s202
    %p206 = pneg %p200
    %p207 = scmp.eq.s32.totalorder %s13, 1
    %p208 = por %p206, %p207
    %p209 = scmp.ne.s32.totalorder %s201, %s204
    %p210 = scmp.eq.s32.totalorder %s13, 0
    %p211 = por %p209, %p210
    %p212 = scmp.ne.s32.totalorder %s201, %s204
    %p213 = scmp.eq.s32.totalorder %s18, 1
    %p214 = por %p212, %p213
    %p215 = scmp.ne.s32.totalorder %s204, %s205
    %p216 = scmp.eq.s32.totalorder %s18, 0
    %p217 = por %p215, %p216
    %p218 = scmp.ne.s32.totalorder %s204, %s205
    %p219 = scmp.eq.s32.totalorder %s19, 1
    %p220 = por %p218, %p219
    %p222 = scmp.ne.s32.totalorder %s205, %s221
    %p223 = scmp.eq.s32.totalorder %s19, 0
    %p224 = por %p222, %p223
    %p225 = scmp.le.s32.totalorder 1, %s13
    %p226 = scmp.lt.s32.totalorder %s13, 3
    %p227 = pnand %p225, %p226
    %p228 = pneg %p227
    // Predicated region
    $region9: #{spade_forward.1} parent=5 // pred_check
      _
    $region10: #{spade_forward.1} parent=5 // pred_check_branch
      %230 = sbr.rel (%p227) target = $region12
    $region11: #{spade_forward.1} parent=5 // pred_region
      %s231 = ssub.s32 %s13, 1
      // Predicated region
      $region13: #{spade_forward.1} parent=11 // pred_check
        %p232 = pneg %p126
      $region14: #{spade_forward.1} parent=11 // pred_check_branch
        %234 = sbr.rel (%p232) target = $region16
      $region15: #{spade_forward.1} parent=11 // pred_region
        _
      $region16: #{spade_forward.1} parent=11 // pred_fallthru
        _
      // Predicated region
      $region17: #{spade_forward.1} parent=11 // pred_check
        %p235 = pneg %p147
      $region18: #{spade_forward.1} parent=11 // pred_check_branch
        %237 = sbr.rel (%p235) target = $region20
      $region19: #{spade_forward.1} parent=11 // pred_region
        _
      $region20: #{spade_forward.1} parent=11 // pred_fallthru
        _
      // Predicated region
      $region21: #{spade_forward.1} parent=11 // pred_check
        %p238 = pneg %p168
      $region22: #{spade_forward.1} parent=11 // pred_check_branch
        %240 = sbr.rel (%p238) target = $region24
      $region23: #{spade_forward.1} parent=11 // pred_region
        _
      $region24: #{spade_forward.1} parent=11 // pred_fallthru
        _
      // Predicated region
      $region25: #{spade_forward.1} parent=11 // pred_check
        %p241 = pneg %p189
      $region26: #{spade_forward.1} parent=11 // pred_check_branch
        %243 = sbr.rel (%p241) target = $region28
      $region27: #{spade_forward.1} parent=11 // pred_region
        _
      $region28: #{spade_forward.1} parent=11 // pred_fallthru
        _
    $region12: #{spade_forward.1} parent=5 // pred_fallthru
      _
    %p244 = scmp.lt.s32.totalorder %s13, 2
    // Predicated region
    $region29: #{spade_forward.1} parent=5 // pred_check
      %p245 = pneg %p244
    $region30: #{spade_forward.1} parent=5 // pred_check_branch
      %247 = sbr.rel (%p245) target = $region32
    $region31: #{spade_forward.1} parent=5 // pred_region
      // Predicated region
      $region33: #{spade_forward.1} parent=31 // pred_check
        %p248 = pneg %p45
      $region34: #{spade_forward.1} parent=31 // pred_check_branch
        %250 = sbr.rel (%p248) target = $region36
      $region35: #{spade_forward.1} parent=31 // pred_region
        %p251 = scmp.lt.s32.totalorder %s20, 1
        %s252 = scalar_select %p251, %s20, 1
        %s253 = smul.addr %s252, 40
        %s254 = smul.addr %s253, 4
        %s255 = scalar_lea.vmem %s0, %s254
      $region36: #{spade_forward.1} parent=31 // pred_fallthru
        _
      // Predicated region
      $region37: #{spade_forward.1} parent=31 // pred_check
        %p256 = pneg %p73
      $region38: #{spade_forward.1} parent=31 // pred_check_branch
        %258 = sbr.rel (%p256) target = $region40
      $region39: #{spade_forward.1} parent=31 // pred_region
        %s259 = smul.u32 16, %s21
        %p260 = scmp.lt.s32.totalorder %s20, 1
        %s261 = scalar_select %p260, %s20, 1
        %p262 = scmp.lt.s32.totalorder %s259, 15
        %s263 = scalar_select %p262, %s259, 15
        %s264 = smul.addr %s263, 2
        %s265 = smul.addr %s261, 32
        %s266 = sadd.s32 %s264, %s265
        %s267 = smul.addr %s266, 8
        %s268 = scalar_lea.vmem %s1, %s267
        %s269 = smul.u32 16, %s21
      $region40: #{spade_forward.1} parent=31 // pred_fallthru
        _
      // Predicated region
      $region41: #{spade_forward.1} parent=31 // pred_check
        %p270 = pneg %p99
      $region42: #{spade_forward.1} parent=31 // pred_check_branch
        %272 = sbr.rel (%p270) target = $region44
      $region43: #{spade_forward.1} parent=31 // pred_region
        %p273 = scmp.lt.s32.totalorder %s20, 1
        %s274 = scalar_select %p273, %s20, 1
        %s275 = smul.addr %s274, 2
        %s276 = scalar_lea.vmem %s2, %s275
      $region44: #{spade_forward.1} parent=31 // pred_fallthru
        _
    $region32: #{spade_forward.1} parent=5 // pred_fallthru
      _
    %p277 = scmp.le.s32.totalorder 1, %s13
    %p278 = scmp.lt.s32.totalorder %s13, 3
    %p279 = pnand %p277, %p278
    %p280 = pneg %p279
    // Predicated region
    $region45: #{spade_forward.1} parent=5 // pred_check
      _
    $region46: #{spade_forward.1} parent=5 // pred_check_branch
      %282 = sbr.rel (%p279) target = $region48
    $region47: #{spade_forward.1} parent=5 // pred_region
      %s283 = ssub.s32 %s13, 1
      %p284 = scmp.lt.s32.totalorder %s22, 1
      %s285 = scalar_select %p284, %s22, 1
      %s286 = smul.addr %s285, 40
      %s287 = smul.addr %s286, 4
      %s288 = scalar_lea.vmem %s0, %s287
      %p289 = pneg %p51
      %p290 = pneg %p48
      %s291 = smul.u32 16, %s23
      %p292 = scmp.lt.s32.totalorder %s22, 1
      %s293 = scalar_select %p292, %s22, 1
      %p294 = scmp.lt.s32.totalorder %s291, 15
      %s295 = scalar_select %p294, %s291, 15
      %s296 = smul.addr %s295, 2
      %s297 = smul.addr %s293, 32
      %s298 = sadd.s32 %s296, %s297
      %s299 = smul.addr %s298, 8
      %s300 = scalar_lea.vmem %s1, %s299
      %p301 = pneg %p79
      %p302 = pneg %p76
      %p303 = scmp.lt.s32.totalorder %s22, 1
      %s304 = scalar_select %p303, %s22, 1
      %s305 = smul.addr %s304, 2
      %s306 = scalar_lea.vmem %s2, %s305
      %p307 = pneg %p105
      %p308 = pneg %p102
      %p309 = pneg %p126
      %p310 = pneg %p123
      %p311 = pneg %p147
      %p312 = pneg %p144
      %p313 = pneg %p168
      %p314 = pneg %p165
      %p315 = pneg %p189
      %p316 = pneg %p186
      %p317 = pneg %p217
      %p318 = pneg %p214
      %s319 = smul.u32 16, %s23
      %p320 = scmp.lt.s32.totalorder %s22, 1
      %s321 = scalar_select %p320, %s22, 1
      %p322 = scmp.lt.s32.totalorder %s319, 15
      %s323 = scalar_select %p322, %s319, 15
      %s324 = smul.addr %s323, 2
      %s325 = smul.addr %s321, 32
      %s326 = sadd.s32 %s324, %s325
      %s327 = smul.addr %s326, 8
      %s328 = scalar_lea.vmem %s7, %s327
      %p329 = scmp.lt.s32.totalorder %s22, 1
      %s330 = scalar_select %p329, %s22, 1
      %s331 = smul.addr %s330, 40
      %s332 = smul.addr %s331, 4
      %s333 = scalar_lea.vmem %s0, %s332
      %s334 = smul.u32 16, %s23
      %p335 = scmp.lt.s32.totalorder %s22, 1
      %s336 = scalar_select %p335, %s22, 1
      %p337 = scmp.lt.s32.totalorder %s334, 15
      %s338 = scalar_select %p337, %s334, 15
      %s339 = smul.addr %s338, 2
      %s340 = smul.addr %s336, 32
      %s341 = sadd.s32 %s339, %s340
      %s342 = smul.addr %s341, 8
      %s343 = scalar_lea.vmem %s1, %s342
      %s344 = smul.u32 16, %s23
      %p345 = scmp.lt.s32.totalorder %s22, 1
      %s346 = scalar_select %p345, %s22, 1
      %s347 = smul.addr %s346, 2
      %s348 = scalar_lea.vmem %s2, %s347
      %s349 = smul.u32 16, %s23
      %p350 = scmp.lt.s32.totalorder %s22, 1
      %s351 = scalar_select %p350, %s22, 1
      %p352 = scmp.lt.s32.totalorder %s349, 15
      %s353 = scalar_select %p352, %s349, 15
      %s354 = smul.addr %s353, 2
      %s355 = smul.addr %s351, 32
      %s356 = sadd.s32 %s354, %s355
      %s357 = smul.addr %s356, 8
      %s358 = scalar_lea.vmem %s7, %s357
      %s359 = smul.u32 16, %s23
      %s361 = smul.u32 %s23, 16
      %s362 = smul.u32 %s361, 2
      %s363 = smul.addr %s362, 4
      %s364 = scalar_lea.vmem %s333, %s363
      %v365 = vld [vmem:[%s364] sm:$0xf]
      %v366 = vld [vmem:[%s364 + $0x4] sm:$0xf]
      %v367 = vld [vmem:[%s364 + $0x8] sm:$0xf]
      %v368 = vld [vmem:[%s364 + $0xc] sm:$0xf]
      %v369 = vld [vmem:[%s364 + $0x10] sm:$0xf]
      %v370 = vld [vmem:[%s364 + $0x14] sm:$0xf]
      %v371 = vld [vmem:[%s364 + $0x18] sm:$0xf]
      %v372 = vld [vmem:[%s364 + $0x1c] sm:$0xf]
      %v373 = vld [vmem:[%s364 + $0x20] sm:$0xf]
      %v374 = vld [vmem:[%s364 + $0x24] sm:$0xf]
      %v375 = vld [vmem:[%s364 + $0x28] sm:$0xf]
      %v376 = vld [vmem:[%s364 + $0x2c] sm:$0xf]
      %v377 = vld [vmem:[%s364 + $0x30] sm:$0xf]
      %v378 = vld [vmem:[%s364 + $0x34] sm:$0xf]
      %v379 = vld [vmem:[%s364 + $0x38] sm:$0xf]
      %v380 = vld [vmem:[%s364 + $0x3c] sm:$0xf]
      %v381 = vld [vmem:[%s364 + $0x40] sm:$0xf]
      %v382 = vld [vmem:[%s364 + $0x44] sm:$0xf]
      %v383 = vld [vmem:[%s364 + $0x48] sm:$0xf]
      %v384 = vld [vmem:[%s364 + $0x4c] sm:$0xf]
      %v385 = vld [vmem:[%s364 + $0x50] sm:$0xf]
      %v386 = vld [vmem:[%s364 + $0x54] sm:$0xf]
      %v387 = vld [vmem:[%s364 + $0x58] sm:$0xf]
      %v388 = vld [vmem:[%s364 + $0x5c] sm:$0xf]
      %v389 = vld [vmem:[%s364 + $0x60] sm:$0xf]
      %v390 = vld [vmem:[%s364 + $0x64] sm:$0xf]
      %v391 = vld [vmem:[%s364 + $0x68] sm:$0xf]
      %v392 = vld [vmem:[%s364 + $0x6c] sm:$0xf]
      %v393 = vld [vmem:[%s364 + $0x70] sm:$0xf]
      %v394 = vld [vmem:[%s364 + $0x74] sm:$0xf]
      %v395 = vld [vmem:[%s364 + $0x78] sm:$0xf]
      %v396 = vld [vmem:[%s364 + $0x7c] sm:$0xf]
      %v397 = vld [vmem:[%s364 + $0x80] sm:$0xf]
      %v398 = vld [vmem:[%s364 + $0x84] sm:$0xf]
      %v399 = vld [vmem:[%s364 + $0x88] sm:$0xf]
      %v400 = vld [vmem:[%s364 + $0x8c] sm:$0xf]
      %v401 = vld [vmem:[%s364 + $0x90] sm:$0xf]
      %v402 = vld [vmem:[%s364 + $0x94] sm:$0xf]
      %v403 = vld [vmem:[%s364 + $0x98] sm:$0xf]
      %v404 = vld [vmem:[%s364 + $0x9c] sm:$0xf]
      %v405 = vld [vmem:[%s3] sm:$0xf]
      %v406 = vld [vmem:[%s3 + $0x4] sm:$0x3]
      %s407 = scalar_lea.vmem %s3, 8
      %v408 = vld [vmem:[%s407] sm:$0xf]
      %v409 = vld [vmem:[%s407 + $0x4] sm:$0x3]
      %v446 = vunpack.c.l.b16 %v367
      %v447 = vunpack.c.l.b16 %v368
      %v448 = vunpack.c.l.b16 %v369
      %v449 = vunpack.c.l.b16 %v370
      %v450 = vunpack.c.l.b16 %v371
      %v451 = vunpack.c.l.b16 %v372
      %v452 = vunpack.c.l.b16 %v373
      %v453 = vunpack.c.l.b16 %v374
      %v454 = vunpack.c.l.b16 %v375
      %v455 = vunpack.c.l.b16 %v376
      %v456 = vunpack.c.l.b16 %v377
      %v457 = vunpack.c.l.b16 %v378
      %v458 = vunpack.c.l.b16 %v379
      %v459 = vunpack.c.l.b16 %v380
      %v460 = vunpack.c.l.b16 %v381
      %v461 = vunpack.c.l.b16 %v382
      %v462 = vunpack.c.l.b16 %v383
      %v463 = vunpack.c.l.b16 %v384
      %v464 = vunpack.c.l.b16 %v385
      %v465 = vunpack.c.l.b16 %v386
      %v466 = vunpack.c.l.b16 %v387
      %v467 = vunpack.c.l.b16 %v388
      %v468 = vunpack.c.l.b16 %v389
      %v469 = vunpack.c.l.b16 %v390
      %v470 = vunpack.c.l.b16 %v391
      %v471 = vunpack.c.l.b16 %v392
      %v472 = vunpack.c.l.b16 %v393
      %v473 = vunpack.c.l.b16 %v394
      %v474 = vunpack.c.l.b16 %v395
      %v475 = vunpack.c.l.b16 %v396
      %v476 = vunpack.c.l.b16 %v397
      %v477 = vunpack.c.l.b16 %v398
      %v478 = vunpack.c.l.b16 %v399
      %v479 = vunpack.c.l.b16 %v400
      %v480 = vunpack.c.l.b16 %v401
      %v481 = vunpack.c.l.b16 %v402
      %v482 = vpack.c.b16 %v447, %v446
      %v483 = vpack.c.b16 %v449, %v448
      %v484 = vpack.c.b16 %v451, %v450
      %v485 = vpack.c.b16 %v453, %v452
      %v486 = vpack.c.b16 %v455, %v454
      %v487 = vpack.c.b16 %v457, %v456
      %v488 = vpack.c.b16 %v459, %v458
      %v489 = vpack.c.b16 %v461, %v460
      %v490 = vpack.c.b16 %v463, %v462
      %v491 = vpack.c.b16 %v465, %v464
      %v492 = vpack.c.b16 %v467, %v466
      %v493 = vpack.c.b16 %v469, %v468
      %v494 = vpack.c.b16 %v471, %v470
      %v495 = vpack.c.b16 %v473, %v472
      %v496 = vpack.c.b16 %v475, %v474
      %v497 = vpack.c.b16 %v477, %v476
      %v498 = vpack.c.b16 %v479, %v478
      %v499 = vpack.c.b16 %v481, %v480
      %v502 = vunpack.c.l.b16 %v408
      %v503 = vunpack.c.l.b16 %v409
      %v504 = vpack.c.b16 %v503, %v502
      %vm505 = vcmask 97280
      %v507 = vsel %vm505, %v482, 0
      %v510 = vsel %vm505, %v483, 0
      %v513 = vsel %vm505, %v484, 0
      %v516 = vsel %vm505, %v485, 0
      %v519 = vsel %vm505, %v486, 0
      %v522 = vsel %vm505, %v487, 0
      %v525 = vsel %vm505, %v488, 0
      %v528 = vsel %vm505, %v489, 0
      %v531 = vsel %vm505, %v490, 0
      %v534 = vsel %vm505, %v491, 0
      %v537 = vsel %vm505, %v492, 0
      %v540 = vsel %vm505, %v493, 0
      %v543 = vsel %vm505, %v494, 0
      %v546 = vsel %vm505, %v495, 0
      %v549 = vsel %vm505, %v496, 0
      %v552 = vsel %vm505, %v497, 0
      %v555 = vsel %vm505, %v498, 0
      %v558 = vsel %vm505, %v499, 0
      %vm560 = vcmask 1045504
      %v562 = vsel %vm560, %v504, 0
      %564 = vmatpush.bf16.msra.mxu0 0
      %565 = vmatpush.bf16.msra.mxu0 0
      %566 = vmatpush.bf16.msra.mxu0 0
      %567 = vmatpush.bf16.msra.mxu0 0
      %568 = vmatpush.bf16.msra.mxu0 0
      %569 = vmatpush.bf16.msra.mxu0 0
      %570 = vmatpush.bf16.msra.mxu0 0
      %571 = vmatpush.bf16.msra.mxu0 %v562
      %572 = vmatmul.bf16.gmra.mxu0 %v507
      %v573 = vpop.f32.mrf.mxu0
      %v574 = vadd.f32 0.0, %v573
      %v575 = vpop.f32.mrf.mxu0
      %v576 = vadd.f32 0.0, %v575
      %577 = vmatmul.bf16.gmra.mxu0 %v510
      %v578 = vpop.f32.mrf.mxu0
      %v579 = vadd.f32 0.0, %v578
      %v580 = vpop.f32.mrf.mxu0
      %v581 = vadd.f32 0.0, %v580
      %582 = vmatmul.bf16.gmra.mxu0 %v513
      %v583 = vpop.f32.mrf.mxu0
      %v584 = vadd.f32 0.0, %v583
      %v585 = vpop.f32.mrf.mxu0
      %v586 = vadd.f32 0.0, %v585
      %587 = vmatmul.bf16.gmra.mxu0 %v516
      %v588 = vpop.f32.mrf.mxu0
      %v589 = vadd.f32 0.0, %v588
      %v590 = vpop.f32.mrf.mxu0
      %v591 = vadd.f32 0.0, %v590
      %592 = vmatmul.bf16.gmra.mxu0 %v519
      %v593 = vpop.f32.mrf.mxu0
      %v594 = vadd.f32 0.0, %v593
      %v595 = vpop.f32.mrf.mxu0
      %v596 = vadd.f32 0.0, %v595
      %597 = vmatmul.bf16.gmra.mxu0 %v522
      %v598 = vpop.f32.mrf.mxu0
      %v599 = vadd.f32 0.0, %v598
      %v600 = vpop.f32.mrf.mxu0
      %v601 = vadd.f32 0.0, %v600
      %602 = vmatmul.bf16.gmra.mxu0 %v525
      %v603 = vpop.f32.mrf.mxu0
      %v604 = vadd.f32 0.0, %v603
      %v605 = vpop.f32.mrf.mxu0
      %v606 = vadd.f32 0.0, %v605
      %607 = vmatmul.bf16.gmra.mxu0 %v528
      %v608 = vpop.f32.mrf.mxu0
      %v609 = vadd.f32 0.0, %v608
      %v610 = vpop.f32.mrf.mxu0
      %v611 = vadd.f32 0.0, %v610
      %612 = vmatmul.bf16.gmra.mxu0 %v531
      %v613 = vpop.f32.mrf.mxu0
      %v614 = vadd.f32 0.0, %v613
      %v615 = vpop.f32.mrf.mxu0
      %v616 = vadd.f32 0.0, %v615
      %617 = vmatmul.bf16.gmra.mxu0 %v534
      %v618 = vpop.f32.mrf.mxu0
      %v619 = vadd.f32 0.0, %v618
      %v620 = vpop.f32.mrf.mxu0
      %v621 = vadd.f32 0.0, %v620
      %622 = vmatmul.bf16.gmra.mxu0 %v537
      %v623 = vpop.f32.mrf.mxu0
      %v624 = vadd.f32 0.0, %v623
      %v625 = vpop.f32.mrf.mxu0
      %v626 = vadd.f32 0.0, %v625
      %627 = vmatmul.bf16.gmra.mxu0 %v540
      %v628 = vpop.f32.mrf.mxu0
      %v629 = vadd.f32 0.0, %v628
      %v630 = vpop.f32.mrf.mxu0
      %v631 = vadd.f32 0.0, %v630
      %632 = vmatmul.bf16.gmra.mxu0 %v543
      %v633 = vpop.f32.mrf.mxu0
      %v634 = vadd.f32 0.0, %v633
      %v635 = vpop.f32.mrf.mxu0
      %v636 = vadd.f32 0.0, %v635
      %637 = vmatmul.bf16.gmra.mxu0 %v546
      %v638 = vpop.f32.mrf.mxu0
      %v639 = vadd.f32 0.0, %v638
      %v640 = vpop.f32.mrf.mxu0
      %v641 = vadd.f32 0.0, %v640
      %642 = vmatmul.bf16.gmra.mxu0 %v549
      %v643 = vpop.f32.mrf.mxu0
      %v644 = vadd.f32 0.0, %v643
      %v645 = vpop.f32.mrf.mxu0
      %v646 = vadd.f32 0.0, %v645
      %647 = vmatmul.bf16.gmra.mxu0 %v552
      %v648 = vpop.f32.mrf.mxu0
      %v649 = vadd.f32 0.0, %v648
      %v650 = vpop.f32.mrf.mxu0
      %v651 = vadd.f32 0.0, %v650
      %652 = vmatmul.bf16.gmra.mxu0 %v555
      %v653 = vpop.f32.mrf.mxu0
      %v654 = vadd.f32 0.0, %v653
      %v655 = vpop.f32.mrf.mxu0
      %v656 = vadd.f32 0.0, %v655
      %657 = vmatmul.bf16.gmra.mxu0 %v558
      %v658 = vpop.f32.mrf.mxu0
      %v659 = vadd.f32 0.0, %v658
      %v660 = vpop.f32.mrf.mxu0
      %v661 = vadd.f32 0.0, %v660
      %662 = vdwg.mxu0
      %v665 = vunpack.c.l.b16 %v365
      %v666 = vunpack.c.l.b16 %v366
      %v667 = vpack.c.b16 %v666, %v665
      %v670 = vunpack.c.l.b16 %v405
      %v671 = vunpack.c.l.b16 %v406
      %v672 = vpack.c.b16 %v671, %v670
      %v674 = vsel %vm505, %v667, 0
      %v677 = vsel %vm560, %v672, 0
      %679 = vmatpush.bf16.msra.mxu0 0
      %680 = vmatpush.bf16.msra.mxu0 0
      %681 = vmatpush.bf16.msra.mxu0 0
      %682 = vmatpush.bf16.msra.mxu0 0
      %683 = vmatpush.bf16.msra.mxu0 0
      %684 = vmatpush.bf16.msra.mxu0 0
      %685 = vmatpush.bf16.msra.mxu0 0
      %686 = vmatpush.bf16.msra.mxu0 %v677
      %687 = vmatmul.bf16.gmra.mxu0 %v674
      %v688 = vpop.f32.mrf.mxu0
      %v689 = vadd.f32 %v574, %v688
      %v690 = vpop.f32.mrf.mxu0
      %v691 = vadd.f32 %v576, %v690
      %692 = vmatmul.bf16.gmra.mxu0 %v507
      %v693 = vpop.f32.mrf.mxu0
      %v694 = vadd.f32 %v579, %v693
      %v695 = vpop.f32.mrf.mxu0
      %v696 = vadd.f32 %v581, %v695
      %697 = vmatmul.bf16.gmra.mxu0 %v510
      %v698 = vpop.f32.mrf.mxu0
      %v699 = vadd.f32 %v584, %v698
      %v700 = vpop.f32.mrf.mxu0
      %v701 = vadd.f32 %v586, %v700
      %702 = vmatmul.bf16.gmra.mxu0 %v513
      %v703 = vpop.f32.mrf.mxu0
      %v704 = vadd.f32 %v589, %v703
      %v705 = vpop.f32.mrf.mxu0
      %v706 = vadd.f32 %v591, %v705
      %707 = vmatmul.bf16.gmra.mxu0 %v516
      %v708 = vpop.f32.mrf.mxu0
      %v709 = vadd.f32 %v594, %v708
      %v710 = vpop.f32.mrf.mxu0
      %v711 = vadd.f32 %v596, %v710
      %712 = vmatmul.bf16.gmra.mxu0 %v519
      %v713 = vpop.f32.mrf.mxu0
      %v714 = vadd.f32 %v599, %v713
      %v715 = vpop.f32.mrf.mxu0
      %v716 = vadd.f32 %v601, %v715
      %717 = vmatmul.bf16.gmra.mxu0 %v522
      %v718 = vpop.f32.mrf.mxu0
      %v719 = vadd.f32 %v604, %v718
      %v720 = vpop.f32.mrf.mxu0
      %v721 = vadd.f32 %v606, %v720
      %722 = vmatmul.bf16.gmra.mxu0 %v525
      %v723 = vpop.f32.mrf.mxu0
      %v724 = vadd.f32 %v609, %v723
      %v725 = vpop.f32.mrf.mxu0
      %v726 = vadd.f32 %v611, %v725
      %727 = vmatmul.bf16.gmra.mxu0 %v528
      %v728 = vpop.f32.mrf.mxu0
      %v729 = vadd.f32 %v614, %v728
      %v730 = vpop.f32.mrf.mxu0
      %v731 = vadd.f32 %v616, %v730
      %732 = vmatmul.bf16.gmra.mxu0 %v531
      %v733 = vpop.f32.mrf.mxu0
      %v734 = vadd.f32 %v619, %v733
      %v735 = vpop.f32.mrf.mxu0
      %v736 = vadd.f32 %v621, %v735
      %737 = vmatmul.bf16.gmra.mxu0 %v534
      %v738 = vpop.f32.mrf.mxu0
      %v739 = vadd.f32 %v624, %v738
      %v740 = vpop.f32.mrf.mxu0
      %v741 = vadd.f32 %v626, %v740
      %742 = vmatmul.bf16.gmra.mxu0 %v537
      %v743 = vpop.f32.mrf.mxu0
      %v744 = vadd.f32 %v629, %v743
      %v745 = vpop.f32.mrf.mxu0
      %v746 = vadd.f32 %v631, %v745
      %747 = vmatmul.bf16.gmra.mxu0 %v540
      %v748 = vpop.f32.mrf.mxu0
      %v749 = vadd.f32 %v634, %v748
      %v750 = vpop.f32.mrf.mxu0
      %v751 = vadd.f32 %v636, %v750
      %752 = vmatmul.bf16.gmra.mxu0 %v543
      %v753 = vpop.f32.mrf.mxu0
      %v754 = vadd.f32 %v639, %v753
      %v755 = vpop.f32.mrf.mxu0
      %v756 = vadd.f32 %v641, %v755
      %757 = vmatmul.bf16.gmra.mxu0 %v546
      %v758 = vpop.f32.mrf.mxu0
      %v759 = vadd.f32 %v644, %v758
      %v760 = vpop.f32.mrf.mxu0
      %v761 = vadd.f32 %v646, %v760
      %762 = vmatmul.bf16.gmra.mxu0 %v549
      %v763 = vpop.f32.mrf.mxu0
      %v764 = vadd.f32 %v649, %v763
      %v765 = vpop.f32.mrf.mxu0
      %v766 = vadd.f32 %v651, %v765
      %767 = vmatmul.bf16.gmra.mxu0 %v552
      %v768 = vpop.f32.mrf.mxu0
      %v769 = vadd.f32 %v654, %v768
      %v770 = vpop.f32.mrf.mxu0
      %v771 = vadd.f32 %v656, %v770
      %772 = vmatmul.bf16.gmra.mxu0 %v555
      %v773 = vpop.f32.mrf.mxu0
      %v774 = vadd.f32 %v659, %v773
      %v775 = vpop.f32.mrf.mxu0
      %v776 = vadd.f32 %v661, %v775
      %777 = vdwg.mxu0
      %s778 = scalar_lea.vmem %s3, 16
      %v779 = vld [vmem:[%s778] sm:$0xf]
      %v780 = vld [vmem:[%s778 + $0x4] sm:$0x3]
      %v783 = vunpack.c.l.b16 %v403
      %v784 = vunpack.c.l.b16 %v404
      %v785 = vpack.c.b16 %v784, %v783
      %v788 = vunpack.c.l.b16 %v779
      %v789 = vunpack.c.l.b16 %v780
      %v790 = vpack.c.b16 %v789, %v788
      %v792 = vsel %vm505, %v785, 0
      %v795 = vsel %vm560, %v790, 0
      %797 = vmatpush.bf16.msra.mxu0 0
      %798 = vmatpush.bf16.msra.mxu0 0
      %799 = vmatpush.bf16.msra.mxu0 0
      %800 = vmatpush.bf16.msra.mxu0 0
      %801 = vmatpush.bf16.msra.mxu0 0
      %802 = vmatpush.bf16.msra.mxu0 0
      %803 = vmatpush.bf16.msra.mxu0 0
      %804 = vmatpush.bf16.msra.mxu0 %v795
      %805 = vmatmul.bf16.gmra.mxu0 %v510
      %v806 = vpop.f32.mrf.mxu0
      %v807 = vadd.f32 0.0, %v806
      %v808 = vpop.f32.mrf.mxu0
      %v809 = vadd.f32 0.0, %v808
      %810 = vmatmul.bf16.gmra.mxu0 %v513
      %v811 = vpop.f32.mrf.mxu0
      %v812 = vadd.f32 0.0, %v811
      %v813 = vpop.f32.mrf.mxu0
      %v814 = vadd.f32 0.0, %v813
      %815 = vmatmul.bf16.gmra.mxu0 %v516
      %v816 = vpop.f32.mrf.mxu0
      %v817 = vadd.f32 0.0, %v816
      %v818 = vpop.f32.mrf.mxu0
      %v819 = vadd.f32 0.0, %v818
      %820 = vmatmul.bf16.gmra.mxu0 %v519
      %v821 = vpop.f32.mrf.mxu0
      %v822 = vadd.f32 0.0, %v821
      %v823 = vpop.f32.mrf.mxu0
      %v824 = vadd.f32 0.0, %v823
      %825 = vmatmul.bf16.gmra.mxu0 %v522
      %v826 = vpop.f32.mrf.mxu0
      %v827 = vadd.f32 0.0, %v826
      %v828 = vpop.f32.mrf.mxu0
      %v829 = vadd.f32 0.0, %v828
      %830 = vmatmul.bf16.gmra.mxu0 %v525
      %v831 = vpop.f32.mrf.mxu0
      %v832 = vadd.f32 0.0, %v831
      %v833 = vpop.f32.mrf.mxu0
      %v834 = vadd.f32 0.0, %v833
      %835 = vmatmul.bf16.gmra.mxu0 %v528
      %v836 = vpop.f32.mrf.mxu0
      %v837 = vadd.f32 0.0, %v836
      %v838 = vpop.f32.mrf.mxu0
      %v839 = vadd.f32 0.0, %v838
      %840 = vmatmul.bf16.gmra.mxu0 %v531
      %v841 = vpop.f32.mrf.mxu0
      %v842 = vadd.f32 0.0, %v841
      %v843 = vpop.f32.mrf.mxu0
      %v844 = vadd.f32 0.0, %v843
      %845 = vmatmul.bf16.gmra.mxu0 %v534
      %v846 = vpop.f32.mrf.mxu0
      %v847 = vadd.f32 0.0, %v846
      %v848 = vpop.f32.mrf.mxu0
      %v849 = vadd.f32 0.0, %v848
      %850 = vmatmul.bf16.gmra.mxu0 %v537
      %v851 = vpop.f32.mrf.mxu0
      %v852 = vadd.f32 0.0, %v851
      %v853 = vpop.f32.mrf.mxu0
      %v854 = vadd.f32 0.0, %v853
      %855 = vmatmul.bf16.gmra.mxu0 %v540
      %v856 = vpop.f32.mrf.mxu0
      %v857 = vadd.f32 0.0, %v856
      %v858 = vpop.f32.mrf.mxu0
      %v859 = vadd.f32 0.0, %v858
      %860 = vmatmul.bf16.gmra.mxu0 %v543
      %v861 = vpop.f32.mrf.mxu0
      %v862 = vadd.f32 0.0, %v861
      %v863 = vpop.f32.mrf.mxu0
      %v864 = vadd.f32 0.0, %v863
      %865 = vmatmul.bf16.gmra.mxu0 %v546
      %v866 = vpop.f32.mrf.mxu0
      %v867 = vadd.f32 0.0, %v866
      %v868 = vpop.f32.mrf.mxu0
      %v869 = vadd.f32 0.0, %v868
      %870 = vmatmul.bf16.gmra.mxu0 %v549
      %v871 = vpop.f32.mrf.mxu0
      %v872 = vadd.f32 0.0, %v871
      %v873 = vpop.f32.mrf.mxu0
      %v874 = vadd.f32 0.0, %v873
      %875 = vmatmul.bf16.gmra.mxu0 %v552
      %v876 = vpop.f32.mrf.mxu0
      %v877 = vadd.f32 0.0, %v876
      %v878 = vpop.f32.mrf.mxu0
      %v879 = vadd.f32 0.0, %v878
      %880 = vmatmul.bf16.gmra.mxu0 %v555
      %v881 = vpop.f32.mrf.mxu0
      %v882 = vadd.f32 0.0, %v881
      %v883 = vpop.f32.mrf.mxu0
      %v884 = vadd.f32 0.0, %v883
      %885 = vmatmul.bf16.gmra.mxu0 %v558
      %v886 = vpop.f32.mrf.mxu0
      %v887 = vadd.f32 0.0, %v886
      %v888 = vpop.f32.mrf.mxu0
      %v889 = vadd.f32 0.0, %v888
      %890 = vmatmul.bf16.gmra.mxu0 %v792
      %v891 = vpop.f32.mrf.mxu0
      %v892 = vadd.f32 0.0, %v891
      %v893 = vpop.f32.mrf.mxu0
      %v894 = vadd.f32 0.0, %v893
      %895 = vdwg.mxu0
      %v896 = vadd.f32 %v689, %v807
      %v897 = vadd.f32 %v691, %v809
      %v898 = vadd.f32 %v694, %v812
      %v899 = vadd.f32 %v696, %v814
      %v900 = vadd.f32 %v699, %v817
      %v901 = vadd.f32 %v701, %v819
      %v902 = vadd.f32 %v704, %v822
      %v903 = vadd.f32 %v706, %v824
      %v904 = vadd.f32 %v709, %v827
      %v905 = vadd.f32 %v711, %v829
      %v906 = vadd.f32 %v714, %v832
      %v907 = vadd.f32 %v716, %v834
      %v908 = vadd.f32 %v719, %v837
      %v909 = vadd.f32 %v721, %v839
      %v910 = vadd.f32 %v724, %v842
      %v911 = vadd.f32 %v726, %v844
      %v912 = vadd.f32 %v729, %v847
      %v913 = vadd.f32 %v731, %v849
      %v914 = vadd.f32 %v734, %v852
      %v915 = vadd.f32 %v736, %v854
      %v916 = vadd.f32 %v739, %v857
      %v917 = vadd.f32 %v741, %v859
      %v918 = vadd.f32 %v744, %v862
      %v919 = vadd.f32 %v746, %v864
      %v920 = vadd.f32 %v749, %v867
      %v921 = vadd.f32 %v751, %v869
      %v922 = vadd.f32 %v754, %v872
      %v923 = vadd.f32 %v756, %v874
      %v924 = vadd.f32 %v759, %v877
      %v925 = vadd.f32 %v761, %v879
      %v926 = vadd.f32 %v764, %v882
      %v927 = vadd.f32 %v766, %v884
      %v928 = vadd.f32 %v769, %v887
      %v929 = vadd.f32 %v771, %v889
      %v930 = vadd.f32 %v774, %v892
      %v931 = vadd.f32 %v776, %v894
      %v932 = vld [vmem:[%s4] sm:$0x1]
      %v934 = vperm.slane %v932, 0
      %v936 = vadd.f32 %v896, %v934
      %v937 = vadd.f32 %v897, %v934
      %v938 = vadd.f32 %v898, %v934
      %v939 = vadd.f32 %v899, %v934
      %v940 = vadd.f32 %v900, %v934
      %v941 = vadd.f32 %v901, %v934
      %v942 = vadd.f32 %v902, %v934
      %v943 = vadd.f32 %v903, %v934
      %v944 = vadd.f32 %v904, %v934
      %v945 = vadd.f32 %v905, %v934
      %v946 = vadd.f32 %v906, %v934
      %v947 = vadd.f32 %v907, %v934
      %v948 = vadd.f32 %v908, %v934
      %v949 = vadd.f32 %v909, %v934
      %v950 = vadd.f32 %v910, %v934
      %v951 = vadd.f32 %v911, %v934
      %v952 = vadd.f32 %v912, %v934
      %v953 = vadd.f32 %v913, %v934
      %v954 = vadd.f32 %v914, %v934
      %v955 = vadd.f32 %v915, %v934
      %v956 = vadd.f32 %v916, %v934
      %v957 = vadd.f32 %v917, %v934
      %v958 = vadd.f32 %v918, %v934
      %v959 = vadd.f32 %v919, %v934
      %v960 = vadd.f32 %v920, %v934
      %v961 = vadd.f32 %v921, %v934
      %v962 = vadd.f32 %v922, %v934
      %v963 = vadd.f32 %v923, %v934
      %v964 = vadd.f32 %v924, %v934
      %v965 = vadd.f32 %v925, %v934
      %v966 = vadd.f32 %v926, %v934
      %v967 = vadd.f32 %v927, %v934
      %v968 = vadd.f32 %v928, %v934
      %v969 = vadd.f32 %v929, %v934
      %v970 = vadd.f32 %v930, %v934
      %v971 = vadd.f32 %v931, %v934
      %v972 = vmax.f32 %v936, 0.0
      %v973 = vmax.f32 %v937, 0.0
      %v974 = vmax.f32 %v938, 0.0
      %v975 = vmax.f32 %v939, 0.0
      %v976 = vmax.f32 %v940, 0.0
      %v977 = vmax.f32 %v941, 0.0
      %v978 = vmax.f32 %v942, 0.0
      %v979 = vmax.f32 %v943, 0.0
      %v980 = vmax.f32 %v944, 0.0
      %v981 = vmax.f32 %v945, 0.0
      %v982 = vmax.f32 %v946, 0.0
      %v983 = vmax.f32 %v947, 0.0
      %v984 = vmax.f32 %v948, 0.0
      %v985 = vmax.f32 %v949, 0.0
      %v986 = vmax.f32 %v950, 0.0
      %v987 = vmax.f32 %v951, 0.0
      %v988 = vmax.f32 %v952, 0.0
      %v989 = vmax.f32 %v953, 0.0
      %v990 = vmax.f32 %v954, 0.0
      %v991 = vmax.f32 %v955, 0.0
      %v992 = vmax.f32 %v956, 0.0
      %v993 = vmax.f32 %v957, 0.0
      %v994 = vmax.f32 %v958, 0.0
      %v995 = vmax.f32 %v959, 0.0
      %v996 = vmax.f32 %v960, 0.0
      %v997 = vmax.f32 %v961, 0.0
      %v998 = vmax.f32 %v962, 0.0
      %v999 = vmax.f32 %v963, 0.0
      %v1000 = vmax.f32 %v964, 0.0
      %v1001 = vmax.f32 %v965, 0.0
      %v1002 = vmax.f32 %v966, 0.0
      %v1003 = vmax.f32 %v967, 0.0
      %v1004 = vmax.f32 %v968, 0.0
      %v1005 = vmax.f32 %v969, 0.0
      %v1006 = vmax.f32 %v970, 0.0
      %v1007 = vmax.f32 %v971, 0.0
      %vm1044 = vcmask 1040384
      %v1045 = vrot.slane %v972, 7
      %v1046 = vrot.slane %v973, 7
      %v1047 = vsel %vm1044, %v1045, %v1046
      %v1048 = vrot.slane %v974, 7
      %v1049 = vrot.slane %v975, 7
      %v1050 = vsel %vm1044, %v1048, %v1049
      %v1051 = vrot.slane %v976, 7
      %v1052 = vrot.slane %v977, 7
      %v1053 = vsel %vm1044, %v1051, %v1052
      %v1054 = vrot.slane %v978, 7
      %v1055 = vrot.slane %v979, 7
      %v1056 = vsel %vm1044, %v1054, %v1055
      %v1057 = vrot.slane %v980, 7
      %v1058 = vrot.slane %v981, 7
      %v1059 = vsel %vm1044, %v1057, %v1058
      %v1060 = vrot.slane %v982, 7
      %v1061 = vrot.slane %v983, 7
      %v1062 = vsel %vm1044, %v1060, %v1061
      %v1063 = vrot.slane %v984, 7
      %v1064 = vrot.slane %v985, 7
      %v1065 = vsel %vm1044, %v1063, %v1064
      %v1066 = vrot.slane %v986, 7
      %v1067 = vrot.slane %v987, 7
      %v1068 = vsel %vm1044, %v1066, %v1067
      %v1069 = vrot.slane %v988, 7
      %v1070 = vrot.slane %v989, 7
      %v1071 = vsel %vm1044, %v1069, %v1070
      %v1072 = vrot.slane %v990, 7
      %v1073 = vrot.slane %v991, 7
      %v1074 = vsel %vm1044, %v1072, %v1073
      %v1075 = vrot.slane %v992, 7
      %v1076 = vrot.slane %v993, 7
      %v1077 = vsel %vm1044, %v1075, %v1076
      %v1078 = vrot.slane %v994, 7
      %v1079 = vrot.slane %v995, 7
      %v1080 = vsel %vm1044, %v1078, %v1079
      %v1081 = vrot.slane %v996, 7
      %v1082 = vrot.slane %v997, 7
      %v1083 = vsel %vm1044, %v1081, %v1082
      %v1084 = vrot.slane %v998, 7
      %v1085 = vrot.slane %v999, 7
      %v1086 = vsel %vm1044, %v1084, %v1085
      %v1087 = vrot.slane %v1000, 7
      %v1088 = vrot.slane %v1001, 7
      %v1089 = vsel %vm1044, %v1087, %v1088
      %v1090 = vrot.slane %v1002, 7
      %v1091 = vrot.slane %v1003, 7
      %v1092 = vsel %vm1044, %v1090, %v1091
      %v1093 = vrot.slane %v1004, 7
      %v1094 = vrot.slane %v1005, 7
      %v1095 = vsel %vm1044, %v1093, %v1094
      %v1096 = vrot.slane %v1006, 7
      %v1097 = vrot.slane %v1007, 7
      %v1098 = vsel %vm1044, %v1096, %v1097
      %v1135 = vsel %vm1044, 0.0, %v1045
      %v1136 = vsel %vm1044, 0.0, %v1048
      %v1137 = vsel %vm1044, 0.0, %v1051
      %v1138 = vsel %vm1044, 0.0, %v1054
      %v1139 = vsel %vm1044, 0.0, %v1057
      %v1140 = vsel %vm1044, 0.0, %v1060
      %v1141 = vsel %vm1044, 0.0, %v1063
      %v1142 = vsel %vm1044, 0.0, %v1066
      %v1143 = vsel %vm1044, 0.0, %v1069
      %v1144 = vsel %vm1044, 0.0, %v1072
      %v1145 = vsel %vm1044, 0.0, %v1075
      %v1146 = vsel %vm1044, 0.0, %v1078
      %v1147 = vsel %vm1044, 0.0, %v1081
      %v1148 = vsel %vm1044, 0.0, %v1084
      %v1149 = vsel %vm1044, 0.0, %v1087
      %v1150 = vsel %vm1044, 0.0, %v1090
      %v1151 = vsel %vm1044, 0.0, %v1093
      %v1152 = vsel %vm1044, 0.0, %v1096
      %vm1153 = vcmask 1046528
      %v1154 = vrot.slane %v972, 1
      %v1155 = vrot.slane %v973, 1
      %v1156 = vsel %vm1153, %v1154, %v1155
      %v1157 = vrot.slane %v974, 1
      %v1158 = vrot.slane %v975, 1
      %v1159 = vsel %vm1153, %v1157, %v1158
      %v1160 = vrot.slane %v976, 1
      %v1161 = vrot.slane %v977, 1
      %v1162 = vsel %vm1153, %v1160, %v1161
      %v1163 = vrot.slane %v978, 1
      %v1164 = vrot.slane %v979, 1
      %v1165 = vsel %vm1153, %v1163, %v1164
      %v1166 = vrot.slane %v980, 1
      %v1167 = vrot.slane %v981, 1
      %v1168 = vsel %vm1153, %v1166, %v1167
      %v1169 = vrot.slane %v982, 1
      %v1170 = vrot.slane %v983, 1
      %v1171 = vsel %vm1153, %v1169, %v1170
      %v1172 = vrot.slane %v984, 1
      %v1173 = vrot.slane %v985, 1
      %v1174 = vsel %vm1153, %v1172, %v1173
      %v1175 = vrot.slane %v986, 1
      %v1176 = vrot.slane %v987, 1
      %v1177 = vsel %vm1153, %v1175, %v1176
      %v1178 = vrot.slane %v988, 1
      %v1179 = vrot.slane %v989, 1
      %v1180 = vsel %vm1153, %v1178, %v1179
      %v1181 = vrot.slane %v990, 1
      %v1182 = vrot.slane %v991, 1
      %v1183 = vsel %vm1153, %v1181, %v1182
      %v1184 = vrot.slane %v992, 1
      %v1185 = vrot.slane %v993, 1
      %v1186 = vsel %vm1153, %v1184, %v1185
      %v1187 = vrot.slane %v994, 1
      %v1188 = vrot.slane %v995, 1
      %v1189 = vsel %vm1153, %v1187, %v1188
      %v1190 = vrot.slane %v996, 1
      %v1191 = vrot.slane %v997, 1
      %v1192 = vsel %vm1153, %v1190, %v1191
      %v1193 = vrot.slane %v998, 1
      %v1194 = vrot.slane %v999, 1
      %v1195 = vsel %vm1153, %v1193, %v1194
      %v1196 = vrot.slane %v1000, 1
      %v1197 = vrot.slane %v1001, 1
      %v1198 = vsel %vm1153, %v1196, %v1197
      %v1199 = vrot.slane %v1002, 1
      %v1200 = vrot.slane %v1003, 1
      %v1201 = vsel %vm1153, %v1199, %v1200
      %v1202 = vrot.slane %v1004, 1
      %v1203 = vrot.slane %v1005, 1
      %v1204 = vsel %vm1153, %v1202, %v1203
      %v1205 = vrot.slane %v1006, 1
      %v1206 = vrot.slane %v1007, 1
      %v1207 = vsel %vm1153, %v1205, %v1206
      %v1244 = vsel %vm1153, %v1155, 0.0
      %v1245 = vsel %vm1153, %v1158, 0.0
      %v1246 = vsel %vm1153, %v1161, 0.0
      %v1247 = vsel %vm1153, %v1164, 0.0
      %v1248 = vsel %vm1153, %v1167, 0.0
      %v1249 = vsel %vm1153, %v1170, 0.0
      %v1250 = vsel %vm1153, %v1173, 0.0
      %v1251 = vsel %vm1153, %v1176, 0.0
      %v1252 = vsel %vm1153, %v1179, 0.0
      %v1253 = vsel %vm1153, %v1182, 0.0
      %v1254 = vsel %vm1153, %v1185, 0.0
      %v1255 = vsel %vm1153, %v1188, 0.0
      %v1256 = vsel %vm1153, %v1191, 0.0
      %v1257 = vsel %vm1153, %v1194, 0.0
      %v1258 = vsel %vm1153, %v1197, 0.0
      %v1259 = vsel %vm1153, %v1200, 0.0
      %v1260 = vsel %vm1153, %v1203, 0.0
      %v1261 = vsel %vm1153, %v1206, 0.0
      %v1262 = vpack.c.bf16 %v1135, %v1135
      %v1263 = vpack.c.bf16 %v1047, %v1047
      %v1264 = vpack.c.bf16 %v1136, %v1136
      %v1265 = vpack.c.bf16 %v1050, %v1050
      %v1266 = vpack.c.bf16 %v1137, %v1137
      %v1267 = vpack.c.bf16 %v1053, %v1053
      %v1268 = vpack.c.bf16 %v1138, %v1138
      %v1269 = vpack.c.bf16 %v1056, %v1056
      %v1270 = vpack.c.bf16 %v1139, %v1139
      %v1271 = vpack.c.bf16 %v1059, %v1059
      %v1272 = vpack.c.bf16 %v1140, %v1140
      %v1273 = vpack.c.bf16 %v1062, %v1062
      %v1274 = vpack.c.bf16 %v1141, %v1141
      %v1275 = vpack.c.bf16 %v1065, %v1065
      %v1276 = vpack.c.bf16 %v1142, %v1142
      %v1277 = vpack.c.bf16 %v1068, %v1068
      %v1278 = vpack.c.bf16 %v1143, %v1143
      %v1279 = vpack.c.bf16 %v1071, %v1071
      %v1280 = vpack.c.bf16 %v1144, %v1144
      %v1281 = vpack.c.bf16 %v1074, %v1074
      %v1282 = vpack.c.bf16 %v1145, %v1145
      %v1283 = vpack.c.bf16 %v1077, %v1077
      %v1284 = vpack.c.bf16 %v1146, %v1146
      %v1285 = vpack.c.bf16 %v1080, %v1080
      %v1286 = vpack.c.bf16 %v1147, %v1147
      %v1287 = vpack.c.bf16 %v1083, %v1083
      %v1288 = vpack.c.bf16 %v1148, %v1148
      %v1289 = vpack.c.bf16 %v1086, %v1086
      %v1290 = vpack.c.bf16 %v1149, %v1149
      %v1291 = vpack.c.bf16 %v1089, %v1089
      %v1292 = vpack.c.bf16 %v1150, %v1150
      %v1293 = vpack.c.bf16 %v1092, %v1092
      %v1294 = vpack.c.bf16 %v1151, %v1151
      %v1295 = vpack.c.bf16 %v1095, %v1095
      %v1296 = vpack.c.bf16 %v1152, %v1152
      %v1297 = vpack.c.bf16 %v1098, %v1098
      %1298 = vst [vmem:[#allocation2] sm:$0xf] %v1262
      %1299 = vst [vmem:[#allocation2 + $0xc] sm:$0xf] %v1263
      %1300 = vst [vmem:[#allocation2 + $0x18] sm:$0xf] %v1264
      %1301 = vst [vmem:[#allocation2 + $0x24] sm:$0xf] %v1265
      %1302 = vst [vmem:[#allocation2 + $0x30] sm:$0xf] %v1266
      %1303 = vst [vmem:[#allocation2 + $0x3c] sm:$0xf] %v1267
      %1304 = vst [vmem:[#allocation2 + $0x48] sm:$0xf] %v1268
      %1305 = vst [vmem:[#allocation2 + $0x54] sm:$0xf] %v1269
      %1306 = vst [vmem:[#allocation2 + $0x60] sm:$0xf] %v1270
      %1307 = vst [vmem:[#allocation2 + $0x6c] sm:$0xf] %v1271
      %1308 = vst [vmem:[#allocation2 + $0x78] sm:$0xf] %v1272
      %1309 = vst [vmem:[#allocation2 + $0x84] sm:$0xf] %v1273
      %1310 = vst [vmem:[#allocation2 + $0x90] sm:$0xf] %v1274
      %1311 = vst [vmem:[#allocation2 + $0x9c] sm:$0xf] %v1275
      %1312 = vst [vmem:[#allocation2 + $0xa8] sm:$0xf] %v1276
      %1313 = vst [vmem:[#allocation2 + $0xb4] sm:$0xf] %v1277
      %1314 = vst [vmem:[#allocation2 + $0xc0] sm:$0xf] %v1278
      %1315 = vst [vmem:[#allocation2 + $0xcc] sm:$0xf] %v1279
      %1316 = vst [vmem:[#allocation2 + $0xd8] sm:$0xf] %v1280
      %1317 = vst [vmem:[#allocation2 + $0xe4] sm:$0xf] %v1281
      %1318 = vst [vmem:[#allocation2 + $0xf0] sm:$0xf] %v1282
      %1319 = vst [vmem:[#allocation2 + $0xfc] sm:$0xf] %v1283
      %1320 = vst [vmem:[#allocation2 + $0x108] sm:$0xf] %v1284
      %1321 = vst [vmem:[#allocation2 + $0x114] sm:$0xf] %v1285
      %1322 = vst [vmem:[#allocation2 + $0x120] sm:$0xf] %v1286
      %1323 = vst [vmem:[#allocation2 + $0x12c] sm:$0xf] %v1287
      %1324 = vst [vmem:[#allocation2 + $0x138] sm:$0xf] %v1288
      %1325 = vst [vmem:[#allocation2 + $0x144] sm:$0xf] %v1289
      %1326 = vst [vmem:[#allocation2 + $0x150] sm:$0xf] %v1290
      %1327 = vst [vmem:[#allocation2 + $0x15c] sm:$0xf] %v1291
      %1328 = vst [vmem:[#allocation2 + $0x168] sm:$0xf] %v1292
      %1329 = vst [vmem:[#allocation2 + $0x174] sm:$0xf] %v1293
      %1330 = vst [vmem:[#allocation2 + $0x180] sm:$0xf] %v1294
      %1331 = vst [vmem:[#allocation2 + $0x18c] sm:$0xf] %v1295
      %1332 = vst [vmem:[#allocation2 + $0x198] sm:$0xf] %v1296
      %1333 = vst [vmem:[#allocation2 + $0x1a4] sm:$0xf] %v1297
      %v1334 = vpack.c.bf16 %v972, %v972
      %v1335 = vpack.c.bf16 %v973, %v973
      %v1336 = vpack.c.bf16 %v974, %v974
      %v1337 = vpack.c.bf16 %v975, %v975
      %v1338 = vpack.c.bf16 %v976, %v976
      %v1339 = vpack.c.bf16 %v977, %v977
      %v1340 = vpack.c.bf16 %v978, %v978
      %v1341 = vpack.c.bf16 %v979, %v979
      %v1342 = vpack.c.bf16 %v980, %v980
      %v1343 = vpack.c.bf16 %v981, %v981
      %v1344 = vpack.c.bf16 %v982, %v982
      %v1345 = vpack.c.bf16 %v983, %v983
      %v1346 = vpack.c.bf16 %v984, %v984
      %v1347 = vpack.c.bf16 %v985, %v985
      %v1348 = vpack.c.bf16 %v986, %v986
      %v1349 = vpack.c.bf16 %v987, %v987
      %v1350 = vpack.c.bf16 %v988, %v988
      %v1351 = vpack.c.bf16 %v989, %v989
      %v1352 = vpack.c.bf16 %v990, %v990
      %v1353 = vpack.c.bf16 %v991, %v991
      %v1354 = vpack.c.bf16 %v992, %v992
      %v1355 = vpack.c.bf16 %v993, %v993
      %v1356 = vpack.c.bf16 %v994, %v994
      %v1357 = vpack.c.bf16 %v995, %v995
      %v1358 = vpack.c.bf16 %v996, %v996
      %v1359 = vpack.c.bf16 %v997, %v997
      %v1360 = vpack.c.bf16 %v998, %v998
      %v1361 = vpack.c.bf16 %v999, %v999
      %v1362 = vpack.c.bf16 %v1000, %v1000
      %v1363 = vpack.c.bf16 %v1001, %v1001
      %v1364 = vpack.c.bf16 %v1002, %v1002
      %v1365 = vpack.c.bf16 %v1003, %v1003
      %v1366 = vpack.c.bf16 %v1004, %v1004
      %v1367 = vpack.c.bf16 %v1005, %v1005
      %v1368 = vpack.c.bf16 %v1006, %v1006
      %v1369 = vpack.c.bf16 %v1007, %v1007
      %1370 = vst [vmem:[#allocation2 + $0x4] sm:$0xf] %v1334
      %1371 = vst [vmem:[#allocation2 + $0x10] sm:$0xf] %v1335
      %1372 = vst [vmem:[#allocation2 + $0x1c] sm:$0xf] %v1336
      %1373 = vst [vmem:[#allocation2 + $0x28] sm:$0xf] %v1337
      %1374 = vst [vmem:[#allocation2 + $0x34] sm:$0xf] %v1338
      %1375 = vst [vmem:[#allocation2 + $0x40] sm:$0xf] %v1339
      %1376 = vst [vmem:[#allocation2 + $0x4c] sm:$0xf] %v1340
      %1377 = vst [vmem:[#allocation2 + $0x58] sm:$0xf] %v1341
      %1378 = vst [vmem:[#allocation2 + $0x64] sm:$0xf] %v1342
      %1379 = vst [vmem:[#allocation2 + $0x70] sm:$0xf] %v1343
      %1380 = vst [vmem:[#allocation2 + $0x7c] sm:$0xf] %v1344
      %1381 = vst [vmem:[#allocation2 + $0x88] sm:$0xf] %v1345
      %1382 = vst [vmem:[#allocation2 + $0x94] sm:$0xf] %v1346
      %1383 = vst [vmem:[#allocation2 + $0xa0] sm:$0xf] %v1347
      %1384 = vst [vmem:[#allocation2 + $0xac] sm:$0xf] %v1348
      %1385 = vst [vmem:[#allocation2 + $0xb8] sm:$0xf] %v1349
      %1386 = vst [vmem:[#allocation2 + $0xc4] sm:$0xf] %v1350
      %1387 = vst [vmem:[#allocation2 + $0xd0] sm:$0xf] %v1351
      %1388 = vst [vmem:[#allocation2 + $0xdc] sm:$0xf] %v1352
      %1389 = vst [vmem:[#allocation2 + $0xe8] sm:$0xf] %v1353
      %1390 = vst [vmem:[#allocation2 + $0xf4] sm:$0xf] %v1354
      %1391 = vst [vmem:[#allocation2 + $0x100] sm:$0xf] %v1355
      %1392 = vst [vmem:[#allocation2 + $0x10c] sm:$0xf] %v1356
      %1393 = vst [vmem:[#allocation2 + $0x118] sm:$0xf] %v1357
      %1394 = vst [vmem:[#allocation2 + $0x124] sm:$0xf] %v1358
      %1395 = vst [vmem:[#allocation2 + $0x130] sm:$0xf] %v1359
      %1396 = vst [vmem:[#allocation2 + $0x13c] sm:$0xf] %v1360
      %1397 = vst [vmem:[#allocation2 + $0x148] sm:$0xf] %v1361
      %1398 = vst [vmem:[#allocation2 + $0x154] sm:$0xf] %v1362
      %1399 = vst [vmem:[#allocation2 + $0x160] sm:$0xf] %v1363
      %1400 = vst [vmem:[#allocation2 + $0x16c] sm:$0xf] %v1364
      %1401 = vst [vmem:[#allocation2 + $0x178] sm:$0xf] %v1365
      %1402 = vst [vmem:[#allocation2 + $0x184] sm:$0xf] %v1366
      %1403 = vst [vmem:[#allocation2 + $0x190] sm:$0xf] %v1367
      %1404 = vst [vmem:[#allocation2 + $0x19c] sm:$0xf] %v1368
      %1405 = vst [vmem:[#allocation2 + $0x1a8] sm:$0xf] %v1369
      %v1406 = vpack.c.bf16 %v1156, %v1156
      %v1407 = vpack.c.bf16 %v1244, %v1244
      %v1408 = vpack.c.bf16 %v1159, %v1159
      %v1409 = vpack.c.bf16 %v1245, %v1245
      %v1410 = vpack.c.bf16 %v1162, %v1162
      %v1411 = vpack.c.bf16 %v1246, %v1246
      %v1412 = vpack.c.bf16 %v1165, %v1165
      %v1413 = vpack.c.bf16 %v1247, %v1247
      %v1414 = vpack.c.bf16 %v1168, %v1168
      %v1415 = vpack.c.bf16 %v1248, %v1248
      %v1416 = vpack.c.bf16 %v1171, %v1171
      %v1417 = vpack.c.bf16 %v1249, %v1249
      %v1418 = vpack.c.bf16 %v1174, %v1174
      %v1419 = vpack.c.bf16 %v1250, %v1250
      %v1420 = vpack.c.bf16 %v1177, %v1177
      %v1421 = vpack.c.bf16 %v1251, %v1251
      %v1422 = vpack.c.bf16 %v1180, %v1180
      %v1423 = vpack.c.bf16 %v1252, %v1252
      %v1424 = vpack.c.bf16 %v1183, %v1183
      %v1425 = vpack.c.bf16 %v1253, %v1253
      %v1426 = vpack.c.bf16 %v1186, %v1186
      %v1427 = vpack.c.bf16 %v1254, %v1254
      %v1428 = vpack.c.bf16 %v1189, %v1189
      %v1429 = vpack.c.bf16 %v1255, %v1255
      %v1430 = vpack.c.bf16 %v1192, %v1192
      %v1431 = vpack.c.bf16 %v1256, %v1256
      %v1432 = vpack.c.bf16 %v1195, %v1195
      %v1433 = vpack.c.bf16 %v1257, %v1257
      %v1434 = vpack.c.bf16 %v1198, %v1198
      %v1435 = vpack.c.bf16 %v1258, %v1258
      %v1436 = vpack.c.bf16 %v1201, %v1201
      %v1437 = vpack.c.bf16 %v1259, %v1259
      %v1438 = vpack.c.bf16 %v1204, %v1204
      %v1439 = vpack.c.bf16 %v1260, %v1260
      %v1440 = vpack.c.bf16 %v1207, %v1207
      %v1441 = vpack.c.bf16 %v1261, %v1261
      %1442 = vst [vmem:[#allocation2 + $0x8] sm:$0xf] %v1406
      %1443 = vst [vmem:[#allocation2 + $0x14] sm:$0xf] %v1407
      %1444 = vst [vmem:[#allocation2 + $0x20] sm:$0xf] %v1408
      %1445 = vst [vmem:[#allocation2 + $0x2c] sm:$0xf] %v1409
      %1446 = vst [vmem:[#allocation2 + $0x38] sm:$0xf] %v1410
      %1447 = vst [vmem:[#allocation2 + $0x44] sm:$0xf] %v1411
      %1448 = vst [vmem:[#allocation2 + $0x50] sm:$0xf] %v1412
      %1449 = vst [vmem:[#allocation2 + $0x5c] sm:$0xf] %v1413
      %1450 = vst [vmem:[#allocation2 + $0x68] sm:$0xf] %v1414
      %1451 = vst [vmem:[#allocation2 + $0x74] sm:$0xf] %v1415
      %1452 = vst [vmem:[#allocation2 + $0x80] sm:$0xf] %v1416
      %1453 = vst [vmem:[#allocation2 + $0x8c] sm:$0xf] %v1417
      %1454 = vst [vmem:[#allocation2 + $0x98] sm:$0xf] %v1418
      %1455 = vst [vmem:[#allocation2 + $0xa4] sm:$0xf] %v1419
      %1456 = vst [vmem:[#allocation2 + $0xb0] sm:$0xf] %v1420
      %1457 = vst [vmem:[#allocation2 + $0xbc] sm:$0xf] %v1421
      %1458 = vst [vmem:[#allocation2 + $0xc8] sm:$0xf] %v1422
      %1459 = vst [vmem:[#allocation2 + $0xd4] sm:$0xf] %v1423
      %1460 = vst [vmem:[#allocation2 + $0xe0] sm:$0xf] %v1424
      %1461 = vst [vmem:[#allocation2 + $0xec] sm:$0xf] %v1425
      %1462 = vst [vmem:[#allocation2 + $0xf8] sm:$0xf] %v1426
      %1463 = vst [vmem:[#allocation2 + $0x104] sm:$0xf] %v1427
      %1464 = vst [vmem:[#allocation2 + $0x110] sm:$0xf] %v1428
      %1465 = vst [vmem:[#allocation2 + $0x11c] sm:$0xf] %v1429
      %1466 = vst [vmem:[#allocation2 + $0x128] sm:$0xf] %v1430
      %1467 = vst [vmem:[#allocation2 + $0x134] sm:$0xf] %v1431
      %1468 = vst [vmem:[#allocation2 + $0x140] sm:$0xf] %v1432
      %1469 = vst [vmem:[#allocation2 + $0x14c] sm:$0xf] %v1433
      %1470 = vst [vmem:[#allocation2 + $0x158] sm:$0xf] %v1434
      %1471 = vst [vmem:[#allocation2 + $0x164] sm:$0xf] %v1435
      %1472 = vst [vmem:[#allocation2 + $0x170] sm:$0xf] %v1436
      %1473 = vst [vmem:[#allocation2 + $0x17c] sm:$0xf] %v1437
      %1474 = vst [vmem:[#allocation2 + $0x188] sm:$0xf] %v1438
      %1475 = vst [vmem:[#allocation2 + $0x194] sm:$0xf] %v1439
      %1476 = vst [vmem:[#allocation2 + $0x1a0] sm:$0xf] %v1440
      %1477 = vst [vmem:[#allocation2 + $0x1ac] sm:$0xf] %v1441
      %p1478 = scmp.eq.s32.totalorder %s23, 0
      // Predicated region
      $region49: #{spade_forward.1} parent=47 // pred_check
        %p1479 = pneg %p1478
      $region50: #{spade_forward.1} parent=47 // pred_check_branch
        %1481 = sbr.rel (%p1479) target = $region52
      $region51: #{spade_forward.1} parent=47 // pred_region
        %1482 = vst [vmem:[#allocation2] sm:$0xff] 0
        %1483 = vst [vmem:[#allocation2 + $0x8] sm:$0xf] 0
        %1484 = vst [vmem:[#allocation2 + $0xc] sm:$0xff] 0
        %1485 = vst [vmem:[#allocation2 + $0x14] sm:$0xf] 0
        %s1486 = scalar_lea.vmem [#allocation2], 408
        %1487 = vst [vmem:[%s1486] sm:$0xff] 0
        %1488 = vst [vmem:[%s1486 + $0x8] sm:$0xf] 0
        %1489 = vst [vmem:[%s1486 + $0xc] sm:$0xff] 0
        %1490 = vst [vmem:[%s1486 + $0x14] sm:$0xf] 0
      $region52: #{spade_forward.1} parent=47 // pred_fallthru
        _
      %v1491 = vld [vmem:[#allocation2] sm:$0xff]
      %v1492 = vld [vmem:[#allocation2 + $0x8] sm:$0xf]
      %v1493 = vld [vmem:[#allocation2 + $0xc] sm:$0xff]
      %v1494 = vld [vmem:[#allocation2 + $0x14] sm:$0xf]
      %v1495 = vld [vmem:[#allocation2 + $0x18] sm:$0xff]
      %v1496 = vld [vmem:[#allocation2 + $0x20] sm:$0xf]
      %v1497 = vld [vmem:[#allocation2 + $0x24] sm:$0xff]
      %v1498 = vld [vmem:[#allocation2 + $0x2c] sm:$0xf]
      %v1499 = vld [vmem:[#allocation2 + $0x30] sm:$0xff]
      %v1500 = vld [vmem:[#allocation2 + $0x38] sm:$0xf]
      %v1501 = vld [vmem:[#allocation2 + $0x3c] sm:$0xff]
      %v1502 = vld [vmem:[#allocation2 + $0x44] sm:$0xf]
      %v1503 = vld [vmem:[#allocation2 + $0x48] sm:$0xff]
      %v1504 = vld [vmem:[#allocation2 + $0x50] sm:$0xf]
      %v1505 = vld [vmem:[#allocation2 + $0x54] sm:$0xff]
      %v1506 = vld [vmem:[#allocation2 + $0x5c] sm:$0xf]
      %v1507 = vld [vmem:[#allocation2 + $0x60] sm:$0xff]
      %v1508 = vld [vmem:[#allocation2 + $0x68] sm:$0xf]
      %v1509 = vld [vmem:[#allocation2 + $0x6c] sm:$0xff]
      %v1510 = vld [vmem:[#allocation2 + $0x74] sm:$0xf]
      %v1511 = vld [vmem:[#allocation2 + $0x78] sm:$0xff]
      %v1512 = vld [vmem:[#allocation2 + $0x80] sm:$0xf]
      %v1513 = vld [vmem:[#allocation2 + $0x84] sm:$0xff]
      %v1514 = vld [vmem:[#allocation2 + $0x8c] sm:$0xf]
      %v1515 = vld [vmem:[#allocation2 + $0x90] sm:$0xff]
      %v1516 = vld [vmem:[#allocation2 + $0x98] sm:$0xf]
      %v1517 = vld [vmem:[#allocation2 + $0x9c] sm:$0xff]
      %v1518 = vld [vmem:[#allocation2 + $0xa4] sm:$0xf]
      %v1519 = vld [vmem:[#allocation2 + $0xa8] sm:$0xff]
      %v1520 = vld [vmem:[#allocation2 + $0xb0] sm:$0xf]
      %v1521 = vld [vmem:[#allocation2 + $0xb4] sm:$0xff]
      %v1522 = vld [vmem:[#allocation2 + $0xbc] sm:$0xf]
      %v1523 = vld [vmem:[#allocation2 + $0xc0] sm:$0xff]
      %v1524 = vld [vmem:[#allocation2 + $0xc8] sm:$0xf]
      %v1525 = vld [vmem:[#allocation2 + $0xcc] sm:$0xff]
      %v1526 = vld [vmem:[#allocation2 + $0xd4] sm:$0xf]
      %v1527 = vld [vmem:[#allocation2 + $0xd8] sm:$0xff]
      %v1528 = vld [vmem:[#allocation2 + $0xe0] sm:$0xf]
      %v1529 = vld [vmem:[#allocation2 + $0xe4] sm:$0xff]
      %v1530 = vld [vmem:[#allocation2 + $0xec] sm:$0xf]
      %v1531 = vld [vmem:[#allocation2 + $0xf0] sm:$0xff]
      %v1532 = vld [vmem:[#allocation2 + $0xf8] sm:$0xf]
      %v1533 = vld [vmem:[#allocation2 + $0xfc] sm:$0xff]
      %v1534 = vld [vmem:[#allocation2 + $0x104] sm:$0xf]
      %v1535 = vld [vmem:[#allocation2 + $0x108] sm:$0xff]
      %v1536 = vld [vmem:[#allocation2 + $0x110] sm:$0xf]
      %v1537 = vld [vmem:[#allocation2 + $0x114] sm:$0xff]
      %v1538 = vld [vmem:[#allocation2 + $0x11c] sm:$0xf]
      %v1539 = vld [vmem:[#allocation2 + $0x120] sm:$0xff]
      %v1540 = vld [vmem:[#allocation2 + $0x128] sm:$0xf]
      %v1541 = vld [vmem:[#allocation2 + $0x12c] sm:$0xff]
      %v1542 = vld [vmem:[#allocation2 + $0x134] sm:$0xf]
      %v1543 = vld [vmem:[#allocation2 + $0x138] sm:$0xff]
      %v1544 = vld [vmem:[#allocation2 + $0x140] sm:$0xf]
      %v1545 = vld [vmem:[#allocation2 + $0x144] sm:$0xff]
      %v1546 = vld [vmem:[#allocation2 + $0x14c] sm:$0xf]
      %v1547 = vld [vmem:[#allocation2 + $0x150] sm:$0xff]
      %v1548 = vld [vmem:[#allocation2 + $0x158] sm:$0xf]
      %v1549 = vld [vmem:[#allocation2 + $0x15c] sm:$0xff]
      %v1550 = vld [vmem:[#allocation2 + $0x164] sm:$0xf]
      %v1551 = vld [vmem:[#allocation2 + $0x168] sm:$0xff]
      %v1552 = vld [vmem:[#allocation2 + $0x170] sm:$0xf]
      %v1553 = vld [vmem:[#allocation2 + $0x174] sm:$0xff]
      %v1554 = vld [vmem:[#allocation2 + $0x17c] sm:$0xf]
      %v1555 = vld [vmem:[%s5] sm:$0xff]
      %v1556 = vld [vmem:[%s5 + $0x8] sm:$0xff]
      %v1557 = vld [vmem:[%s5 + $0x10] sm:$0xff]
      %v1558 = vld [vmem:[%s5 + $0x18] sm:$0xff]
      %v1559 = vld [vmem:[%s5 + $0x20] sm:$0xff]
      %v1560 = vld [vmem:[%s5 + $0x28] sm:$0xff]
      %v1561 = vld [vmem:[%s5 + $0x30] sm:$0xff]
      %v1562 = vld [vmem:[%s5 + $0x38] sm:$0xff]
      %v1563 = vld [vmem:[%s5 + $0x40] sm:$0xff]
      %v1564 = vld [vmem:[%s5 + $0x48] sm:$0xff]
      %v1565 = vld [vmem:[%s5 + $0x50] sm:$0xff]
      %v1566 = vld [vmem:[%s5 + $0x58] sm:$0xff]
      %v1567 = vld [vmem:[%s5 + $0x60] sm:$0xff]
      %v1568 = vld [vmem:[%s5 + $0x68] sm:$0xff]
      %v1569 = vld [vmem:[%s5 + $0x70] sm:$0xff]
      %v1570 = vld [vmem:[%s5 + $0x78] sm:$0xff]
      %v1571 = vld [vmem:[%s5 + $0x80] sm:$0xff]
      %v1572 = vld [vmem:[%s5 + $0x88] sm:$0xff]
      %v1573 = vld [vmem:[%s5 + $0x90] sm:$0xff]
      %v1574 = vld [vmem:[%s5 + $0x98] sm:$0xff]
      %v1575 = vld [vmem:[%s5 + $0xa0] sm:$0xff]
      %v1576 = vld [vmem:[%s5 + $0xa8] sm:$0xff]
      %v1577 = vld [vmem:[%s5 + $0xb0] sm:$0xff]
      %v1578 = vld [vmem:[%s5 + $0xb8] sm:$0xff]
      %v1579 = vld [vmem:[%s5 + $0xc0] sm:$0xff]
      %v1580 = vld [vmem:[%s5 + $0xc8] sm:$0xff]
      %v1581 = vld [vmem:[%s5 + $0xd0] sm:$0xff]
      %v1582 = vld [vmem:[%s5 + $0xd8] sm:$0xff]
      %v1583 = vld [vmem:[%s5 + $0xe0] sm:$0xff]
      %v1584 = vld [vmem:[%s5 + $0xe8] sm:$0xff]
      %v1585 = vld [vmem:[%s5 + $0xf0] sm:$0xff]
      %v1586 = vld [vmem:[%s5 + $0xf8] sm:$0xff]
      %v1587 = vld [vmem:[%s5 + $0x100] sm:$0xff]
      %v1588 = vld [vmem:[%s5 + $0x108] sm:$0xff]
      %v1589 = vld [vmem:[%s5 + $0x110] sm:$0xff]
      %v1590 = vld [vmem:[%s5 + $0x118] sm:$0xff]
      %v1591 = vld [vmem:[%s5 + $0x120] sm:$0xff]
      %v1592 = vld [vmem:[%s5 + $0x128] sm:$0xff]
      %v1593 = vld [vmem:[%s5 + $0x130] sm:$0xff]
      %v1594 = vld [vmem:[%s5 + $0x138] sm:$0xff]
      %v1595 = vld [vmem:[%s5 + $0x140] sm:$0xff]
      %v1596 = vld [vmem:[%s5 + $0x148] sm:$0xff]
      %v1597 = vld [vmem:[%s5 + $0x150] sm:$0xff]
      %v1598 = vld [vmem:[%s5 + $0x158] sm:$0xff]
      %v1599 = vld [vmem:[%s5 + $0x160] sm:$0xff]
      %v1600 = vld [vmem:[%s5 + $0x168] sm:$0xff]
      %v1601 = vld [vmem:[%s5 + $0x170] sm:$0xff]
      %v1602 = vld [vmem:[%s5 + $0x178] sm:$0xff]
      %s1603 = scalar_lea.vmem [#allocation2], 24
      %v1604 = vld [vmem:[%s1603] sm:$0xff]
      %v1605 = vld [vmem:[%s1603 + $0x8] sm:$0xf]
      %v1606 = vld [vmem:[%s1603 + $0xc] sm:$0xff]
      %v1607 = vld [vmem:[%s1603 + $0x14] sm:$0xf]
      %v1608 = vld [vmem:[%s1603 + $0x18] sm:$0xff]
      %v1609 = vld [vmem:[%s1603 + $0x20] sm:$0xf]
      %v1610 = vld [vmem:[%s1603 + $0x24] sm:$0xff]
      %v1611 = vld [vmem:[%s1603 + $0x2c] sm:$0xf]
      %v1612 = vld [vmem:[%s1603 + $0x30] sm:$0xff]
      %v1613 = vld [vmem:[%s1603 + $0x38] sm:$0xf]
      %v1614 = vld [vmem:[%s1603 + $0x3c] sm:$0xff]
      %v1615 = vld [vmem:[%s1603 + $0x44] sm:$0xf]
      %v1616 = vld [vmem:[%s1603 + $0x48] sm:$0xff]
      %v1617 = vld [vmem:[%s1603 + $0x50] sm:$0xf]
      %v1618 = vld [vmem:[%s1603 + $0x54] sm:$0xff]
      %v1619 = vld [vmem:[%s1603 + $0x5c] sm:$0xf]
      %v1620 = vld [vmem:[%s1603 + $0x60] sm:$0xff]
      %v1621 = vld [vmem:[%s1603 + $0x68] sm:$0xf]
      %v1622 = vld [vmem:[%s1603 + $0x6c] sm:$0xff]
      %v1623 = vld [vmem:[%s1603 + $0x74] sm:$0xf]
      %v1624 = vld [vmem:[%s1603 + $0x78] sm:$0xff]
      %v1625 = vld [vmem:[%s1603 + $0x80] sm:$0xf]
      %v1626 = vld [vmem:[%s1603 + $0x84] sm:$0xff]
      %v1627 = vld [vmem:[%s1603 + $0x8c] sm:$0xf]
      %v1628 = vld [vmem:[%s1603 + $0x90] sm:$0xff]
      %v1629 = vld [vmem:[%s1603 + $0x98] sm:$0xf]
      %v1630 = vld [vmem:[%s1603 + $0x9c] sm:$0xff]
      %v1631 = vld [vmem:[%s1603 + $0xa4] sm:$0xf]
      %v1632 = vld [vmem:[%s1603 + $0xa8] sm:$0xff]
      %v1633 = vld [vmem:[%s1603 + $0xb0] sm:$0xf]
      %v1634 = vld [vmem:[%s1603 + $0xb4] sm:$0xff]
      %v1635 = vld [vmem:[%s1603 + $0xbc] sm:$0xf]
      %v1636 = vld [vmem:[%s1603 + $0xc0] sm:$0xff]
      %v1637 = vld [vmem:[%s1603 + $0xc8] sm:$0xf]
      %v1638 = vld [vmem:[%s1603 + $0xcc] sm:$0xff]
      %v1639 = vld [vmem:[%s1603 + $0xd4] sm:$0xf]
      %v1640 = vld [vmem:[%s1603 + $0xd8] sm:$0xff]
      %v1641 = vld [vmem:[%s1603 + $0xe0] sm:$0xf]
      %v1642 = vld [vmem:[%s1603 + $0xe4] sm:$0xff]
      %v1643 = vld [vmem:[%s1603 + $0xec] sm:$0xf]
      %v1644 = vld [vmem:[%s1603 + $0xf0] sm:$0xff]
      %v1645 = vld [vmem:[%s1603 + $0xf8] sm:$0xf]
      %v1646 = vld [vmem:[%s1603 + $0xfc] sm:$0xff]
      %v1647 = vld [vmem:[%s1603 + $0x104] sm:$0xf]
      %v1648 = vld [vmem:[%s1603 + $0x108] sm:$0xff]
      %v1649 = vld [vmem:[%s1603 + $0x110] sm:$0xf]
      %v1650 = vld [vmem:[%s1603 + $0x114] sm:$0xff]
      %v1651 = vld [vmem:[%s1603 + $0x11c] sm:$0xf]
      %v1652 = vld [vmem:[%s1603 + $0x120] sm:$0xff]
      %v1653 = vld [vmem:[%s1603 + $0x128] sm:$0xf]
      %v1654 = vld [vmem:[%s1603 + $0x12c] sm:$0xff]
      %v1655 = vld [vmem:[%s1603 + $0x134] sm:$0xf]
      %v1656 = vld [vmem:[%s1603 + $0x138] sm:$0xff]
      %v1657 = vld [vmem:[%s1603 + $0x140] sm:$0xf]
      %v1658 = vld [vmem:[%s1603 + $0x144] sm:$0xff]
      %v1659 = vld [vmem:[%s1603 + $0x14c] sm:$0xf]
      %v1660 = vld [vmem:[%s1603 + $0x150] sm:$0xff]
      %v1661 = vld [vmem:[%s1603 + $0x158] sm:$0xf]
      %v1662 = vld [vmem:[%s1603 + $0x15c] sm:$0xff]
      %v1663 = vld [vmem:[%s1603 + $0x164] sm:$0xf]
      %v1664 = vld [vmem:[%s1603 + $0x168] sm:$0xff]
      %v1665 = vld [vmem:[%s1603 + $0x170] sm:$0xf]
      %v1666 = vld [vmem:[%s1603 + $0x174] sm:$0xff]
      %v1667 = vld [vmem:[%s1603 + $0x17c] sm:$0xf]
      %s1668 = scalar_lea.vmem %s5, 384
      %v1669 = vld [vmem:[%s1668] sm:$0xff]
      %v1670 = vld [vmem:[%s1668 + $0x8] sm:$0xff]
      %v1671 = vld [vmem:[%s1668 + $0x10] sm:$0xff]
      %v1672 = vld [vmem:[%s1668 + $0x18] sm:$0xff]
      %v1673 = vld [vmem:[%s1668 + $0x20] sm:$0xff]
      %v1674 = vld [vmem:[%s1668 + $0x28] sm:$0xff]
      %v1675 = vld [vmem:[%s1668 + $0x30] sm:$0xff]
      %v1676 = vld [vmem:[%s1668 + $0x38] sm:$0xff]
      %v1677 = vld [vmem:[%s1668 + $0x40] sm:$0xff]
      %v1678 = vld [vmem:[%s1668 + $0x48] sm:$0xff]
      %v1679 = vld [vmem:[%s1668 + $0x50] sm:$0xff]
      %v1680 = vld [vmem:[%s1668 + $0x58] sm:$0xff]
      %v1681 = vld [vmem:[%s1668 + $0x60] sm:$0xff]
      %v1682 = vld [vmem:[%s1668 + $0x68] sm:$0xff]
      %v1683 = vld [vmem:[%s1668 + $0x70] sm:$0xff]
      %v1684 = vld [vmem:[%s1668 + $0x78] sm:$0xff]
      %v1685 = vld [vmem:[%s1668 + $0x80] sm:$0xff]
      %v1686 = vld [vmem:[%s1668 + $0x88] sm:$0xff]
      %v1687 = vld [vmem:[%s1668 + $0x90] sm:$0xff]
      %v1688 = vld [vmem:[%s1668 + $0x98] sm:$0xff]
      %v1689 = vld [vmem:[%s1668 + $0xa0] sm:$0xff]
      %v1690 = vld [vmem:[%s1668 + $0xa8] sm:$0xff]
      %v1691 = vld [vmem:[%s1668 + $0xb0] sm:$0xff]
      %v1692 = vld [vmem:[%s1668 + $0xb8] sm:$0xff]
      %v1693 = vld [vmem:[%s1668 + $0xc0] sm:$0xff]
      %v1694 = vld [vmem:[%s1668 + $0xc8] sm:$0xff]
      %v1695 = vld [vmem:[%s1668 + $0xd0] sm:$0xff]
      %v1696 = vld [vmem:[%s1668 + $0xd8] sm:$0xff]
      %v1697 = vld [vmem:[%s1668 + $0xe0] sm:$0xff]
      %v1698 = vld [vmem:[%s1668 + $0xe8] sm:$0xff]
      %v1699 = vld [vmem:[%s1668 + $0xf0] sm:$0xff]
      %v1700 = vld [vmem:[%s1668 + $0xf8] sm:$0xff]
      %v1701 = vld [vmem:[%s1668 + $0x100] sm:$0xff]
      %v1702 = vld [vmem:[%s1668 + $0x108] sm:$0xff]
      %v1703 = vld [vmem:[%s1668 + $0x110] sm:$0xff]
      %v1704 = vld [vmem:[%s1668 + $0x118] sm:$0xff]
      %v1705 = vld [vmem:[%s1668 + $0x120] sm:$0xff]
      %v1706 = vld [vmem:[%s1668 + $0x128] sm:$0xff]
      %v1707 = vld [vmem:[%s1668 + $0x130] sm:$0xff]
      %v1708 = vld [vmem:[%s1668 + $0x138] sm:$0xff]
      %v1709 = vld [vmem:[%s1668 + $0x140] sm:$0xff]
      %v1710 = vld [vmem:[%s1668 + $0x148] sm:$0xff]
      %v1711 = vld [vmem:[%s1668 + $0x150] sm:$0xff]
      %v1712 = vld [vmem:[%s1668 + $0x158] sm:$0xff]
      %v1713 = vld [vmem:[%s1668 + $0x160] sm:$0xff]
      %v1714 = vld [vmem:[%s1668 + $0x168] sm:$0xff]
      %v1715 = vld [vmem:[%s1668 + $0x170] sm:$0xff]
      %v1716 = vld [vmem:[%s1668 + $0x178] sm:$0xff]
      %v1781 = vunpack.c.l.b16 %v1604
      %v1782 = vunpack.c.h.b16 %v1604
      %v1783 = vunpack.c.l.b16 %v1605
      %v1784 = vunpack.c.l.b16 %v1606
      %v1785 = vunpack.c.h.b16 %v1606
      %v1786 = vunpack.c.l.b16 %v1607
      %v1787 = vunpack.c.l.b16 %v1608
      %v1788 = vunpack.c.h.b16 %v1608
      %v1789 = vunpack.c.l.b16 %v1609
      %v1790 = vunpack.c.l.b16 %v1610
      %v1791 = vunpack.c.h.b16 %v1610
      %v1792 = vunpack.c.l.b16 %v1611
      %v1793 = vunpack.c.l.b16 %v1612
      %v1794 = vunpack.c.h.b16 %v1612
      %v1795 = vunpack.c.l.b16 %v1613
      %v1796 = vunpack.c.l.b16 %v1614
      %v1797 = vunpack.c.h.b16 %v1614
      %v1798 = vunpack.c.l.b16 %v1615
      %v1799 = vunpack.c.l.b16 %v1616
      %v1800 = vunpack.c.h.b16 %v1616
      %v1801 = vunpack.c.l.b16 %v1617
      %v1802 = vunpack.c.l.b16 %v1618
      %v1803 = vunpack.c.h.b16 %v1618
      %v1804 = vunpack.c.l.b16 %v1619
      %v1805 = vunpack.c.l.b16 %v1620
      %v1806 = vunpack.c.h.b16 %v1620
      %v1807 = vunpack.c.l.b16 %v1621
      %v1808 = vunpack.c.l.b16 %v1622
      %v1809 = vunpack.c.h.b16 %v1622
      %v1810 = vunpack.c.l.b16 %v1623
      %v1811 = vunpack.c.l.b16 %v1624
      %v1812 = vunpack.c.h.b16 %v1624
      %v1813 = vunpack.c.l.b16 %v1625
      %v1814 = vunpack.c.l.b16 %v1626
      %v1815 = vunpack.c.h.b16 %v1626
      %v1816 = vunpack.c.l.b16 %v1627
      %v1817 = vunpack.c.l.b16 %v1628
      %v1818 = vunpack.c.h.b16 %v1628
      %v1819 = vunpack.c.l.b16 %v1629
      %v1820 = vunpack.c.l.b16 %v1630
      %v1821 = vunpack.c.h.b16 %v1630
      %v1822 = vunpack.c.l.b16 %v1631
      %v1823 = vunpack.c.l.b16 %v1632
      %v1824 = vunpack.c.h.b16 %v1632
      %v1825 = vunpack.c.l.b16 %v1633
      %v1826 = vunpack.c.l.b16 %v1634
      %v1827 = vunpack.c.h.b16 %v1634
      %v1828 = vunpack.c.l.b16 %v1635
      %v1829 = vunpack.c.l.b16 %v1636
      %v1830 = vunpack.c.h.b16 %v1636
      %v1831 = vunpack.c.l.b16 %v1637
      %v1832 = vunpack.c.l.b16 %v1638
      %v1833 = vunpack.c.h.b16 %v1638
      %v1834 = vunpack.c.l.b16 %v1639
      %v1835 = vunpack.c.l.b16 %v1640
      %v1836 = vunpack.c.h.b16 %v1640
      %v1837 = vunpack.c.l.b16 %v1641
      %v1838 = vunpack.c.l.b16 %v1642
      %v1839 = vunpack.c.h.b16 %v1642
      %v1840 = vunpack.c.l.b16 %v1643
      %v1841 = vunpack.c.l.b16 %v1644
      %v1842 = vunpack.c.h.b16 %v1644
      %v1843 = vunpack.c.l.b16 %v1645
      %v1844 = vunpack.c.l.b16 %v1646
      %v1845 = vunpack.c.h.b16 %v1646
      %v1846 = vunpack.c.l.b16 %v1647
      %v1847 = vunpack.c.l.b16 %v1648
      %v1848 = vunpack.c.h.b16 %v1648
      %v1849 = vunpack.c.l.b16 %v1649
      %v1850 = vunpack.c.l.b16 %v1650
      %v1851 = vunpack.c.h.b16 %v1650
      %v1852 = vunpack.c.l.b16 %v1651
      %v1853 = vunpack.c.l.b16 %v1652
      %v1854 = vunpack.c.h.b16 %v1652
      %v1855 = vunpack.c.l.b16 %v1653
      %v1856 = vunpack.c.l.b16 %v1654
      %v1857 = vunpack.c.h.b16 %v1654
      %v1858 = vunpack.c.l.b16 %v1655
      %v1859 = vunpack.c.l.b16 %v1656
      %v1860 = vunpack.c.h.b16 %v1656
      %v1861 = vunpack.c.l.b16 %v1657
      %v1862 = vunpack.c.l.b16 %v1658
      %v1863 = vunpack.c.h.b16 %v1658
      %v1864 = vunpack.c.l.b16 %v1659
      %v1865 = vunpack.c.l.b16 %v1660
      %v1866 = vunpack.c.h.b16 %v1660
      %v1867 = vunpack.c.l.b16 %v1661
      %v1868 = vunpack.c.l.b16 %v1662
      %v1869 = vunpack.c.h.b16 %v1662
      %v1870 = vunpack.c.l.b16 %v1663
      %v1871 = vunpack.c.l.b16 %v1664
      %v1872 = vunpack.c.h.b16 %v1664
      %v1873 = vunpack.c.l.b16 %v1665
      %v1874 = vunpack.c.l.b16 %v1666
      %v1875 = vunpack.c.h.b16 %v1666
      %v1876 = vunpack.c.l.b16 %v1667
      %v1877 = vpack.c.b16 %v1784, %v1781
      %v1878 = vpack.c.b16 %v1785, %v1782
      %v1879 = vpack.c.b16 %v1786, %v1783
      %v1880 = vpack.c.b16 %v1790, %v1787
      %v1881 = vpack.c.b16 %v1791, %v1788
      %v1882 = vpack.c.b16 %v1792, %v1789
      %v1883 = vpack.c.b16 %v1796, %v1793
      %v1884 = vpack.c.b16 %v1797, %v1794
      %v1885 = vpack.c.b16 %v1798, %v1795
      %v1886 = vpack.c.b16 %v1802, %v1799
      %v1887 = vpack.c.b16 %v1803, %v1800
      %v1888 = vpack.c.b16 %v1804, %v1801
      %v1889 = vpack.c.b16 %v1808, %v1805
      %v1890 = vpack.c.b16 %v1809, %v1806
      %v1891 = vpack.c.b16 %v1810, %v1807
      %v1892 = vpack.c.b16 %v1814, %v1811
      %v1893 = vpack.c.b16 %v1815, %v1812
      %v1894 = vpack.c.b16 %v1816, %v1813
      %v1895 = vpack.c.b16 %v1820, %v1817
      %v1896 = vpack.c.b16 %v1821, %v1818
      %v1897 = vpack.c.b16 %v1822, %v1819
      %v1898 = vpack.c.b16 %v1826, %v1823
      %v1899 = vpack.c.b16 %v1827, %v1824
      %v1900 = vpack.c.b16 %v1828, %v1825
      %v1901 = vpack.c.b16 %v1832, %v1829
      %v1902 = vpack.c.b16 %v1833, %v1830
      %v1903 = vpack.c.b16 %v1834, %v1831
      %v1904 = vpack.c.b16 %v1838, %v1835
      %v1905 = vpack.c.b16 %v1839, %v1836
      %v1906 = vpack.c.b16 %v1840, %v1837
      %v1907 = vpack.c.b16 %v1844, %v1841
      %v1908 = vpack.c.b16 %v1845, %v1842
      %v1909 = vpack.c.b16 %v1846, %v1843
      %v1910 = vpack.c.b16 %v1850, %v1847
      %v1911 = vpack.c.b16 %v1851, %v1848
      %v1912 = vpack.c.b16 %v1852, %v1849
      %v1913 = vpack.c.b16 %v1856, %v1853
      %v1914 = vpack.c.b16 %v1857, %v1854
      %v1915 = vpack.c.b16 %v1858, %v1855
      %v1916 = vpack.c.b16 %v1862, %v1859
      %v1917 = vpack.c.b16 %v1863, %v1860
      %v1918 = vpack.c.b16 %v1864, %v1861
      %v1919 = vpack.c.b16 %v1868, %v1865
      %v1920 = vpack.c.b16 %v1869, %v1866
      %v1921 = vpack.c.b16 %v1870, %v1867
      %v1922 = vpack.c.b16 %v1874, %v1871
      %v1923 = vpack.c.b16 %v1875, %v1872
      %v1924 = vpack.c.b16 %v1876, %v1873
      %v2021 = vunpack.c.l.b16 %v1669
      %v2022 = vunpack.c.h.b16 %v1669
      %v2023 = vunpack.c.l.b16 %v1670
      %v2024 = vunpack.c.h.b16 %v1670
      %v2025 = vunpack.c.l.b16 %v1671
      %v2026 = vunpack.c.h.b16 %v1671
      %v2027 = vunpack.c.l.b16 %v1672
      %v2028 = vunpack.c.h.b16 %v1672
      %v2029 = vunpack.c.l.b16 %v1673
      %v2030 = vunpack.c.h.b16 %v1673
      %v2031 = vunpack.c.l.b16 %v1674
      %v2032 = vunpack.c.h.b16 %v1674
      %v2033 = vunpack.c.l.b16 %v1675
      %v2034 = vunpack.c.h.b16 %v1675
      %v2035 = vunpack.c.l.b16 %v1676
      %v2036 = vunpack.c.h.b16 %v1676
      %v2037 = vunpack.c.l.b16 %v1677
      %v2038 = vunpack.c.h.b16 %v1677
      %v2039 = vunpack.c.l.b16 %v1678
      %v2040 = vunpack.c.h.b16 %v1678
      %v2041 = vunpack.c.l.b16 %v1679
      %v2042 = vunpack.c.h.b16 %v1679
      %v2043 = vunpack.c.l.b16 %v1680
      %v2044 = vunpack.c.h.b16 %v1680
      %v2045 = vunpack.c.l.b16 %v1681
      %v2046 = vunpack.c.h.b16 %v1681
      %v2047 = vunpack.c.l.b16 %v1682
      %v2048 = vunpack.c.h.b16 %v1682
      %v2049 = vunpack.c.l.b16 %v1683
      %v2050 = vunpack.c.h.b16 %v1683
      %v2051 = vunpack.c.l.b16 %v1684
      %v2052 = vunpack.c.h.b16 %v1684
      %v2053 = vunpack.c.l.b16 %v1685
      %v2054 = vunpack.c.h.b16 %v1685
      %v2055 = vunpack.c.l.b16 %v1686
      %v2056 = vunpack.c.h.b16 %v1686
      %v2057 = vunpack.c.l.b16 %v1687
      %v2058 = vunpack.c.h.b16 %v1687
      %v2059 = vunpack.c.l.b16 %v1688
      %v2060 = vunpack.c.h.b16 %v1688
      %v2061 = vunpack.c.l.b16 %v1689
      %v2062 = vunpack.c.h.b16 %v1689
      %v2063 = vunpack.c.l.b16 %v1690
      %v2064 = vunpack.c.h.b16 %v1690
      %v2065 = vunpack.c.l.b16 %v1691
      %v2066 = vunpack.c.h.b16 %v1691
      %v2067 = vunpack.c.l.b16 %v1692
      %v2068 = vunpack.c.h.b16 %v1692
      %v2069 = vunpack.c.l.b16 %v1693
      %v2070 = vunpack.c.h.b16 %v1693
      %v2071 = vunpack.c.l.b16 %v1694
      %v2072 = vunpack.c.h.b16 %v1694
      %v2073 = vunpack.c.l.b16 %v1695
      %v2074 = vunpack.c.h.b16 %v1695
      %v2075 = vunpack.c.l.b16 %v1696
      %v2076 = vunpack.c.h.b16 %v1696
      %v2077 = vunpack.c.l.b16 %v1697
      %v2078 = vunpack.c.h.b16 %v1697
      %v2079 = vunpack.c.l.b16 %v1698
      %v2080 = vunpack.c.h.b16 %v1698
      %v2081 = vunpack.c.l.b16 %v1699
      %v2082 = vunpack.c.h.b16 %v1699
      %v2083 = vunpack.c.l.b16 %v1700
      %v2084 = vunpack.c.h.b16 %v1700
      %v2085 = vunpack.c.l.b16 %v1701
      %v2086 = vunpack.c.h.b16 %v1701
      %v2087 = vunpack.c.l.b16 %v1702
      %v2088 = vunpack.c.h.b16 %v1702
      %v2089 = vunpack.c.l.b16 %v1703
      %v2090 = vunpack.c.h.b16 %v1703
      %v2091 = vunpack.c.l.b16 %v1704
      %v2092 = vunpack.c.h.b16 %v1704
      %v2093 = vunpack.c.l.b16 %v1705
      %v2094 = vunpack.c.h.b16 %v1705
      %v2095 = vunpack.c.l.b16 %v1706
      %v2096 = vunpack.c.h.b16 %v1706
      %v2097 = vunpack.c.l.b16 %v1707
      %v2098 = vunpack.c.h.b16 %v1707
      %v2099 = vunpack.c.l.b16 %v1708
      %v2100 = vunpack.c.h.b16 %v1708
      %v2101 = vunpack.c.l.b16 %v1709
      %v2102 = vunpack.c.h.b16 %v1709
      %v2103 = vunpack.c.l.b16 %v1710
      %v2104 = vunpack.c.h.b16 %v1710
      %v2105 = vunpack.c.l.b16 %v1711
      %v2106 = vunpack.c.h.b16 %v1711
      %v2107 = vunpack.c.l.b16 %v1712
      %v2108 = vunpack.c.h.b16 %v1712
      %v2109 = vunpack.c.l.b16 %v1713
      %v2110 = vunpack.c.h.b16 %v1713
      %v2111 = vunpack.c.l.b16 %v1714
      %v2112 = vunpack.c.h.b16 %v1714
      %v2113 = vunpack.c.l.b16 %v1715
      %v2114 = vunpack.c.h.b16 %v1715
      %v2115 = vunpack.c.l.b16 %v1716
      %v2116 = vunpack.c.h.b16 %v1716
      %v2117 = vpack.c.b16 %v2023, %v2021
      %v2118 = vpack.c.b16 %v2024, %v2022
      %v2119 = vpack.c.b16 %v2027, %v2025
      %v2120 = vpack.c.b16 %v2028, %v2026
      %v2121 = vpack.c.b16 %v2031, %v2029
      %v2122 = vpack.c.b16 %v2032, %v2030
      %v2123 = vpack.c.b16 %v2035, %v2033
      %v2124 = vpack.c.b16 %v2036, %v2034
      %v2125 = vpack.c.b16 %v2039, %v2037
      %v2126 = vpack.c.b16 %v2040, %v2038
      %v2127 = vpack.c.b16 %v2043, %v2041
      %v2128 = vpack.c.b16 %v2044, %v2042
      %v2129 = vpack.c.b16 %v2047, %v2045
      %v2130 = vpack.c.b16 %v2048, %v2046
      %v2131 = vpack.c.b16 %v2051, %v2049
      %v2132 = vpack.c.b16 %v2052, %v2050
      %v2133 = vpack.c.b16 %v2055, %v2053
      %v2134 = vpack.c.b16 %v2056, %v2054
      %v2135 = vpack.c.b16 %v2059, %v2057
      %v2136 = vpack.c.b16 %v2060, %v2058
      %v2137 = vpack.c.b16 %v2063, %v2061
      %v2138 = vpack.c.b16 %v2064, %v2062
      %v2139 = vpack.c.b16 %v2067, %v2065
      %v2140 = vpack.c.b16 %v2068, %v2066
      %v2141 = vpack.c.b16 %v2071, %v2069
      %v2142 = vpack.c.b16 %v2072, %v2070
      %v2143 = vpack.c.b16 %v2075, %v2073
      %v2144 = vpack.c.b16 %v2076, %v2074
      %v2145 = vpack.c.b16 %v2079, %v2077
      %v2146 = vpack.c.b16 %v2080, %v2078
      %v2147 = vpack.c.b16 %v2083, %v2081
      %v2148 = vpack.c.b16 %v2084, %v2082
      %v2149 = vpack.c.b16 %v2087, %v2085
      %v2150 = vpack.c.b16 %v2088, %v2086
      %v2151 = vpack.c.b16 %v2091, %v2089
      %v2152 = vpack.c.b16 %v2092, %v2090
      %v2153 = vpack.c.b16 %v2095, %v2093
      %v2154 = vpack.c.b16 %v2096, %v2094
      %v2155 = vpack.c.b16 %v2099, %v2097
      %v2156 = vpack.c.b16 %v2100, %v2098
      %v2157 = vpack.c.b16 %v2103, %v2101
      %v2158 = vpack.c.b16 %v2104, %v2102
      %v2159 = vpack.c.b16 %v2107, %v2105
      %v2160 = vpack.c.b16 %v2108, %v2106
      %v2161 = vpack.c.b16 %v2111, %v2109
      %v2162 = vpack.c.b16 %v2112, %v2110
      %v2163 = vpack.c.b16 %v2115, %v2113
      %v2164 = vpack.c.b16 %v2116, %v2114
      %2213 = vmatpush.bf16.msra.mxu0 %v2131
      %2214 = vmatpush.bf16.msra.mxu0 %v2129
      %2215 = vmatpush.bf16.msra.mxu0 %v2127
      %2216 = vmatpush.bf16.msra.mxu0 %v2125
      %2217 = vmatpush.bf16.msra.mxu0 %v2123
      %2218 = vmatpush.bf16.msra.mxu0 %v2121
      %2219 = vmatpush.bf16.msra.mxu0 %v2119
      %2220 = vmatpush.bf16.msra.mxu0 %v2117
      %2221 = vmatmul.bf16.gmra.mxu0 %v1877
      %v2222 = vpop.f32.mrf.mxu0
      %v2223 = vadd.f32 0.0, %v2222
      %v2224 = vpop.f32.mrf.mxu0
      %v2225 = vadd.f32 0.0, %v2224
      %2226 = vmatmul.bf16.gmra.mxu0 %v1880
      %v2227 = vpop.f32.mrf.mxu0
      %v2228 = vadd.f32 0.0, %v2227
      %v2229 = vpop.f32.mrf.mxu0
      %v2230 = vadd.f32 0.0, %v2229
      %2231 = vmatmul.bf16.gmra.mxu0 %v1883
      %v2232 = vpop.f32.mrf.mxu0
      %v2233 = vadd.f32 0.0, %v2232
      %v2234 = vpop.f32.mrf.mxu0
      %v2235 = vadd.f32 0.0, %v2234
      %2236 = vmatmul.bf16.gmra.mxu0 %v1886
      %v2237 = vpop.f32.mrf.mxu0
      %v2238 = vadd.f32 0.0, %v2237
      %v2239 = vpop.f32.mrf.mxu0
      %v2240 = vadd.f32 0.0, %v2239
      %2241 = vmatmul.bf16.gmra.mxu0 %v1889
      %v2242 = vpop.f32.mrf.mxu0
      %v2243 = vadd.f32 0.0, %v2242
      %v2244 = vpop.f32.mrf.mxu0
      %v2245 = vadd.f32 0.0, %v2244
      %2246 = vmatmul.bf16.gmra.mxu0 %v1892
      %v2247 = vpop.f32.mrf.mxu0
      %v2248 = vadd.f32 0.0, %v2247
      %v2249 = vpop.f32.mrf.mxu0
      %v2250 = vadd.f32 0.0, %v2249
      %2251 = vmatmul.bf16.gmra.mxu0 %v1895
      %v2252 = vpop.f32.mrf.mxu0
      %v2253 = vadd.f32 0.0, %v2252
      %v2254 = vpop.f32.mrf.mxu0
      %v2255 = vadd.f32 0.0, %v2254
      %2256 = vmatmul.bf16.gmra.mxu0 %v1898
      %v2257 = vpop.f32.mrf.mxu0
      %v2258 = vadd.f32 0.0, %v2257
      %v2259 = vpop.f32.mrf.mxu0
      %v2260 = vadd.f32 0.0, %v2259
      %2261 = vmatmul.bf16.gmra.mxu0 %v1901
      %v2262 = vpop.f32.mrf.mxu0
      %v2263 = vadd.f32 0.0, %v2262
      %v2264 = vpop.f32.mrf.mxu0
      %v2265 = vadd.f32 0.0, %v2264
      %2266 = vmatmul.bf16.gmra.mxu0 %v1904
      %v2267 = vpop.f32.mrf.mxu0
      %v2268 = vadd.f32 0.0, %v2267
      %v2269 = vpop.f32.mrf.mxu0
      %v2270 = vadd.f32 0.0, %v2269
      %2271 = vmatmul.bf16.gmra.mxu0 %v1907
      %v2272 = vpop.f32.mrf.mxu0
      %v2273 = vadd.f32 0.0, %v2272
      %v2274 = vpop.f32.mrf.mxu0
      %v2275 = vadd.f32 0.0, %v2274
      %2276 = vmatmul.bf16.gmra.mxu0 %v1910
      %v2277 = vpop.f32.mrf.mxu0
      %v2278 = vadd.f32 0.0, %v2277
      %v2279 = vpop.f32.mrf.mxu0
      %v2280 = vadd.f32 0.0, %v2279
      %2281 = vmatmul.bf16.gmra.mxu0 %v1913
      %v2282 = vpop.f32.mrf.mxu0
      %v2283 = vadd.f32 0.0, %v2282
      %v2284 = vpop.f32.mrf.mxu0
      %v2285 = vadd.f32 0.0, %v2284
      %2286 = vmatmul.bf16.gmra.mxu0 %v1916
      %v2287 = vpop.f32.mrf.mxu0
      %v2288 = vadd.f32 0.0, %v2287
      %v2289 = vpop.f32.mrf.mxu0
      %v2290 = vadd.f32 0.0, %v2289
      %2291 = vmatmul.bf16.gmra.mxu0 %v1919
      %v2292 = vpop.f32.mrf.mxu0
      %v2293 = vadd.f32 0.0, %v2292
      %v2294 = vpop.f32.mrf.mxu0
      %v2295 = vadd.f32 0.0, %v2294
      %2296 = vmatmul.bf16.gmra.mxu0 %v1922
      %v2297 = vpop.f32.mrf.mxu0
      %v2298 = vadd.f32 0.0, %v2297
      %v2299 = vpop.f32.mrf.mxu0
      %v2300 = vadd.f32 0.0, %v2299
      %2301 = vdwg.mxu0
      %2302 = vmatpush.bf16.msra.mxu0 %v2147
      %2303 = vmatpush.bf16.msra.mxu0 %v2145
      %2304 = vmatpush.bf16.msra.mxu0 %v2143
      %2305 = vmatpush.bf16.msra.mxu0 %v2141
      %2306 = vmatpush.bf16.msra.mxu0 %v2139
      %2307 = vmatpush.bf16.msra.mxu0 %v2137
      %2308 = vmatpush.bf16.msra.mxu0 %v2135
      %2309 = vmatpush.bf16.msra.mxu0 %v2133
      %2310 = vmatmul.bf16.gmra.mxu0 %v1878
      %v2311 = vpop.f32.mrf.mxu0
      %v2312 = vadd.f32 %v2223, %v2311
      %v2313 = vpop.f32.mrf.mxu0
      %v2314 = vadd.f32 %v2225, %v2313
      %2315 = vmatmul.bf16.gmra.mxu0 %v1881
      %v2316 = vpop.f32.mrf.mxu0
      %v2317 = vadd.f32 %v2228, %v2316
      %v2318 = vpop.f32.mrf.mxu0
      %v2319 = vadd.f32 %v2230, %v2318
      %2320 = vmatmul.bf16.gmra.mxu0 %v1884
      %v2321 = vpop.f32.mrf.mxu0
      %v2322 = vadd.f32 %v2233, %v2321
      %v2323 = vpop.f32.mrf.mxu0
      %v2324 = vadd.f32 %v2235, %v2323
      %2325 = vmatmul.bf16.gmra.mxu0 %v1887
      %v2326 = vpop.f32.mrf.mxu0
      %v2327 = vadd.f32 %v2238, %v2326
      %v2328 = vpop.f32.mrf.mxu0
      %v2329 = vadd.f32 %v2240, %v2328
      %2330 = vmatmul.bf16.gmra.mxu0 %v1890
      %v2331 = vpop.f32.mrf.mxu0
      %v2332 = vadd.f32 %v2243, %v2331
      %v2333 = vpop.f32.mrf.mxu0
      %v2334 = vadd.f32 %v2245, %v2333
      %2335 = vmatmul.bf16.gmra.mxu0 %v1893
      %v2336 = vpop.f32.mrf.mxu0
      %v2337 = vadd.f32 %v2248, %v2336
      %v2338 = vpop.f32.mrf.mxu0
      %v2339 = vadd.f32 %v2250, %v2338
      %2340 = vmatmul.bf16.gmra.mxu0 %v1896
      %v2341 = vpop.f32.mrf.mxu0
      %v2342 = vadd.f32 %v2253, %v2341
      %v2343 = vpop.f32.mrf.mxu0
      %v2344 = vadd.f32 %v2255, %v2343
      %2345 = vmatmul.bf16.gmra.mxu0 %v1899
      %v2346 = vpop.f32.mrf.mxu0
      %v2347 = vadd.f32 %v2258, %v2346
      %v2348 = vpop.f32.mrf.mxu0
      %v2349 = vadd.f32 %v2260, %v2348
      %2350 = vmatmul.bf16.gmra.mxu0 %v1902
      %v2351 = vpop.f32.mrf.mxu0
      %v2352 = vadd.f32 %v2263, %v2351
      %v2353 = vpop.f32.mrf.mxu0
      %v2354 = vadd.f32 %v2265, %v2353
      %2355 = vmatmul.bf16.gmra.mxu0 %v1905
      %v2356 = vpop.f32.mrf.mxu0
      %v2357 = vadd.f32 %v2268, %v2356
      %v2358 = vpop.f32.mrf.mxu0
      %v2359 = vadd.f32 %v2270, %v2358
      %2360 = vmatmul.bf16.gmra.mxu0 %v1908
      %v2361 = vpop.f32.mrf.mxu0
      %v2362 = vadd.f32 %v2273, %v2361
      %v2363 = vpop.f32.mrf.mxu0
      %v2364 = vadd.f32 %v2275, %v2363
      %2365 = vmatmul.bf16.gmra.mxu0 %v1911
      %v2366 = vpop.f32.mrf.mxu0
      %v2367 = vadd.f32 %v2278, %v2366
      %v2368 = vpop.f32.mrf.mxu0
      %v2369 = vadd.f32 %v2280, %v2368
      %2370 = vmatmul.bf16.gmra.mxu0 %v1914
      %v2371 = vpop.f32.mrf.mxu0
      %v2372 = vadd.f32 %v2283, %v2371
      %v2373 = vpop.f32.mrf.mxu0
      %v2374 = vadd.f32 %v2285, %v2373
      %2375 = vmatmul.bf16.gmra.mxu0 %v1917
      %v2376 = vpop.f32.mrf.mxu0
      %v2377 = vadd.f32 %v2288, %v2376
      %v2378 = vpop.f32.mrf.mxu0
      %v2379 = vadd.f32 %v2290, %v2378
      %2380 = vmatmul.bf16.gmra.mxu0 %v1920
      %v2381 = vpop.f32.mrf.mxu0
      %v2382 = vadd.f32 %v2293, %v2381
      %v2383 = vpop.f32.mrf.mxu0
      %v2384 = vadd.f32 %v2295, %v2383
      %2385 = vmatmul.bf16.gmra.mxu0 %v1923
      %v2386 = vpop.f32.mrf.mxu0
      %v2387 = vadd.f32 %v2298, %v2386
      %v2388 = vpop.f32.mrf.mxu0
      %v2389 = vadd.f32 %v2300, %v2388
      %2390 = vdwg.mxu0
      %2391 = vmatpush.bf16.msra.mxu0 %v2163
      %2392 = vmatpush.bf16.msra.mxu0 %v2161
      %2393 = vmatpush.bf16.msra.mxu0 %v2159
      %2394 = vmatpush.bf16.msra.mxu0 %v2157
      %2395 = vmatpush.bf16.msra.mxu0 %v2155
      %2396 = vmatpush.bf16.msra.mxu0 %v2153
      %2397 = vmatpush.bf16.msra.mxu0 %v2151
      %2398 = vmatpush.bf16.msra.mxu0 %v2149
      %2399 = vmatmul.bf16.gmra.mxu0 %v1879
      %v2400 = vpop.f32.mrf.mxu0
      %v2401 = vadd.f32 %v2312, %v2400
      %v2402 = vpop.f32.mrf.mxu0
      %v2403 = vadd.f32 %v2314, %v2402
      %2404 = vmatmul.bf16.gmra.mxu0 %v1882
      %v2405 = vpop.f32.mrf.mxu0
      %v2406 = vadd.f32 %v2317, %v2405
      %v2407 = vpop.f32.mrf.mxu0
      %v2408 = vadd.f32 %v2319, %v2407
      %2409 = vmatmul.bf16.gmra.mxu0 %v1885
      %v2410 = vpop.f32.mrf.mxu0
      %v2411 = vadd.f32 %v2322, %v2410
      %v2412 = vpop.f32.mrf.mxu0
      %v2413 = vadd.f32 %v2324, %v2412
      %2414 = vmatmul.bf16.gmra.mxu0 %v1888
      %v2415 = vpop.f32.mrf.mxu0
      %v2416 = vadd.f32 %v2327, %v2415
      %v2417 = vpop.f32.mrf.mxu0
      %v2418 = vadd.f32 %v2329, %v2417
      %2419 = vmatmul.bf16.gmra.mxu0 %v1891
      %v2420 = vpop.f32.mrf.mxu0
      %v2421 = vadd.f32 %v2332, %v2420
      %v2422 = vpop.f32.mrf.mxu0
      %v2423 = vadd.f32 %v2334, %v2422
      %2424 = vmatmul.bf16.gmra.mxu0 %v1894
      %v2425 = vpop.f32.mrf.mxu0
      %v2426 = vadd.f32 %v2337, %v2425
      %v2427 = vpop.f32.mrf.mxu0
      %v2428 = vadd.f32 %v2339, %v2427
      %2429 = vmatmul.bf16.gmra.mxu0 %v1897
      %v2430 = vpop.f32.mrf.mxu0
      %v2431 = vadd.f32 %v2342, %v2430
      %v2432 = vpop.f32.mrf.mxu0
      %v2433 = vadd.f32 %v2344, %v2432
      %2434 = vmatmul.bf16.gmra.mxu0 %v1900
      %v2435 = vpop.f32.mrf.mxu0
      %v2436 = vadd.f32 %v2347, %v2435
      %v2437 = vpop.f32.mrf.mxu0
      %v2438 = vadd.f32 %v2349, %v2437
      %2439 = vmatmul.bf16.gmra.mxu0 %v1903
      %v2440 = vpop.f32.mrf.mxu0
      %v2441 = vadd.f32 %v2352, %v2440
      %v2442 = vpop.f32.mrf.mxu0
      %v2443 = vadd.f32 %v2354, %v2442
      %2444 = vmatmul.bf16.gmra.mxu0 %v1906
      %v2445 = vpop.f32.mrf.mxu0
      %v2446 = vadd.f32 %v2357, %v2445
      %v2447 = vpop.f32.mrf.mxu0
      %v2448 = vadd.f32 %v2359, %v2447
      %2449 = vmatmul.bf16.gmra.mxu0 %v1909
      %v2450 = vpop.f32.mrf.mxu0
      %v2451 = vadd.f32 %v2362, %v2450
      %v2452 = vpop.f32.mrf.mxu0
      %v2453 = vadd.f32 %v2364, %v2452
      %2454 = vmatmul.bf16.gmra.mxu0 %v1912
      %v2455 = vpop.f32.mrf.mxu0
      %v2456 = vadd.f32 %v2367, %v2455
      %v2457 = vpop.f32.mrf.mxu0
      %v2458 = vadd.f32 %v2369, %v2457
      %2459 = vmatmul.bf16.gmra.mxu0 %v1915
      %v2460 = vpop.f32.mrf.mxu0
      %v2461 = vadd.f32 %v2372, %v2460
      %v2462 = vpop.f32.mrf.mxu0
      %v2463 = vadd.f32 %v2374, %v2462
      %2464 = vmatmul.bf16.gmra.mxu0 %v1918
      %v2465 = vpop.f32.mrf.mxu0
      %v2466 = vadd.f32 %v2377, %v2465
      %v2467 = vpop.f32.mrf.mxu0
      %v2468 = vadd.f32 %v2379, %v2467
      %2469 = vmatmul.bf16.gmra.mxu0 %v1921
      %v2470 = vpop.f32.mrf.mxu0
      %v2471 = vadd.f32 %v2382, %v2470
      %v2472 = vpop.f32.mrf.mxu0
      %v2473 = vadd.f32 %v2384, %v2472
      %2474 = vmatmul.bf16.gmra.mxu0 %v1924
      %v2475 = vpop.f32.mrf.mxu0
      %v2476 = vadd.f32 %v2387, %v2475
      %v2477 = vpop.f32.mrf.mxu0
      %v2478 = vadd.f32 %v2389, %v2477
      %2479 = vdwg.mxu0
      %2480 = vmatpush.bf16.msra.mxu0 %v2132
      %2481 = vmatpush.bf16.msra.mxu0 %v2130
      %2482 = vmatpush.bf16.msra.mxu0 %v2128
      %2483 = vmatpush.bf16.msra.mxu0 %v2126
      %2484 = vmatpush.bf16.msra.mxu0 %v2124
      %2485 = vmatpush.bf16.msra.mxu0 %v2122
      %2486 = vmatpush.bf16.msra.mxu0 %v2120
      %2487 = vmatpush.bf16.msra.mxu0 %v2118
      %2488 = vmatmul.bf16.gmra.mxu0 %v1877
      %v2489 = vpop.f32.mrf.mxu0
      %v2490 = vadd.f32 0.0, %v2489
      %v2491 = vpop.f32.mrf.mxu0
      %v2492 = vadd.f32 0.0, %v2491
      %2493 = vmatmul.bf16.gmra.mxu0 %v1880
      %v2494 = vpop.f32.mrf.mxu0
      %v2495 = vadd.f32 0.0, %v2494
      %v2496 = vpop.f32.mrf.mxu0
      %v2497 = vadd.f32 0.0, %v2496
      %2498 = vmatmul.bf16.gmra.mxu0 %v1883
      %v2499 = vpop.f32.mrf.mxu0
      %v2500 = vadd.f32 0.0, %v2499
      %v2501 = vpop.f32.mrf.mxu0
      %v2502 = vadd.f32 0.0, %v2501
      %2503 = vmatmul.bf16.gmra.mxu0 %v1886
      %v2504 = vpop.f32.mrf.mxu0
      %v2505 = vadd.f32 0.0, %v2504
      %v2506 = vpop.f32.mrf.mxu0
      %v2507 = vadd.f32 0.0, %v2506
      %2508 = vmatmul.bf16.gmra.mxu0 %v1889
      %v2509 = vpop.f32.mrf.mxu0
      %v2510 = vadd.f32 0.0, %v2509
      %v2511 = vpop.f32.mrf.mxu0
      %v2512 = vadd.f32 0.0, %v2511
      %2513 = vmatmul.bf16.gmra.mxu0 %v1892
      %v2514 = vpop.f32.mrf.mxu0
      %v2515 = vadd.f32 0.0, %v2514
      %v2516 = vpop.f32.mrf.mxu0
      %v2517 = vadd.f32 0.0, %v2516
      %2518 = vmatmul.bf16.gmra.mxu0 %v1895
      %v2519 = vpop.f32.mrf.mxu0
      %v2520 = vadd.f32 0.0, %v2519
      %v2521 = vpop.f32.mrf.mxu0
      %v2522 = vadd.f32 0.0, %v2521
      %2523 = vmatmul.bf16.gmra.mxu0 %v1898
      %v2524 = vpop.f32.mrf.mxu0
      %v2525 = vadd.f32 0.0, %v2524
      %v2526 = vpop.f32.mrf.mxu0
      %v2527 = vadd.f32 0.0, %v2526
      %2528 = vmatmul.bf16.gmra.mxu0 %v1901
      %v2529 = vpop.f32.mrf.mxu0
      %v2530 = vadd.f32 0.0, %v2529
      %v2531 = vpop.f32.mrf.mxu0
      %v2532 = vadd.f32 0.0, %v2531
      %2533 = vmatmul.bf16.gmra.mxu0 %v1904
      %v2534 = vpop.f32.mrf.mxu0
      %v2535 = vadd.f32 0.0, %v2534
      %v2536 = vpop.f32.mrf.mxu0
      %v2537 = vadd.f32 0.0, %v2536
      %2538 = vmatmul.bf16.gmra.mxu0 %v1907
      %v2539 = vpop.f32.mrf.mxu0
      %v2540 = vadd.f32 0.0, %v2539
      %v2541 = vpop.f32.mrf.mxu0
      %v2542 = vadd.f32 0.0, %v2541
      %2543 = vmatmul.bf16.gmra.mxu0 %v1910
      %v2544 = vpop.f32.mrf.mxu0
      %v2545 = vadd.f32 0.0, %v2544
      %v2546 = vpop.f32.mrf.mxu0
      %v2547 = vadd.f32 0.0, %v2546
      %2548 = vmatmul.bf16.gmra.mxu0 %v1913
      %v2549 = vpop.f32.mrf.mxu0
      %v2550 = vadd.f32 0.0, %v2549
      %v2551 = vpop.f32.mrf.mxu0
      %v2552 = vadd.f32 0.0, %v2551
      %2553 = vmatmul.bf16.gmra.mxu0 %v1916
      %v2554 = vpop.f32.mrf.mxu0
      %v2555 = vadd.f32 0.0, %v2554
      %v2556 = vpop.f32.mrf.mxu0
      %v2557 = vadd.f32 0.0, %v2556
      %2558 = vmatmul.bf16.gmra.mxu0 %v1919
      %v2559 = vpop.f32.mrf.mxu0
      %v2560 = vadd.f32 0.0, %v2559
      %v2561 = vpop.f32.mrf.mxu0
      %v2562 = vadd.f32 0.0, %v2561
      %2563 = vmatmul.bf16.gmra.mxu0 %v1922
      %v2564 = vpop.f32.mrf.mxu0
      %v2565 = vadd.f32 0.0, %v2564
      %v2566 = vpop.f32.mrf.mxu0
      %v2567 = vadd.f32 0.0, %v2566
      %2568 = vdwg.mxu0
      %2569 = vmatpush.bf16.msra.mxu0 %v2148
      %2570 = vmatpush.bf16.msra.mxu0 %v2146
      %2571 = vmatpush.bf16.msra.mxu0 %v2144
      %2572 = vmatpush.bf16.msra.mxu0 %v2142
      %2573 = vmatpush.bf16.msra.mxu0 %v2140
      %2574 = vmatpush.bf16.msra.mxu0 %v2138
      %2575 = vmatpush.bf16.msra.mxu0 %v2136
      %2576 = vmatpush.bf16.msra.mxu0 %v2134
      %2577 = vmatmul.bf16.gmra.mxu0 %v1878
      %v2578 = vpop.f32.mrf.mxu0
      %v2579 = vadd.f32 %v2490, %v2578
      %v2580 = vpop.f32.mrf.mxu0
      %v2581 = vadd.f32 %v2492, %v2580
      %2582 = vmatmul.bf16.gmra.mxu0 %v1881
      %v2583 = vpop.f32.mrf.mxu0
      %v2584 = vadd.f32 %v2495, %v2583
      %v2585 = vpop.f32.mrf.mxu0
      %v2586 = vadd.f32 %v2497, %v2585
      %2587 = vmatmul.bf16.gmra.mxu0 %v1884
      %v2588 = vpop.f32.mrf.mxu0
      %v2589 = vadd.f32 %v2500, %v2588
      %v2590 = vpop.f32.mrf.mxu0
      %v2591 = vadd.f32 %v2502, %v2590
      %2592 = vmatmul.bf16.gmra.mxu0 %v1887
      %v2593 = vpop.f32.mrf.mxu0
      %v2594 = vadd.f32 %v2505, %v2593
      %v2595 = vpop.f32.mrf.mxu0
      %v2596 = vadd.f32 %v2507, %v2595
      %2597 = vmatmul.bf16.gmra.mxu0 %v1890
      %v2598 = vpop.f32.mrf.mxu0
      %v2599 = vadd.f32 %v2510, %v2598
      %v2600 = vpop.f32.mrf.mxu0
      %v2601 = vadd.f32 %v2512, %v2600
      %2602 = vmatmul.bf16.gmra.mxu0 %v1893
      %v2603 = vpop.f32.mrf.mxu0
      %v2604 = vadd.f32 %v2515, %v2603
      %v2605 = vpop.f32.mrf.mxu0
      %v2606 = vadd.f32 %v2517, %v2605
      %2607 = vmatmul.bf16.gmra.mxu0 %v1896
      %v2608 = vpop.f32.mrf.mxu0
      %v2609 = vadd.f32 %v2520, %v2608
      %v2610 = vpop.f32.mrf.mxu0
      %v2611 = vadd.f32 %v2522, %v2610
      %2612 = vmatmul.bf16.gmra.mxu0 %v1899
      %v2613 = vpop.f32.mrf.mxu0
      %v2614 = vadd.f32 %v2525, %v2613
      %v2615 = vpop.f32.mrf.mxu0
      %v2616 = vadd.f32 %v2527, %v2615
      %2617 = vmatmul.bf16.gmra.mxu0 %v1902
      %v2618 = vpop.f32.mrf.mxu0
      %v2619 = vadd.f32 %v2530, %v2618
      %v2620 = vpop.f32.mrf.mxu0
      %v2621 = vadd.f32 %v2532, %v2620
      %2622 = vmatmul.bf16.gmra.mxu0 %v1905
      %v2623 = vpop.f32.mrf.mxu0
      %v2624 = vadd.f32 %v2535, %v2623
      %v2625 = vpop.f32.mrf.mxu0
      %v2626 = vadd.f32 %v2537, %v2625
      %2627 = vmatmul.bf16.gmra.mxu0 %v1908
      %v2628 = vpop.f32.mrf.mxu0
      %v2629 = vadd.f32 %v2540, %v2628
      %v2630 = vpop.f32.mrf.mxu0
      %v2631 = vadd.f32 %v2542, %v2630
      %2632 = vmatmul.bf16.gmra.mxu0 %v1911
      %v2633 = vpop.f32.mrf.mxu0
      %v2634 = vadd.f32 %v2545, %v2633
      %v2635 = vpop.f32.mrf.mxu0
      %v2636 = vadd.f32 %v2547, %v2635
      %2637 = vmatmul.bf16.gmra.mxu0 %v1914
      %v2638 = vpop.f32.mrf.mxu0
      %v2639 = vadd.f32 %v2550, %v2638
      %v2640 = vpop.f32.mrf.mxu0
      %v2641 = vadd.f32 %v2552, %v2640
      %2642 = vmatmul.bf16.gmra.mxu0 %v1917
      %v2643 = vpop.f32.mrf.mxu0
      %v2644 = vadd.f32 %v2555, %v2643
      %v2645 = vpop.f32.mrf.mxu0
      %v2646 = vadd.f32 %v2557, %v2645
      %2647 = vmatmul.bf16.gmra.mxu0 %v1920
      %v2648 = vpop.f32.mrf.mxu0
      %v2649 = vadd.f32 %v2560, %v2648
      %v2650 = vpop.f32.mrf.mxu0
      %v2651 = vadd.f32 %v2562, %v2650
      %2652 = vmatmul.bf16.gmra.mxu0 %v1923
      %v2653 = vpop.f32.mrf.mxu0
      %v2654 = vadd.f32 %v2565, %v2653
      %v2655 = vpop.f32.mrf.mxu0
      %v2656 = vadd.f32 %v2567, %v2655
      %2657 = vdwg.mxu0
      %2658 = vmatpush.bf16.msra.mxu0 %v2164
      %2659 = vmatpush.bf16.msra.mxu0 %v2162
      %2660 = vmatpush.bf16.msra.mxu0 %v2160
      %2661 = vmatpush.bf16.msra.mxu0 %v2158
      %2662 = vmatpush.bf16.msra.mxu0 %v2156
      %2663 = vmatpush.bf16.msra.mxu0 %v2154
      %2664 = vmatpush.bf16.msra.mxu0 %v2152
      %2665 = vmatpush.bf16.msra.mxu0 %v2150
      %2666 = vmatmul.bf16.gmra.mxu0 %v1879
      %v2667 = vpop.f32.mrf.mxu0
      %v2668 = vadd.f32 %v2579, %v2667
      %v2669 = vpop.f32.mrf.mxu0
      %v2670 = vadd.f32 %v2581, %v2669
      %2671 = vmatmul.bf16.gmra.mxu0 %v1882
      %v2672 = vpop.f32.mrf.mxu0
      %v2673 = vadd.f32 %v2584, %v2672
      %v2674 = vpop.f32.mrf.mxu0
      %v2675 = vadd.f32 %v2586, %v2674
      %2676 = vmatmul.bf16.gmra.mxu0 %v1885
      %v2677 = vpop.f32.mrf.mxu0
      %v2678 = vadd.f32 %v2589, %v2677
      %v2679 = vpop.f32.mrf.mxu0
      %v2680 = vadd.f32 %v2591, %v2679
      %2681 = vmatmul.bf16.gmra.mxu0 %v1888
      %v2682 = vpop.f32.mrf.mxu0
      %v2683 = vadd.f32 %v2594, %v2682
      %v2684 = vpop.f32.mrf.mxu0
      %v2685 = vadd.f32 %v2596, %v2684
      %2686 = vmatmul.bf16.gmra.mxu0 %v1891
      %v2687 = vpop.f32.mrf.mxu0
      %v2688 = vadd.f32 %v2599, %v2687
      %v2689 = vpop.f32.mrf.mxu0
      %v2690 = vadd.f32 %v2601, %v2689
      %2691 = vmatmul.bf16.gmra.mxu0 %v1894
      %v2692 = vpop.f32.mrf.mxu0
      %v2693 = vadd.f32 %v2604, %v2692
      %v2694 = vpop.f32.mrf.mxu0
      %v2695 = vadd.f32 %v2606, %v2694
      %2696 = vmatmul.bf16.gmra.mxu0 %v1897
      %v2697 = vpop.f32.mrf.mxu0
      %v2698 = vadd.f32 %v2609, %v2697
      %v2699 = vpop.f32.mrf.mxu0
      %v2700 = vadd.f32 %v2611, %v2699
      %2701 = vmatmul.bf16.gmra.mxu0 %v1900
      %v2702 = vpop.f32.mrf.mxu0
      %v2703 = vadd.f32 %v2614, %v2702
      %v2704 = vpop.f32.mrf.mxu0
      %v2705 = vadd.f32 %v2616, %v2704
      %2706 = vmatmul.bf16.gmra.mxu0 %v1903
      %v2707 = vpop.f32.mrf.mxu0
      %v2708 = vadd.f32 %v2619, %v2707
      %v2709 = vpop.f32.mrf.mxu0
      %v2710 = vadd.f32 %v2621, %v2709
      %2711 = vmatmul.bf16.gmra.mxu0 %v1906
      %v2712 = vpop.f32.mrf.mxu0
      %v2713 = vadd.f32 %v2624, %v2712
      %v2714 = vpop.f32.mrf.mxu0
      %v2715 = vadd.f32 %v2626, %v2714
      %2716 = vmatmul.bf16.gmra.mxu0 %v1909
      %v2717 = vpop.f32.mrf.mxu0
      %v2718 = vadd.f32 %v2629, %v2717
      %v2719 = vpop.f32.mrf.mxu0
      %v2720 = vadd.f32 %v2631, %v2719
      %2721 = vmatmul.bf16.gmra.mxu0 %v1912
      %v2722 = vpop.f32.mrf.mxu0
      %v2723 = vadd.f32 %v2634, %v2722
      %v2724 = vpop.f32.mrf.mxu0
      %v2725 = vadd.f32 %v2636, %v2724
      %2726 = vmatmul.bf16.gmra.mxu0 %v1915
      %v2727 = vpop.f32.mrf.mxu0
      %v2728 = vadd.f32 %v2639, %v2727
      %v2729 = vpop.f32.mrf.mxu0
      %v2730 = vadd.f32 %v2641, %v2729
      %2731 = vmatmul.bf16.gmra.mxu0 %v1918
      %v2732 = vpop.f32.mrf.mxu0
      %v2733 = vadd.f32 %v2644, %v2732
      %v2734 = vpop.f32.mrf.mxu0
      %v2735 = vadd.f32 %v2646, %v2734
      %2736 = vmatmul.bf16.gmra.mxu0 %v1921
      %v2737 = vpop.f32.mrf.mxu0
      %v2738 = vadd.f32 %v2649, %v2737
      %v2739 = vpop.f32.mrf.mxu0
      %v2740 = vadd.f32 %v2651, %v2739
      %2741 = vmatmul.bf16.gmra.mxu0 %v1924
      %v2742 = vpop.f32.mrf.mxu0
      %v2743 = vadd.f32 %v2654, %v2742
      %v2744 = vpop.f32.mrf.mxu0
      %v2745 = vadd.f32 %v2656, %v2744
      %2746 = vdwg.mxu0
      %v2811 = vunpack.c.l.b16 %v1491
      %v2812 = vunpack.c.h.b16 %v1491
      %v2813 = vunpack.c.l.b16 %v1492
      %v2814 = vunpack.c.l.b16 %v1493
      %v2815 = vunpack.c.h.b16 %v1493
      %v2816 = vunpack.c.l.b16 %v1494
      %v2817 = vunpack.c.l.b16 %v1495
      %v2818 = vunpack.c.h.b16 %v1495
      %v2819 = vunpack.c.l.b16 %v1496
      %v2820 = vunpack.c.l.b16 %v1497
      %v2821 = vunpack.c.h.b16 %v1497
      %v2822 = vunpack.c.l.b16 %v1498
      %v2823 = vunpack.c.l.b16 %v1499
      %v2824 = vunpack.c.h.b16 %v1499
      %v2825 = vunpack.c.l.b16 %v1500
      %v2826 = vunpack.c.l.b16 %v1501
      %v2827 = vunpack.c.h.b16 %v1501
      %v2828 = vunpack.c.l.b16 %v1502
      %v2829 = vunpack.c.l.b16 %v1503
      %v2830 = vunpack.c.h.b16 %v1503
      %v2831 = vunpack.c.l.b16 %v1504
      %v2832 = vunpack.c.l.b16 %v1505
      %v2833 = vunpack.c.h.b16 %v1505
      %v2834 = vunpack.c.l.b16 %v1506
      %v2835 = vunpack.c.l.b16 %v1507
      %v2836 = vunpack.c.h.b16 %v1507
      %v2837 = vunpack.c.l.b16 %v1508
      %v2838 = vunpack.c.l.b16 %v1509
      %v2839 = vunpack.c.h.b16 %v1509
      %v2840 = vunpack.c.l.b16 %v1510
      %v2841 = vunpack.c.l.b16 %v1511
      %v2842 = vunpack.c.h.b16 %v1511
      %v2843 = vunpack.c.l.b16 %v1512
      %v2844 = vunpack.c.l.b16 %v1513
      %v2845 = vunpack.c.h.b16 %v1513
      %v2846 = vunpack.c.l.b16 %v1514
      %v2847 = vunpack.c.l.b16 %v1515
      %v2848 = vunpack.c.h.b16 %v1515
      %v2849 = vunpack.c.l.b16 %v1516
      %v2850 = vunpack.c.l.b16 %v1517
      %v2851 = vunpack.c.h.b16 %v1517
      %v2852 = vunpack.c.l.b16 %v1518
      %v2853 = vunpack.c.l.b16 %v1519
      %v2854 = vunpack.c.h.b16 %v1519
      %v2855 = vunpack.c.l.b16 %v1520
      %v2856 = vunpack.c.l.b16 %v1521
      %v2857 = vunpack.c.h.b16 %v1521
      %v2858 = vunpack.c.l.b16 %v1522
      %v2859 = vunpack.c.l.b16 %v1523
      %v2860 = vunpack.c.h.b16 %v1523
      %v2861 = vunpack.c.l.b16 %v1524
      %v2862 = vunpack.c.l.b16 %v1525
      %v2863 = vunpack.c.h.b16 %v1525
      %v2864 = vunpack.c.l.b16 %v1526
      %v2865 = vunpack.c.l.b16 %v1527
      %v2866 = vunpack.c.h.b16 %v1527
      %v2867 = vunpack.c.l.b16 %v1528
      %v2868 = vunpack.c.l.b16 %v1529
      %v2869 = vunpack.c.h.b16 %v1529
      %v2870 = vunpack.c.l.b16 %v1530
      %v2871 = vunpack.c.l.b16 %v1531
      %v2872 = vunpack.c.h.b16 %v1531
      %v2873 = vunpack.c.l.b16 %v1532
      %v2874 = vunpack.c.l.b16 %v1533
      %v2875 = vunpack.c.h.b16 %v1533
      %v2876 = vunpack.c.l.b16 %v1534
      %v2877 = vunpack.c.l.b16 %v1535
      %v2878 = vunpack.c.h.b16 %v1535
      %v2879 = vunpack.c.l.b16 %v1536
      %v2880 = vunpack.c.l.b16 %v1537
      %v2881 = vunpack.c.h.b16 %v1537
      %v2882 = vunpack.c.l.b16 %v1538
      %v2883 = vunpack.c.l.b16 %v1539
      %v2884 = vunpack.c.h.b16 %v1539
      %v2885 = vunpack.c.l.b16 %v1540
      %v2886 = vunpack.c.l.b16 %v1541
      %v2887 = vunpack.c.h.b16 %v1541
      %v2888 = vunpack.c.l.b16 %v1542
      %v2889 = vunpack.c.l.b16 %v1543
      %v2890 = vunpack.c.h.b16 %v1543
      %v2891 = vunpack.c.l.b16 %v1544
      %v2892 = vunpack.c.l.b16 %v1545
      %v2893 = vunpack.c.h.b16 %v1545
      %v2894 = vunpack.c.l.b16 %v1546
      %v2895 = vunpack.c.l.b16 %v1547
      %v2896 = vunpack.c.h.b16 %v1547
      %v2897 = vunpack.c.l.b16 %v1548
      %v2898 = vunpack.c.l.b16 %v1549
      %v2899 = vunpack.c.h.b16 %v1549
      %v2900 = vunpack.c.l.b16 %v1550
      %v2901 = vunpack.c.l.b16 %v1551
      %v2902 = vunpack.c.h.b16 %v1551
      %v2903 = vunpack.c.l.b16 %v1552
      %v2904 = vunpack.c.l.b16 %v1553
      %v2905 = vunpack.c.h.b16 %v1553
      %v2906 = vunpack.c.l.b16 %v1554
      %v2907 = vpack.c.b16 %v2814, %v2811
      %v2908 = vpack.c.b16 %v2815, %v2812
      %v2909 = vpack.c.b16 %v2816, %v2813
      %v2910 = vpack.c.b16 %v2820, %v2817
      %v2911 = vpack.c.b16 %v2821, %v2818
      %v2912 = vpack.c.b16 %v2822, %v2819
      %v2913 = vpack.c.b16 %v2826, %v2823
      %v2914 = vpack.c.b16 %v2827, %v2824
      %v2915 = vpack.c.b16 %v2828, %v2825
      %v2916 = vpack.c.b16 %v2832, %v2829
      %v2917 = vpack.c.b16 %v2833, %v2830
      %v2918 = vpack.c.b16 %v2834, %v2831
      %v2919 = vpack.c.b16 %v2838, %v2835
      %v2920 = vpack.c.b16 %v2839, %v2836
      %v2921 = vpack.c.b16 %v2840, %v2837
      %v2922 = vpack.c.b16 %v2844, %v2841
      %v2923 = vpack.c.b16 %v2845, %v2842
      %v2924 = vpack.c.b16 %v2846, %v2843
      %v2925 = vpack.c.b16 %v2850, %v2847
      %v2926 = vpack.c.b16 %v2851, %v2848
      %v2927 = vpack.c.b16 %v2852, %v2849
      %v2928 = vpack.c.b16 %v2856, %v2853
      %v2929 = vpack.c.b16 %v2857, %v2854
      %v2930 = vpack.c.b16 %v2858, %v2855
      %v2931 = vpack.c.b16 %v2862, %v2859
      %v2932 = vpack.c.b16 %v2863, %v2860
      %v2933 = vpack.c.b16 %v2864, %v2861
      %v2934 = vpack.c.b16 %v2868, %v2865
      %v2935 = vpack.c.b16 %v2869, %v2866
      %v2936 = vpack.c.b16 %v2870, %v2867
      %v2937 = vpack.c.b16 %v2874, %v2871
      %v2938 = vpack.c.b16 %v2875, %v2872
      %v2939 = vpack.c.b16 %v2876, %v2873
      %v2940 = vpack.c.b16 %v2880, %v2877
      %v2941 = vpack.c.b16 %v2881, %v2878
      %v2942 = vpack.c.b16 %v2882, %v2879
      %v2943 = vpack.c.b16 %v2886, %v2883
      %v2944 = vpack.c.b16 %v2887, %v2884
      %v2945 = vpack.c.b16 %v2888, %v2885
      %v2946 = vpack.c.b16 %v2892, %v2889
      %v2947 = vpack.c.b16 %v2893, %v2890
      %v2948 = vpack.c.b16 %v2894, %v2891
      %v2949 = vpack.c.b16 %v2898, %v2895
      %v2950 = vpack.c.b16 %v2899, %v2896
      %v2951 = vpack.c.b16 %v2900, %v2897
      %v2952 = vpack.c.b16 %v2904, %v2901
      %v2953 = vpack.c.b16 %v2905, %v2902
      %v2954 = vpack.c.b16 %v2906, %v2903
      %v3051 = vunpack.c.l.b16 %v1555
      %v3052 = vunpack.c.h.b16 %v1555
      %v3053 = vunpack.c.l.b16 %v1556
      %v3054 = vunpack.c.h.b16 %v1556
      %v3055 = vunpack.c.l.b16 %v1557
      %v3056 = vunpack.c.h.b16 %v1557
      %v3057 = vunpack.c.l.b16 %v1558
      %v3058 = vunpack.c.h.b16 %v1558
      %v3059 = vunpack.c.l.b16 %v1559
      %v3060 = vunpack.c.h.b16 %v1559
      %v3061 = vunpack.c.l.b16 %v1560
      %v3062 = vunpack.c.h.b16 %v1560
      %v3063 = vunpack.c.l.b16 %v1561
      %v3064 = vunpack.c.h.b16 %v1561
      %v3065 = vunpack.c.l.b16 %v1562
      %v3066 = vunpack.c.h.b16 %v1562
      %v3067 = vunpack.c.l.b16 %v1563
      %v3068 = vunpack.c.h.b16 %v1563
      %v3069 = vunpack.c.l.b16 %v1564
      %v3070 = vunpack.c.h.b16 %v1564
      %v3071 = vunpack.c.l.b16 %v1565
      %v3072 = vunpack.c.h.b16 %v1565
      %v3073 = vunpack.c.l.b16 %v1566
      %v3074 = vunpack.c.h.b16 %v1566
      %v3075 = vunpack.c.l.b16 %v1567
      %v3076 = vunpack.c.h.b16 %v1567
      %v3077 = vunpack.c.l.b16 %v1568
      %v3078 = vunpack.c.h.b16 %v1568
      %v3079 = vunpack.c.l.b16 %v1569
      %v3080 = vunpack.c.h.b16 %v1569
      %v3081 = vunpack.c.l.b16 %v1570
      %v3082 = vunpack.c.h.b16 %v1570
      %v3083 = vunpack.c.l.b16 %v1571
      %v3084 = vunpack.c.h.b16 %v1571
      %v3085 = vunpack.c.l.b16 %v1572
      %v3086 = vunpack.c.h.b16 %v1572
      %v3087 = vunpack.c.l.b16 %v1573
      %v3088 = vunpack.c.h.b16 %v1573
      %v3089 = vunpack.c.l.b16 %v1574
      %v3090 = vunpack.c.h.b16 %v1574
      %v3091 = vunpack.c.l.b16 %v1575
      %v3092 = vunpack.c.h.b16 %v1575
      %v3093 = vunpack.c.l.b16 %v1576
      %v3094 = vunpack.c.h.b16 %v1576
      %v3095 = vunpack.c.l.b16 %v1577
      %v3096 = vunpack.c.h.b16 %v1577
      %v3097 = vunpack.c.l.b16 %v1578
      %v3098 = vunpack.c.h.b16 %v1578
      %v3099 = vunpack.c.l.b16 %v1579
      %v3100 = vunpack.c.h.b16 %v1579
      %v3101 = vunpack.c.l.b16 %v1580
      %v3102 = vunpack.c.h.b16 %v1580
      %v3103 = vunpack.c.l.b16 %v1581
      %v3104 = vunpack.c.h.b16 %v1581
      %v3105 = vunpack.c.l.b16 %v1582
      %v3106 = vunpack.c.h.b16 %v1582
      %v3107 = vunpack.c.l.b16 %v1583
      %v3108 = vunpack.c.h.b16 %v1583
      %v3109 = vunpack.c.l.b16 %v1584
      %v3110 = vunpack.c.h.b16 %v1584
      %v3111 = vunpack.c.l.b16 %v1585
      %v3112 = vunpack.c.h.b16 %v1585
      %v3113 = vunpack.c.l.b16 %v1586
      %v3114 = vunpack.c.h.b16 %v1586
      %v3115 = vunpack.c.l.b16 %v1587
      %v3116 = vunpack.c.h.b16 %v1587
      %v3117 = vunpack.c.l.b16 %v1588
      %v3118 = vunpack.c.h.b16 %v1588
      %v3119 = vunpack.c.l.b16 %v1589
      %v3120 = vunpack.c.h.b16 %v1589
      %v3121 = vunpack.c.l.b16 %v1590
      %v3122 = vunpack.c.h.b16 %v1590
      %v3123 = vunpack.c.l.b16 %v1591
      %v3124 = vunpack.c.h.b16 %v1591
      %v3125 = vunpack.c.l.b16 %v1592
      %v3126 = vunpack.c.h.b16 %v1592
      %v3127 = vunpack.c.l.b16 %v1593
      %v3128 = vunpack.c.h.b16 %v1593
      %v3129 = vunpack.c.l.b16 %v1594
      %v3130 = vunpack.c.h.b16 %v1594
      %v3131 = vunpack.c.l.b16 %v1595
      %v3132 = vunpack.c.h.b16 %v1595
      %v3133 = vunpack.c.l.b16 %v1596
      %v3134 = vunpack.c.h.b16 %v1596
      %v3135 = vunpack.c.l.b16 %v1597
      %v3136 = vunpack.c.h.b16 %v1597
      %v3137 = vunpack.c.l.b16 %v1598
      %v3138 = vunpack.c.h.b16 %v1598
      %v3139 = vunpack.c.l.b16 %v1599
      %v3140 = vunpack.c.h.b16 %v1599
      %v3141 = vunpack.c.l.b16 %v1600
      %v3142 = vunpack.c.h.b16 %v1600
      %v3143 = vunpack.c.l.b16 %v1601
      %v3144 = vunpack.c.h.b16 %v1601
      %v3145 = vunpack.c.l.b16 %v1602
      %v3146 = vunpack.c.h.b16 %v1602
      %v3147 = vpack.c.b16 %v3053, %v3051
      %v3148 = vpack.c.b16 %v3054, %v3052
      %v3149 = vpack.c.b16 %v3057, %v3055
      %v3150 = vpack.c.b16 %v3058, %v3056
      %v3151 = vpack.c.b16 %v3061, %v3059
      %v3152 = vpack.c.b16 %v3062, %v3060
      %v3153 = vpack.c.b16 %v3065, %v3063
      %v3154 = vpack.c.b16 %v3066, %v3064
      %v3155 = vpack.c.b16 %v3069, %v3067
      %v3156 = vpack.c.b16 %v3070, %v3068
      %v3157 = vpack.c.b16 %v3073, %v3071
      %v3158 = vpack.c.b16 %v3074, %v3072
      %v3159 = vpack.c.b16 %v3077, %v3075
      %v3160 = vpack.c.b16 %v3078, %v3076
      %v3161 = vpack.c.b16 %v3081, %v3079
      %v3162 = vpack.c.b16 %v3082, %v3080
      %v3163 = vpack.c.b16 %v3085, %v3083
      %v3164 = vpack.c.b16 %v3086, %v3084
      %v3165 = vpack.c.b16 %v3089, %v3087
      %v3166 = vpack.c.b16 %v3090, %v3088
      %v3167 = vpack.c.b16 %v3093, %v3091
      %v3168 = vpack.c.b16 %v3094, %v3092
      %v3169 = vpack.c.b16 %v3097, %v3095
      %v3170 = vpack.c.b16 %v3098, %v3096
      %v3171 = vpack.c.b16 %v3101, %v3099
      %v3172 = vpack.c.b16 %v3102, %v3100
      %v3173 = vpack.c.b16 %v3105, %v3103
      %v3174 = vpack.c.b16 %v3106, %v3104
      %v3175 = vpack.c.b16 %v3109, %v3107
      %v3176 = vpack.c.b16 %v3110, %v3108
      %v3177 = vpack.c.b16 %v3113, %v3111
      %v3178 = vpack.c.b16 %v3114, %v3112
      %v3179 = vpack.c.b16 %v3117, %v3115
      %v3180 = vpack.c.b16 %v3118, %v3116
      %v3181 = vpack.c.b16 %v3121, %v3119
      %v3182 = vpack.c.b16 %v3122, %v3120
      %v3183 = vpack.c.b16 %v3125, %v3123
      %v3184 = vpack.c.b16 %v3126, %v3124
      %v3185 = vpack.c.b16 %v3129, %v3127
      %v3186 = vpack.c.b16 %v3130, %v3128
      %v3187 = vpack.c.b16 %v3133, %v3131
      %v3188 = vpack.c.b16 %v3134, %v3132
      %v3189 = vpack.c.b16 %v3137, %v3135
      %v3190 = vpack.c.b16 %v3138, %v3136
      %v3191 = vpack.c.b16 %v3141, %v3139
      %v3192 = vpack.c.b16 %v3142, %v3140
      %v3193 = vpack.c.b16 %v3145, %v3143
      %v3194 = vpack.c.b16 %v3146, %v3144
      %3243 = vmatpush.bf16.msra.mxu0 %v3161
      %3244 = vmatpush.bf16.msra.mxu0 %v3159
      %3245 = vmatpush.bf16.msra.mxu0 %v3157
      %3246 = vmatpush.bf16.msra.mxu0 %v3155
      %3247 = vmatpush.bf16.msra.mxu0 %v3153
      %3248 = vmatpush.bf16.msra.mxu0 %v3151
      %3249 = vmatpush.bf16.msra.mxu0 %v3149
      %3250 = vmatpush.bf16.msra.mxu0 %v3147
      %3251 = vmatmul.bf16.gmra.mxu0 %v2907
      %v3252 = vpop.f32.mrf.mxu0
      %v3253 = vadd.f32 %v2401, %v3252
      %v3254 = vpop.f32.mrf.mxu0
      %v3255 = vadd.f32 %v2403, %v3254
      %3256 = vmatmul.bf16.gmra.mxu0 %v2910
      %v3257 = vpop.f32.mrf.mxu0
      %v3258 = vadd.f32 %v2406, %v3257
      %v3259 = vpop.f32.mrf.mxu0
      %v3260 = vadd.f32 %v2408, %v3259
      %3261 = vmatmul.bf16.gmra.mxu0 %v2913
      %v3262 = vpop.f32.mrf.mxu0
      %v3263 = vadd.f32 %v2411, %v3262
      %v3264 = vpop.f32.mrf.mxu0
      %v3265 = vadd.f32 %v2413, %v3264
      %3266 = vmatmul.bf16.gmra.mxu0 %v2916
      %v3267 = vpop.f32.mrf.mxu0
      %v3268 = vadd.f32 %v2416, %v3267
      %v3269 = vpop.f32.mrf.mxu0
      %v3270 = vadd.f32 %v2418, %v3269
      %3271 = vmatmul.bf16.gmra.mxu0 %v2919
      %v3272 = vpop.f32.mrf.mxu0
      %v3273 = vadd.f32 %v2421, %v3272
      %v3274 = vpop.f32.mrf.mxu0
      %v3275 = vadd.f32 %v2423, %v3274
      %3276 = vmatmul.bf16.gmra.mxu0 %v2922
      %v3277 = vpop.f32.mrf.mxu0
      %v3278 = vadd.f32 %v2426, %v3277
      %v3279 = vpop.f32.mrf.mxu0
      %v3280 = vadd.f32 %v2428, %v3279
      %3281 = vmatmul.bf16.gmra.mxu0 %v2925
      %v3282 = vpop.f32.mrf.mxu0
      %v3283 = vadd.f32 %v2431, %v3282
      %v3284 = vpop.f32.mrf.mxu0
      %v3285 = vadd.f32 %v2433, %v3284
      %3286 = vmatmul.bf16.gmra.mxu0 %v2928
      %v3287 = vpop.f32.mrf.mxu0
      %v3288 = vadd.f32 %v2436, %v3287
      %v3289 = vpop.f32.mrf.mxu0
      %v3290 = vadd.f32 %v2438, %v3289
      %3291 = vmatmul.bf16.gmra.mxu0 %v2931
      %v3292 = vpop.f32.mrf.mxu0
      %v3293 = vadd.f32 %v2441, %v3292
      %v3294 = vpop.f32.mrf.mxu0
      %v3295 = vadd.f32 %v2443, %v3294
      %3296 = vmatmul.bf16.gmra.mxu0 %v2934
      %v3297 = vpop.f32.mrf.mxu0
      %v3298 = vadd.f32 %v2446, %v3297
      %v3299 = vpop.f32.mrf.mxu0
      %v3300 = vadd.f32 %v2448, %v3299
      %3301 = vmatmul.bf16.gmra.mxu0 %v2937
      %v3302 = vpop.f32.mrf.mxu0
      %v3303 = vadd.f32 %v2451, %v3302
      %v3304 = vpop.f32.mrf.mxu0
      %v3305 = vadd.f32 %v2453, %v3304
      %3306 = vmatmul.bf16.gmra.mxu0 %v2940
      %v3307 = vpop.f32.mrf.mxu0
      %v3308 = vadd.f32 %v2456, %v3307
      %v3309 = vpop.f32.mrf.mxu0
      %v3310 = vadd.f32 %v2458, %v3309
      %3311 = vmatmul.bf16.gmra.mxu0 %v2943
      %v3312 = vpop.f32.mrf.mxu0
      %v3313 = vadd.f32 %v2461, %v3312
      %v3314 = vpop.f32.mrf.mxu0
      %v3315 = vadd.f32 %v2463, %v3314
      %3316 = vmatmul.bf16.gmra.mxu0 %v2946
      %v3317 = vpop.f32.mrf.mxu0
      %v3318 = vadd.f32 %v2466, %v3317
      %v3319 = vpop.f32.mrf.mxu0
      %v3320 = vadd.f32 %v2468, %v3319
      %3321 = vmatmul.bf16.gmra.mxu0 %v2949
      %v3322 = vpop.f32.mrf.mxu0
      %v3323 = vadd.f32 %v2471, %v3322
      %v3324 = vpop.f32.mrf.mxu0
      %v3325 = vadd.f32 %v2473, %v3324
      %3326 = vmatmul.bf16.gmra.mxu0 %v2952
      %v3327 = vpop.f32.mrf.mxu0
      %v3328 = vadd.f32 %v2476, %v3327
      %v3329 = vpop.f32.mrf.mxu0
      %v3330 = vadd.f32 %v2478, %v3329
      %3331 = vdwg.mxu0
      %3332 = vmatpush.bf16.msra.mxu0 %v3177
      %3333 = vmatpush.bf16.msra.mxu0 %v3175
      %3334 = vmatpush.bf16.msra.mxu0 %v3173
      %3335 = vmatpush.bf16.msra.mxu0 %v3171
      %3336 = vmatpush.bf16.msra.mxu0 %v3169
      %3337 = vmatpush.bf16.msra.mxu0 %v3167
      %3338 = vmatpush.bf16.msra.mxu0 %v3165
      %3339 = vmatpush.bf16.msra.mxu0 %v3163
      %3340 = vmatmul.bf16.gmra.mxu0 %v2908
      %v3341 = vpop.f32.mrf.mxu0
      %v3342 = vadd.f32 %v3253, %v3341
      %v3343 = vpop.f32.mrf.mxu0
      %v3344 = vadd.f32 %v3255, %v3343
      %3345 = vmatmul.bf16.gmra.mxu0 %v2911
      %v3346 = vpop.f32.mrf.mxu0
      %v3347 = vadd.f32 %v3258, %v3346
      %v3348 = vpop.f32.mrf.mxu0
      %v3349 = vadd.f32 %v3260, %v3348
      %3350 = vmatmul.bf16.gmra.mxu0 %v2914
      %v3351 = vpop.f32.mrf.mxu0
      %v3352 = vadd.f32 %v3263, %v3351
      %v3353 = vpop.f32.mrf.mxu0
      %v3354 = vadd.f32 %v3265, %v3353
      %3355 = vmatmul.bf16.gmra.mxu0 %v2917
      %v3356 = vpop.f32.mrf.mxu0
      %v3357 = vadd.f32 %v3268, %v3356
      %v3358 = vpop.f32.mrf.mxu0
      %v3359 = vadd.f32 %v3270, %v3358
      %3360 = vmatmul.bf16.gmra.mxu0 %v2920
      %v3361 = vpop.f32.mrf.mxu0
      %v3362 = vadd.f32 %v3273, %v3361
      %v3363 = vpop.f32.mrf.mxu0
      %v3364 = vadd.f32 %v3275, %v3363
      %3365 = vmatmul.bf16.gmra.mxu0 %v2923
      %v3366 = vpop.f32.mrf.mxu0
      %v3367 = vadd.f32 %v3278, %v3366
      %v3368 = vpop.f32.mrf.mxu0
      %v3369 = vadd.f32 %v3280, %v3368
      %3370 = vmatmul.bf16.gmra.mxu0 %v2926
      %v3371 = vpop.f32.mrf.mxu0
      %v3372 = vadd.f32 %v3283, %v3371
      %v3373 = vpop.f32.mrf.mxu0
      %v3374 = vadd.f32 %v3285, %v3373
      %3375 = vmatmul.bf16.gmra.mxu0 %v2929
      %v3376 = vpop.f32.mrf.mxu0
      %v3377 = vadd.f32 %v3288, %v3376
      %v3378 = vpop.f32.mrf.mxu0
      %v3379 = vadd.f32 %v3290, %v3378
      %3380 = vmatmul.bf16.gmra.mxu0 %v2932
      %v3381 = vpop.f32.mrf.mxu0
      %v3382 = vadd.f32 %v3293, %v3381
      %v3383 = vpop.f32.mrf.mxu0
      %v3384 = vadd.f32 %v3295, %v3383
      %3385 = vmatmul.bf16.gmra.mxu0 %v2935
      %v3386 = vpop.f32.mrf.mxu0
      %v3387 = vadd.f32 %v3298, %v3386
      %v3388 = vpop.f32.mrf.mxu0
      %v3389 = vadd.f32 %v3300, %v3388
      %3390 = vmatmul.bf16.gmra.mxu0 %v2938
      %v3391 = vpop.f32.mrf.mxu0
      %v3392 = vadd.f32 %v3303, %v3391
      %v3393 = vpop.f32.mrf.mxu0
      %v3394 = vadd.f32 %v3305, %v3393
      %3395 = vmatmul.bf16.gmra.mxu0 %v2941
      %v3396 = vpop.f32.mrf.mxu0
      %v3397 = vadd.f32 %v3308, %v3396
      %v3398 = vpop.f32.mrf.mxu0
      %v3399 = vadd.f32 %v3310, %v3398
      %3400 = vmatmul.bf16.gmra.mxu0 %v2944
      %v3401 = vpop.f32.mrf.mxu0
      %v3402 = vadd.f32 %v3313, %v3401
      %v3403 = vpop.f32.mrf.mxu0
      %v3404 = vadd.f32 %v3315, %v3403
      %3405 = vmatmul.bf16.gmra.mxu0 %v2947
      %v3406 = vpop.f32.mrf.mxu0
      %v3407 = vadd.f32 %v3318, %v3406
      %v3408 = vpop.f32.mrf.mxu0
      %v3409 = vadd.f32 %v3320, %v3408
      %3410 = vmatmul.bf16.gmra.mxu0 %v2950
      %v3411 = vpop.f32.mrf.mxu0
      %v3412 = vadd.f32 %v3323, %v3411
      %v3413 = vpop.f32.mrf.mxu0
      %v3414 = vadd.f32 %v3325, %v3413
      %3415 = vmatmul.bf16.gmra.mxu0 %v2953
      %v3416 = vpop.f32.mrf.mxu0
      %v3417 = vadd.f32 %v3328, %v3416
      %v3418 = vpop.f32.mrf.mxu0
      %v3419 = vadd.f32 %v3330, %v3418
      %3420 = vdwg.mxu0
      %3421 = vmatpush.bf16.msra.mxu0 %v3193
      %3422 = vmatpush.bf16.msra.mxu0 %v3191
      %3423 = vmatpush.bf16.msra.mxu0 %v3189
      %3424 = vmatpush.bf16.msra.mxu0 %v3187
      %3425 = vmatpush.bf16.msra.mxu0 %v3185
      %3426 = vmatpush.bf16.msra.mxu0 %v3183
      %3427 = vmatpush.bf16.msra.mxu0 %v3181
      %3428 = vmatpush.bf16.msra.mxu0 %v3179
      %3429 = vmatmul.bf16.gmra.mxu0 %v2909
      %v3430 = vpop.f32.mrf.mxu0
      %v3431 = vadd.f32 %v3342, %v3430
      %v3432 = vpop.f32.mrf.mxu0
      %v3433 = vadd.f32 %v3344, %v3432
      %3434 = vmatmul.bf16.gmra.mxu0 %v2912
      %v3435 = vpop.f32.mrf.mxu0
      %v3436 = vadd.f32 %v3347, %v3435
      %v3437 = vpop.f32.mrf.mxu0
      %v3438 = vadd.f32 %v3349, %v3437
      %3439 = vmatmul.bf16.gmra.mxu0 %v2915
      %v3440 = vpop.f32.mrf.mxu0
      %v3441 = vadd.f32 %v3352, %v3440
      %v3442 = vpop.f32.mrf.mxu0
      %v3443 = vadd.f32 %v3354, %v3442
      %3444 = vmatmul.bf16.gmra.mxu0 %v2918
      %v3445 = vpop.f32.mrf.mxu0
      %v3446 = vadd.f32 %v3357, %v3445
      %v3447 = vpop.f32.mrf.mxu0
      %v3448 = vadd.f32 %v3359, %v3447
      %3449 = vmatmul.bf16.gmra.mxu0 %v2921
      %v3450 = vpop.f32.mrf.mxu0
      %v3451 = vadd.f32 %v3362, %v3450
      %v3452 = vpop.f32.mrf.mxu0
      %v3453 = vadd.f32 %v3364, %v3452
      %3454 = vmatmul.bf16.gmra.mxu0 %v2924
      %v3455 = vpop.f32.mrf.mxu0
      %v3456 = vadd.f32 %v3367, %v3455
      %v3457 = vpop.f32.mrf.mxu0
      %v3458 = vadd.f32 %v3369, %v3457
      %3459 = vmatmul.bf16.gmra.mxu0 %v2927
      %v3460 = vpop.f32.mrf.mxu0
      %v3461 = vadd.f32 %v3372, %v3460
      %v3462 = vpop.f32.mrf.mxu0
      %v3463 = vadd.f32 %v3374, %v3462
      %3464 = vmatmul.bf16.gmra.mxu0 %v2930
      %v3465 = vpop.f32.mrf.mxu0
      %v3466 = vadd.f32 %v3377, %v3465
      %v3467 = vpop.f32.mrf.mxu0
      %v3468 = vadd.f32 %v3379, %v3467
      %3469 = vmatmul.bf16.gmra.mxu0 %v2933
      %v3470 = vpop.f32.mrf.mxu0
      %v3471 = vadd.f32 %v3382, %v3470
      %v3472 = vpop.f32.mrf.mxu0
      %v3473 = vadd.f32 %v3384, %v3472
      %3474 = vmatmul.bf16.gmra.mxu0 %v2936
      %v3475 = vpop.f32.mrf.mxu0
      %v3476 = vadd.f32 %v3387, %v3475
      %v3477 = vpop.f32.mrf.mxu0
      %v3478 = vadd.f32 %v3389, %v3477
      %3479 = vmatmul.bf16.gmra.mxu0 %v2939
      %v3480 = vpop.f32.mrf.mxu0
      %v3481 = vadd.f32 %v3392, %v3480
      %v3482 = vpop.f32.mrf.mxu0
      %v3483 = vadd.f32 %v3394, %v3482
      %3484 = vmatmul.bf16.gmra.mxu0 %v2942
      %v3485 = vpop.f32.mrf.mxu0
      %v3486 = vadd.f32 %v3397, %v3485
      %v3487 = vpop.f32.mrf.mxu0
      %v3488 = vadd.f32 %v3399, %v3487
      %3489 = vmatmul.bf16.gmra.mxu0 %v2945
      %v3490 = vpop.f32.mrf.mxu0
      %v3491 = vadd.f32 %v3402, %v3490
      %v3492 = vpop.f32.mrf.mxu0
      %v3493 = vadd.f32 %v3404, %v3492
      %3494 = vmatmul.bf16.gmra.mxu0 %v2948
      %v3495 = vpop.f32.mrf.mxu0
      %v3496 = vadd.f32 %v3407, %v3495
      %v3497 = vpop.f32.mrf.mxu0
      %v3498 = vadd.f32 %v3409, %v3497
      %3499 = vmatmul.bf16.gmra.mxu0 %v2951
      %v3500 = vpop.f32.mrf.mxu0
      %v3501 = vadd.f32 %v3412, %v3500
      %v3502 = vpop.f32.mrf.mxu0
      %v3503 = vadd.f32 %v3414, %v3502
      %3504 = vmatmul.bf16.gmra.mxu0 %v2954
      %v3505 = vpop.f32.mrf.mxu0
      %v3506 = vadd.f32 %v3417, %v3505
      %v3507 = vpop.f32.mrf.mxu0
      %v3508 = vadd.f32 %v3419, %v3507
      %3509 = vdwg.mxu0
      %3510 = vmatpush.bf16.msra.mxu0 %v3162
      %3511 = vmatpush.bf16.msra.mxu0 %v3160
      %3512 = vmatpush.bf16.msra.mxu0 %v3158
      %3513 = vmatpush.bf16.msra.mxu0 %v3156
      %3514 = vmatpush.bf16.msra.mxu0 %v3154
      %3515 = vmatpush.bf16.msra.mxu0 %v3152
      %3516 = vmatpush.bf16.msra.mxu0 %v3150
      %3517 = vmatpush.bf16.msra.mxu0 %v3148
      %3518 = vmatmul.bf16.gmra.mxu0 %v2907
      %v3519 = vpop.f32.mrf.mxu0
      %v3520 = vadd.f32 %v2668, %v3519
      %v3521 = vpop.f32.mrf.mxu0
      %v3522 = vadd.f32 %v2670, %v3521
      %3523 = vmatmul.bf16.gmra.mxu0 %v2910
      %v3524 = vpop.f32.mrf.mxu0
      %v3525 = vadd.f32 %v2673, %v3524
      %v3526 = vpop.f32.mrf.mxu0
      %v3527 = vadd.f32 %v2675, %v3526
      %3528 = vmatmul.bf16.gmra.mxu0 %v2913
      %v3529 = vpop.f32.mrf.mxu0
      %v3530 = vadd.f32 %v2678, %v3529
      %v3531 = vpop.f32.mrf.mxu0
      %v3532 = vadd.f32 %v2680, %v3531
      %3533 = vmatmul.bf16.gmra.mxu0 %v2916
      %v3534 = vpop.f32.mrf.mxu0
      %v3535 = vadd.f32 %v2683, %v3534
      %v3536 = vpop.f32.mrf.mxu0
      %v3537 = vadd.f32 %v2685, %v3536
      %3538 = vmatmul.bf16.gmra.mxu0 %v2919
      %v3539 = vpop.f32.mrf.mxu0
      %v3540 = vadd.f32 %v2688, %v3539
      %v3541 = vpop.f32.mrf.mxu0
      %v3542 = vadd.f32 %v2690, %v3541
      %3543 = vmatmul.bf16.gmra.mxu0 %v2922
      %v3544 = vpop.f32.mrf.mxu0
      %v3545 = vadd.f32 %v2693, %v3544
      %v3546 = vpop.f32.mrf.mxu0
      %v3547 = vadd.f32 %v2695, %v3546
      %3548 = vmatmul.bf16.gmra.mxu0 %v2925
      %v3549 = vpop.f32.mrf.mxu0
      %v3550 = vadd.f32 %v2698, %v3549
      %v3551 = vpop.f32.mrf.mxu0
      %v3552 = vadd.f32 %v2700, %v3551
      %3553 = vmatmul.bf16.gmra.mxu0 %v2928
      %v3554 = vpop.f32.mrf.mxu0
      %v3555 = vadd.f32 %v2703, %v3554
      %v3556 = vpop.f32.mrf.mxu0
      %v3557 = vadd.f32 %v2705, %v3556
      %3558 = vmatmul.bf16.gmra.mxu0 %v2931
      %v3559 = vpop.f32.mrf.mxu0
      %v3560 = vadd.f32 %v2708, %v3559
      %v3561 = vpop.f32.mrf.mxu0
      %v3562 = vadd.f32 %v2710, %v3561
      %3563 = vmatmul.bf16.gmra.mxu0 %v2934
      %v3564 = vpop.f32.mrf.mxu0
      %v3565 = vadd.f32 %v2713, %v3564
      %v3566 = vpop.f32.mrf.mxu0
      %v3567 = vadd.f32 %v2715, %v3566
      %3568 = vmatmul.bf16.gmra.mxu0 %v2937
      %v3569 = vpop.f32.mrf.mxu0
      %v3570 = vadd.f32 %v2718, %v3569
      %v3571 = vpop.f32.mrf.mxu0
      %v3572 = vadd.f32 %v2720, %v3571
      %3573 = vmatmul.bf16.gmra.mxu0 %v2940
      %v3574 = vpop.f32.mrf.mxu0
      %v3575 = vadd.f32 %v2723, %v3574
      %v3576 = vpop.f32.mrf.mxu0
      %v3577 = vadd.f32 %v2725, %v3576
      %3578 = vmatmul.bf16.gmra.mxu0 %v2943
      %v3579 = vpop.f32.mrf.mxu0
      %v3580 = vadd.f32 %v2728, %v3579
      %v3581 = vpop.f32.mrf.mxu0
      %v3582 = vadd.f32 %v2730, %v3581
      %3583 = vmatmul.bf16.gmra.mxu0 %v2946
      %v3584 = vpop.f32.mrf.mxu0
      %v3585 = vadd.f32 %v2733, %v3584
      %v3586 = vpop.f32.mrf.mxu0
      %v3587 = vadd.f32 %v2735, %v3586
      %3588 = vmatmul.bf16.gmra.mxu0 %v2949
      %v3589 = vpop.f32.mrf.mxu0
      %v3590 = vadd.f32 %v2738, %v3589
      %v3591 = vpop.f32.mrf.mxu0
      %v3592 = vadd.f32 %v2740, %v3591
      %3593 = vmatmul.bf16.gmra.mxu0 %v2952
      %v3594 = vpop.f32.mrf.mxu0
      %v3595 = vadd.f32 %v2743, %v3594
      %v3596 = vpop.f32.mrf.mxu0
      %v3597 = vadd.f32 %v2745, %v3596
      %3598 = vdwg.mxu0
      %3599 = vmatpush.bf16.msra.mxu0 %v3178
      %3600 = vmatpush.bf16.msra.mxu0 %v3176
      %3601 = vmatpush.bf16.msra.mxu0 %v3174
      %3602 = vmatpush.bf16.msra.mxu0 %v3172
      %3603 = vmatpush.bf16.msra.mxu0 %v3170
      %3604 = vmatpush.bf16.msra.mxu0 %v3168
      %3605 = vmatpush.bf16.msra.mxu0 %v3166
      %3606 = vmatpush.bf16.msra.mxu0 %v3164
      %3607 = vmatmul.bf16.gmra.mxu0 %v2908
      %v3608 = vpop.f32.mrf.mxu0
      %v3609 = vadd.f32 %v3520, %v3608
      %v3610 = vpop.f32.mrf.mxu0
      %v3611 = vadd.f32 %v3522, %v3610
      %3612 = vmatmul.bf16.gmra.mxu0 %v2911
      %v3613 = vpop.f32.mrf.mxu0
      %v3614 = vadd.f32 %v3525, %v3613
      %v3615 = vpop.f32.mrf.mxu0
      %v3616 = vadd.f32 %v3527, %v3615
      %3617 = vmatmul.bf16.gmra.mxu0 %v2914
      %v3618 = vpop.f32.mrf.mxu0
      %v3619 = vadd.f32 %v3530, %v3618
      %v3620 = vpop.f32.mrf.mxu0
      %v3621 = vadd.f32 %v3532, %v3620
      %3622 = vmatmul.bf16.gmra.mxu0 %v2917
      %v3623 = vpop.f32.mrf.mxu0
      %v3624 = vadd.f32 %v3535, %v3623
      %v3625 = vpop.f32.mrf.mxu0
      %v3626 = vadd.f32 %v3537, %v3625
      %3627 = vmatmul.bf16.gmra.mxu0 %v2920
      %v3628 = vpop.f32.mrf.mxu0
      %v3629 = vadd.f32 %v3540, %v3628
      %v3630 = vpop.f32.mrf.mxu0
      %v3631 = vadd.f32 %v3542, %v3630
      %3632 = vmatmul.bf16.gmra.mxu0 %v2923
      %v3633 = vpop.f32.mrf.mxu0
      %v3634 = vadd.f32 %v3545, %v3633
      %v3635 = vpop.f32.mrf.mxu0
      %v3636 = vadd.f32 %v3547, %v3635
      %3637 = vmatmul.bf16.gmra.mxu0 %v2926
      %v3638 = vpop.f32.mrf.mxu0
      %v3639 = vadd.f32 %v3550, %v3638
      %v3640 = vpop.f32.mrf.mxu0
      %v3641 = vadd.f32 %v3552, %v3640
      %3642 = vmatmul.bf16.gmra.mxu0 %v2929
      %v3643 = vpop.f32.mrf.mxu0
      %v3644 = vadd.f32 %v3555, %v3643
      %v3645 = vpop.f32.mrf.mxu0
      %v3646 = vadd.f32 %v3557, %v3645
      %3647 = vmatmul.bf16.gmra.mxu0 %v2932
      %v3648 = vpop.f32.mrf.mxu0
      %v3649 = vadd.f32 %v3560, %v3648
      %v3650 = vpop.f32.mrf.mxu0
      %v3651 = vadd.f32 %v3562, %v3650
      %3652 = vmatmul.bf16.gmra.mxu0 %v2935
      %v3653 = vpop.f32.mrf.mxu0
      %v3654 = vadd.f32 %v3565, %v3653
      %v3655 = vpop.f32.mrf.mxu0
      %v3656 = vadd.f32 %v3567, %v3655
      %3657 = vmatmul.bf16.gmra.mxu0 %v2938
      %v3658 = vpop.f32.mrf.mxu0
      %v3659 = vadd.f32 %v3570, %v3658
      %v3660 = vpop.f32.mrf.mxu0
      %v3661 = vadd.f32 %v3572, %v3660
      %3662 = vmatmul.bf16.gmra.mxu0 %v2941
      %v3663 = vpop.f32.mrf.mxu0
      %v3664 = vadd.f32 %v3575, %v3663
      %v3665 = vpop.f32.mrf.mxu0
      %v3666 = vadd.f32 %v3577, %v3665
      %3667 = vmatmul.bf16.gmra.mxu0 %v2944
      %v3668 = vpop.f32.mrf.mxu0
      %v3669 = vadd.f32 %v3580, %v3668
      %v3670 = vpop.f32.mrf.mxu0
      %v3671 = vadd.f32 %v3582, %v3670
      %3672 = vmatmul.bf16.gmra.mxu0 %v2947
      %v3673 = vpop.f32.mrf.mxu0
      %v3674 = vadd.f32 %v3585, %v3673
      %v3675 = vpop.f32.mrf.mxu0
      %v3676 = vadd.f32 %v3587, %v3675
      %3677 = vmatmul.bf16.gmra.mxu0 %v2950
      %v3678 = vpop.f32.mrf.mxu0
      %v3679 = vadd.f32 %v3590, %v3678
      %v3680 = vpop.f32.mrf.mxu0
      %v3681 = vadd.f32 %v3592, %v3680
      %3682 = vmatmul.bf16.gmra.mxu0 %v2953
      %v3683 = vpop.f32.mrf.mxu0
      %v3684 = vadd.f32 %v3595, %v3683
      %v3685 = vpop.f32.mrf.mxu0
      %v3686 = vadd.f32 %v3597, %v3685
      %3687 = vdwg.mxu0
      %3688 = vmatpush.bf16.msra.mxu0 %v3194
      %3689 = vmatpush.bf16.msra.mxu0 %v3192
      %3690 = vmatpush.bf16.msra.mxu0 %v3190
      %3691 = vmatpush.bf16.msra.mxu0 %v3188
      %3692 = vmatpush.bf16.msra.mxu0 %v3186
      %3693 = vmatpush.bf16.msra.mxu0 %v3184
      %3694 = vmatpush.bf16.msra.mxu0 %v3182
      %3695 = vmatpush.bf16.msra.mxu0 %v3180
      %3696 = vmatmul.bf16.gmra.mxu0 %v2909
      %v3697 = vpop.f32.mrf.mxu0
      %v3698 = vadd.f32 %v3609, %v3697
      %v3699 = vpop.f32.mrf.mxu0
      %v3700 = vadd.f32 %v3611, %v3699
      %3701 = vmatmul.bf16.gmra.mxu0 %v2912
      %v3702 = vpop.f32.mrf.mxu0
      %v3703 = vadd.f32 %v3614, %v3702
      %v3704 = vpop.f32.mrf.mxu0
      %v3705 = vadd.f32 %v3616, %v3704
      %3706 = vmatmul.bf16.gmra.mxu0 %v2915
      %v3707 = vpop.f32.mrf.mxu0
      %v3708 = vadd.f32 %v3619, %v3707
      %v3709 = vpop.f32.mrf.mxu0
      %v3710 = vadd.f32 %v3621, %v3709
      %3711 = vmatmul.bf16.gmra.mxu0 %v2918
      %v3712 = vpop.f32.mrf.mxu0
      %v3713 = vadd.f32 %v3624, %v3712
      %v3714 = vpop.f32.mrf.mxu0
      %v3715 = vadd.f32 %v3626, %v3714
      %3716 = vmatmul.bf16.gmra.mxu0 %v2921
      %v3717 = vpop.f32.mrf.mxu0
      %v3718 = vadd.f32 %v3629, %v3717
      %v3719 = vpop.f32.mrf.mxu0
      %v3720 = vadd.f32 %v3631, %v3719
      %3721 = vmatmul.bf16.gmra.mxu0 %v2924
      %v3722 = vpop.f32.mrf.mxu0
      %v3723 = vadd.f32 %v3634, %v3722
      %v3724 = vpop.f32.mrf.mxu0
      %v3725 = vadd.f32 %v3636, %v3724
      %3726 = vmatmul.bf16.gmra.mxu0 %v2927
      %v3727 = vpop.f32.mrf.mxu0
      %v3728 = vadd.f32 %v3639, %v3727
      %v3729 = vpop.f32.mrf.mxu0
      %v3730 = vadd.f32 %v3641, %v3729
      %3731 = vmatmul.bf16.gmra.mxu0 %v2930
      %v3732 = vpop.f32.mrf.mxu0
      %v3733 = vadd.f32 %v3644, %v3732
      %v3734 = vpop.f32.mrf.mxu0
      %v3735 = vadd.f32 %v3646, %v3734
      %3736 = vmatmul.bf16.gmra.mxu0 %v2933
      %v3737 = vpop.f32.mrf.mxu0
      %v3738 = vadd.f32 %v3649, %v3737
      %v3739 = vpop.f32.mrf.mxu0
      %v3740 = vadd.f32 %v3651, %v3739
      %3741 = vmatmul.bf16.gmra.mxu0 %v2936
      %v3742 = vpop.f32.mrf.mxu0
      %v3743 = vadd.f32 %v3654, %v3742
      %v3744 = vpop.f32.mrf.mxu0
      %v3745 = vadd.f32 %v3656, %v3744
      %3746 = vmatmul.bf16.gmra.mxu0 %v2939
      %v3747 = vpop.f32.mrf.mxu0
      %v3748 = vadd.f32 %v3659, %v3747
      %v3749 = vpop.f32.mrf.mxu0
      %v3750 = vadd.f32 %v3661, %v3749
      %3751 = vmatmul.bf16.gmra.mxu0 %v2942
      %v3752 = vpop.f32.mrf.mxu0
      %v3753 = vadd.f32 %v3664, %v3752
      %v3754 = vpop.f32.mrf.mxu0
      %v3755 = vadd.f32 %v3666, %v3754
      %3756 = vmatmul.bf16.gmra.mxu0 %v2945
      %v3757 = vpop.f32.mrf.mxu0
      %v3758 = vadd.f32 %v3669, %v3757
      %v3759 = vpop.f32.mrf.mxu0
      %v3760 = vadd.f32 %v3671, %v3759
      %3761 = vmatmul.bf16.gmra.mxu0 %v2948
      %v3762 = vpop.f32.mrf.mxu0
      %v3763 = vadd.f32 %v3674, %v3762
      %v3764 = vpop.f32.mrf.mxu0
      %v3765 = vadd.f32 %v3676, %v3764
      %3766 = vmatmul.bf16.gmra.mxu0 %v2951
      %v3767 = vpop.f32.mrf.mxu0
      %v3768 = vadd.f32 %v3679, %v3767
      %v3769 = vpop.f32.mrf.mxu0
      %v3770 = vadd.f32 %v3681, %v3769
      %3771 = vmatmul.bf16.gmra.mxu0 %v2954
      %v3772 = vpop.f32.mrf.mxu0
      %v3773 = vadd.f32 %v3684, %v3772
      %v3774 = vpop.f32.mrf.mxu0
      %v3775 = vadd.f32 %v3686, %v3774
      %3776 = vdwg.mxu0
      %s3777 = scalar_lea.vmem [#allocation2], 48
      %v3778 = vld [vmem:[%s3777] sm:$0xff]
      %v3779 = vld [vmem:[%s3777 + $0x8] sm:$0xf]
      %v3780 = vld [vmem:[%s3777 + $0xc] sm:$0xff]
      %v3781 = vld [vmem:[%s3777 + $0x14] sm:$0xf]
      %v3782 = vld [vmem:[%s3777 + $0x18] sm:$0xff]
      %v3783 = vld [vmem:[%s3777 + $0x20] sm:$0xf]
      %v3784 = vld [vmem:[%s3777 + $0x24] sm:$0xff]
      %v3785 = vld [vmem:[%s3777 + $0x2c] sm:$0xf]
      %v3786 = vld [vmem:[%s3777 + $0x30] sm:$0xff]
      %v3787 = vld [vmem:[%s3777 + $0x38] sm:$0xf]
      %v3788 = vld [vmem:[%s3777 + $0x3c] sm:$0xff]
      %v3789 = vld [vmem:[%s3777 + $0x44] sm:$0xf]
      %v3790 = vld [vmem:[%s3777 + $0x48] sm:$0xff]
      %v3791 = vld [vmem:[%s3777 + $0x50] sm:$0xf]
      %v3792 = vld [vmem:[%s3777 + $0x54] sm:$0xff]
      %v3793 = vld [vmem:[%s3777 + $0x5c] sm:$0xf]
      %v3794 = vld [vmem:[%s3777 + $0x60] sm:$0xff]
      %v3795 = vld [vmem:[%s3777 + $0x68] sm:$0xf]
      %v3796 = vld [vmem:[%s3777 + $0x6c] sm:$0xff]
      %v3797 = vld [vmem:[%s3777 + $0x74] sm:$0xf]
      %v3798 = vld [vmem:[%s3777 + $0x78] sm:$0xff]
      %v3799 = vld [vmem:[%s3777 + $0x80] sm:$0xf]
      %v3800 = vld [vmem:[%s3777 + $0x84] sm:$0xff]
      %v3801 = vld [vmem:[%s3777 + $0x8c] sm:$0xf]
      %v3802 = vld [vmem:[%s3777 + $0x90] sm:$0xff]
      %v3803 = vld [vmem:[%s3777 + $0x98] sm:$0xf]
      %v3804 = vld [vmem:[%s3777 + $0x9c] sm:$0xff]
      %v3805 = vld [vmem:[%s3777 + $0xa4] sm:$0xf]
      %v3806 = vld [vmem:[%s3777 + $0xa8] sm:$0xff]
      %v3807 = vld [vmem:[%s3777 + $0xb0] sm:$0xf]
      %v3808 = vld [vmem:[%s3777 + $0xb4] sm:$0xff]
      %v3809 = vld [vmem:[%s3777 + $0xbc] sm:$0xf]
      %v3810 = vld [vmem:[%s3777 + $0xc0] sm:$0xff]
      %v3811 = vld [vmem:[%s3777 + $0xc8] sm:$0xf]
      %v3812 = vld [vmem:[%s3777 + $0xcc] sm:$0xff]
      %v3813 = vld [vmem:[%s3777 + $0xd4] sm:$0xf]
      %v3814 = vld [vmem:[%s3777 + $0xd8] sm:$0xff]
      %v3815 = vld [vmem:[%s3777 + $0xe0] sm:$0xf]
      %v3816 = vld [vmem:[%s3777 + $0xe4] sm:$0xff]
      %v3817 = vld [vmem:[%s3777 + $0xec] sm:$0xf]
      %v3818 = vld [vmem:[%s3777 + $0xf0] sm:$0xff]
      %v3819 = vld [vmem:[%s3777 + $0xf8] sm:$0xf]
      %v3820 = vld [vmem:[%s3777 + $0xfc] sm:$0xff]
      %v3821 = vld [vmem:[%s3777 + $0x104] sm:$0xf]
      %v3822 = vld [vmem:[%s3777 + $0x108] sm:$0xff]
      %v3823 = vld [vmem:[%s3777 + $0x110] sm:$0xf]
      %v3824 = vld [vmem:[%s3777 + $0x114] sm:$0xff]
      %v3825 = vld [vmem:[%s3777 + $0x11c] sm:$0xf]
      %v3826 = vld [vmem:[%s3777 + $0x120] sm:$0xff]
      %v3827 = vld [vmem:[%s3777 + $0x128] sm:$0xf]
      %v3828 = vld [vmem:[%s3777 + $0x12c] sm:$0xff]
      %v3829 = vld [vmem:[%s3777 + $0x134] sm:$0xf]
      %v3830 = vld [vmem:[%s3777 + $0x138] sm:$0xff]
      %v3831 = vld [vmem:[%s3777 + $0x140] sm:$0xf]
      %v3832 = vld [vmem:[%s3777 + $0x144] sm:$0xff]
      %v3833 = vld [vmem:[%s3777 + $0x14c] sm:$0xf]
      %v3834 = vld [vmem:[%s3777 + $0x150] sm:$0xff]
      %v3835 = vld [vmem:[%s3777 + $0x158] sm:$0xf]
      %v3836 = vld [vmem:[%s3777 + $0x15c] sm:$0xff]
      %v3837 = vld [vmem:[%s3777 + $0x164] sm:$0xf]
      %v3838 = vld [vmem:[%s3777 + $0x168] sm:$0xff]
      %v3839 = vld [vmem:[%s3777 + $0x170] sm:$0xf]
      %v3840 = vld [vmem:[%s3777 + $0x174] sm:$0xff]
      %v3841 = vld [vmem:[%s3777 + $0x17c] sm:$0xf]
      %s3842 = scalar_lea.vmem %s5, 768
      %v3843 = vld [vmem:[%s3842] sm:$0xff]
      %v3844 = vld [vmem:[%s3842 + $0x8] sm:$0xff]
      %v3845 = vld [vmem:[%s3842 + $0x10] sm:$0xff]
      %v3846 = vld [vmem:[%s3842 + $0x18] sm:$0xff]
      %v3847 = vld [vmem:[%s3842 + $0x20] sm:$0xff]
      %v3848 = vld [vmem:[%s3842 + $0x28] sm:$0xff]
      %v3849 = vld [vmem:[%s3842 + $0x30] sm:$0xff]
      %v3850 = vld [vmem:[%s3842 + $0x38] sm:$0xff]
      %v3851 = vld [vmem:[%s3842 + $0x40] sm:$0xff]
      %v3852 = vld [vmem:[%s3842 + $0x48] sm:$0xff]
      %v3853 = vld [vmem:[%s3842 + $0x50] sm:$0xff]
      %v3854 = vld [vmem:[%s3842 + $0x58] sm:$0xff]
      %v3855 = vld [vmem:[%s3842 + $0x60] sm:$0xff]
      %v3856 = vld [vmem:[%s3842 + $0x68] sm:$0xff]
      %v3857 = vld [vmem:[%s3842 + $0x70] sm:$0xff]
      %v3858 = vld [vmem:[%s3842 + $0x78] sm:$0xff]
      %v3859 = vld [vmem:[%s3842 + $0x80] sm:$0xff]
      %v3860 = vld [vmem:[%s3842 + $0x88] sm:$0xff]
      %v3861 = vld [vmem:[%s3842 + $0x90] sm:$0xff]
      %v3862 = vld [vmem:[%s3842 + $0x98] sm:$0xff]
      %v3863 = vld [vmem:[%s3842 + $0xa0] sm:$0xff]
      %v3864 = vld [vmem:[%s3842 + $0xa8] sm:$0xff]
      %v3865 = vld [vmem:[%s3842 + $0xb0] sm:$0xff]
      %v3866 = vld [vmem:[%s3842 + $0xb8] sm:$0xff]
      %v3867 = vld [vmem:[%s3842 + $0xc0] sm:$0xff]
      %v3868 = vld [vmem:[%s3842 + $0xc8] sm:$0xff]
      %v3869 = vld [vmem:[%s3842 + $0xd0] sm:$0xff]
      %v3870 = vld [vmem:[%s3842 + $0xd8] sm:$0xff]
      %v3871 = vld [vmem:[%s3842 + $0xe0] sm:$0xff]
      %v3872 = vld [vmem:[%s3842 + $0xe8] sm:$0xff]
      %v3873 = vld [vmem:[%s3842 + $0xf0] sm:$0xff]
      %v3874 = vld [vmem:[%s3842 + $0xf8] sm:$0xff]
      %v3875 = vld [vmem:[%s3842 + $0x100] sm:$0xff]
      %v3876 = vld [vmem:[%s3842 + $0x108] sm:$0xff]
      %v3877 = vld [vmem:[%s3842 + $0x110] sm:$0xff]
      %v3878 = vld [vmem:[%s3842 + $0x118] sm:$0xff]
      %v3879 = vld [vmem:[%s3842 + $0x120] sm:$0xff]
      %v3880 = vld [vmem:[%s3842 + $0x128] sm:$0xff]
      %v3881 = vld [vmem:[%s3842 + $0x130] sm:$0xff]
      %v3882 = vld [vmem:[%s3842 + $0x138] sm:$0xff]
      %v3883 = vld [vmem:[%s3842 + $0x140] sm:$0xff]
      %v3884 = vld [vmem:[%s3842 + $0x148] sm:$0xff]
      %v3885 = vld [vmem:[%s3842 + $0x150] sm:$0xff]
      %v3886 = vld [vmem:[%s3842 + $0x158] sm:$0xff]
      %v3887 = vld [vmem:[%s3842 + $0x160] sm:$0xff]
      %v3888 = vld [vmem:[%s3842 + $0x168] sm:$0xff]
      %v3889 = vld [vmem:[%s3842 + $0x170] sm:$0xff]
      %v3890 = vld [vmem:[%s3842 + $0x178] sm:$0xff]
      %v3955 = vunpack.c.l.b16 %v3778
      %v3956 = vunpack.c.h.b16 %v3778
      %v3957 = vunpack.c.l.b16 %v3779
      %v3958 = vunpack.c.l.b16 %v3780
      %v3959 = vunpack.c.h.b16 %v3780
      %v3960 = vunpack.c.l.b16 %v3781
      %v3961 = vunpack.c.l.b16 %v3782
      %v3962 = vunpack.c.h.b16 %v3782
      %v3963 = vunpack.c.l.b16 %v3783
      %v3964 = vunpack.c.l.b16 %v3784
      %v3965 = vunpack.c.h.b16 %v3784
      %v3966 = vunpack.c.l.b16 %v3785
      %v3967 = vunpack.c.l.b16 %v3786
      %v3968 = vunpack.c.h.b16 %v3786
      %v3969 = vunpack.c.l.b16 %v3787
      %v3970 = vunpack.c.l.b16 %v3788
      %v3971 = vunpack.c.h.b16 %v3788
      %v3972 = vunpack.c.l.b16 %v3789
      %v3973 = vunpack.c.l.b16 %v3790
      %v3974 = vunpack.c.h.b16 %v3790
      %v3975 = vunpack.c.l.b16 %v3791
      %v3976 = vunpack.c.l.b16 %v3792
      %v3977 = vunpack.c.h.b16 %v3792
      %v3978 = vunpack.c.l.b16 %v3793
      %v3979 = vunpack.c.l.b16 %v3794
      %v3980 = vunpack.c.h.b16 %v3794
      %v3981 = vunpack.c.l.b16 %v3795
      %v3982 = vunpack.c.l.b16 %v3796
      %v3983 = vunpack.c.h.b16 %v3796
      %v3984 = vunpack.c.l.b16 %v3797
      %v3985 = vunpack.c.l.b16 %v3798
      %v3986 = vunpack.c.h.b16 %v3798
      %v3987 = vunpack.c.l.b16 %v3799
      %v3988 = vunpack.c.l.b16 %v3800
      %v3989 = vunpack.c.h.b16 %v3800
      %v3990 = vunpack.c.l.b16 %v3801
      %v3991 = vunpack.c.l.b16 %v3802
      %v3992 = vunpack.c.h.b16 %v3802
      %v3993 = vunpack.c.l.b16 %v3803
      %v3994 = vunpack.c.l.b16 %v3804
      %v3995 = vunpack.c.h.b16 %v3804
      %v3996 = vunpack.c.l.b16 %v3805
      %v3997 = vunpack.c.l.b16 %v3806
      %v3998 = vunpack.c.h.b16 %v3806
      %v3999 = vunpack.c.l.b16 %v3807
      %v4000 = vunpack.c.l.b16 %v3808
      %v4001 = vunpack.c.h.b16 %v3808
      %v4002 = vunpack.c.l.b16 %v3809
      %v4003 = vunpack.c.l.b16 %v3810
      %v4004 = vunpack.c.h.b16 %v3810
      %v4005 = vunpack.c.l.b16 %v3811
      %v4006 = vunpack.c.l.b16 %v3812
      %v4007 = vunpack.c.h.b16 %v3812
      %v4008 = vunpack.c.l.b16 %v3813
      %v4009 = vunpack.c.l.b16 %v3814
      %v4010 = vunpack.c.h.b16 %v3814
      %v4011 = vunpack.c.l.b16 %v3815
      %v4012 = vunpack.c.l.b16 %v3816
      %v4013 = vunpack.c.h.b16 %v3816
      %v4014 = vunpack.c.l.b16 %v3817
      %v4015 = vunpack.c.l.b16 %v3818
      %v4016 = vunpack.c.h.b16 %v3818
      %v4017 = vunpack.c.l.b16 %v3819
      %v4018 = vunpack.c.l.b16 %v3820
      %v4019 = vunpack.c.h.b16 %v3820
      %v4020 = vunpack.c.l.b16 %v3821
      %v4021 = vunpack.c.l.b16 %v3822
      %v4022 = vunpack.c.h.b16 %v3822
      %v4023 = vunpack.c.l.b16 %v3823
      %v4024 = vunpack.c.l.b16 %v3824
      %v4025 = vunpack.c.h.b16 %v3824
      %v4026 = vunpack.c.l.b16 %v3825
      %v4027 = vunpack.c.l.b16 %v3826
      %v4028 = vunpack.c.h.b16 %v3826
      %v4029 = vunpack.c.l.b16 %v3827
      %v4030 = vunpack.c.l.b16 %v3828
      %v4031 = vunpack.c.h.b16 %v3828
      %v4032 = vunpack.c.l.b16 %v3829
      %v4033 = vunpack.c.l.b16 %v3830
      %v4034 = vunpack.c.h.b16 %v3830
      %v4035 = vunpack.c.l.b16 %v3831
      %v4036 = vunpack.c.l.b16 %v3832
      %v4037 = vunpack.c.h.b16 %v3832
      %v4038 = vunpack.c.l.b16 %v3833
      %v4039 = vunpack.c.l.b16 %v3834
      %v4040 = vunpack.c.h.b16 %v3834
      %v4041 = vunpack.c.l.b16 %v3835
      %v4042 = vunpack.c.l.b16 %v3836
      %v4043 = vunpack.c.h.b16 %v3836
      %v4044 = vunpack.c.l.b16 %v3837
      %v4045 = vunpack.c.l.b16 %v3838
      %v4046 = vunpack.c.h.b16 %v3838
      %v4047 = vunpack.c.l.b16 %v3839
      %v4048 = vunpack.c.l.b16 %v3840
      %v4049 = vunpack.c.h.b16 %v3840
      %v4050 = vunpack.c.l.b16 %v3841
      %v4051 = vpack.c.b16 %v3958, %v3955
      %v4052 = vpack.c.b16 %v3959, %v3956
      %v4053 = vpack.c.b16 %v3960, %v3957
      %v4054 = vpack.c.b16 %v3964, %v3961
      %v4055 = vpack.c.b16 %v3965, %v3962
      %v4056 = vpack.c.b16 %v3966, %v3963
      %v4057 = vpack.c.b16 %v3970, %v3967
      %v4058 = vpack.c.b16 %v3971, %v3968
      %v4059 = vpack.c.b16 %v3972, %v3969
      %v4060 = vpack.c.b16 %v3976, %v3973
      %v4061 = vpack.c.b16 %v3977, %v3974
      %v4062 = vpack.c.b16 %v3978, %v3975
      %v4063 = vpack.c.b16 %v3982, %v3979
      %v4064 = vpack.c.b16 %v3983, %v3980
      %v4065 = vpack.c.b16 %v3984, %v3981
      %v4066 = vpack.c.b16 %v3988, %v3985
      %v4067 = vpack.c.b16 %v3989, %v3986
      %v4068 = vpack.c.b16 %v3990, %v3987
      %v4069 = vpack.c.b16 %v3994, %v3991
      %v4070 = vpack.c.b16 %v3995, %v3992
      %v4071 = vpack.c.b16 %v3996, %v3993
      %v4072 = vpack.c.b16 %v4000, %v3997
      %v4073 = vpack.c.b16 %v4001, %v3998
      %v4074 = vpack.c.b16 %v4002, %v3999
      %v4075 = vpack.c.b16 %v4006, %v4003
      %v4076 = vpack.c.b16 %v4007, %v4004
      %v4077 = vpack.c.b16 %v4008, %v4005
      %v4078 = vpack.c.b16 %v4012, %v4009
      %v4079 = vpack.c.b16 %v4013, %v4010
      %v4080 = vpack.c.b16 %v4014, %v4011
      %v4081 = vpack.c.b16 %v4018, %v4015
      %v4082 = vpack.c.b16 %v4019, %v4016
      %v4083 = vpack.c.b16 %v4020, %v4017
      %v4084 = vpack.c.b16 %v4024, %v4021
      %v4085 = vpack.c.b16 %v4025, %v4022
      %v4086 = vpack.c.b16 %v4026, %v4023
      %v4087 = vpack.c.b16 %v4030, %v4027
      %v4088 = vpack.c.b16 %v4031, %v4028
      %v4089 = vpack.c.b16 %v4032, %v4029
      %v4090 = vpack.c.b16 %v4036, %v4033
      %v4091 = vpack.c.b16 %v4037, %v4034
      %v4092 = vpack.c.b16 %v4038, %v4035
      %v4093 = vpack.c.b16 %v4042, %v4039
      %v4094 = vpack.c.b16 %v4043, %v4040
      %v4095 = vpack.c.b16 %v4044, %v4041
      %v4096 = vpack.c.b16 %v4048, %v4045
      %v4097 = vpack.c.b16 %v4049, %v4046
      %v4098 = vpack.c.b16 %v4050, %v4047
      %v4195 = vunpack.c.l.b16 %v3843
      %v4196 = vunpack.c.h.b16 %v3843
      %v4197 = vunpack.c.l.b16 %v3844
      %v4198 = vunpack.c.h.b16 %v3844
      %v4199 = vunpack.c.l.b16 %v3845
      %v4200 = vunpack.c.h.b16 %v3845
      %v4201 = vunpack.c.l.b16 %v3846
      %v4202 = vunpack.c.h.b16 %v3846
      %v4203 = vunpack.c.l.b16 %v3847
      %v4204 = vunpack.c.h.b16 %v3847
      %v4205 = vunpack.c.l.b16 %v3848
      %v4206 = vunpack.c.h.b16 %v3848
      %v4207 = vunpack.c.l.b16 %v3849
      %v4208 = vunpack.c.h.b16 %v3849
      %v4209 = vunpack.c.l.b16 %v3850
      %v4210 = vunpack.c.h.b16 %v3850
      %v4211 = vunpack.c.l.b16 %v3851
      %v4212 = vunpack.c.h.b16 %v3851
      %v4213 = vunpack.c.l.b16 %v3852
      %v4214 = vunpack.c.h.b16 %v3852
      %v4215 = vunpack.c.l.b16 %v3853
      %v4216 = vunpack.c.h.b16 %v3853
      %v4217 = vunpack.c.l.b16 %v3854
      %v4218 = vunpack.c.h.b16 %v3854
      %v4219 = vunpack.c.l.b16 %v3855
      %v4220 = vunpack.c.h.b16 %v3855
      %v4221 = vunpack.c.l.b16 %v3856
      %v4222 = vunpack.c.h.b16 %v3856
      %v4223 = vunpack.c.l.b16 %v3857
      %v4224 = vunpack.c.h.b16 %v3857
      %v4225 = vunpack.c.l.b16 %v3858
      %v4226 = vunpack.c.h.b16 %v3858
      %v4227 = vunpack.c.l.b16 %v3859
      %v4228 = vunpack.c.h.b16 %v3859
      %v4229 = vunpack.c.l.b16 %v3860
      %v4230 = vunpack.c.h.b16 %v3860
      %v4231 = vunpack.c.l.b16 %v3861
      %v4232 = vunpack.c.h.b16 %v3861
      %v4233 = vunpack.c.l.b16 %v3862
      %v4234 = vunpack.c.h.b16 %v3862
      %v4235 = vunpack.c.l.b16 %v3863
      %v4236 = vunpack.c.h.b16 %v3863
      %v4237 = vunpack.c.l.b16 %v3864
      %v4238 = vunpack.c.h.b16 %v3864
      %v4239 = vunpack.c.l.b16 %v3865
      %v4240 = vunpack.c.h.b16 %v3865
      %v4241 = vunpack.c.l.b16 %v3866
      %v4242 = vunpack.c.h.b16 %v3866
      %v4243 = vunpack.c.l.b16 %v3867
      %v4244 = vunpack.c.h.b16 %v3867
      %v4245 = vunpack.c.l.b16 %v3868
      %v4246 = vunpack.c.h.b16 %v3868
      %v4247 = vunpack.c.l.b16 %v3869
      %v4248 = vunpack.c.h.b16 %v3869
      %v4249 = vunpack.c.l.b16 %v3870
      %v4250 = vunpack.c.h.b16 %v3870
      %v4251 = vunpack.c.l.b16 %v3871
      %v4252 = vunpack.c.h.b16 %v3871
      %v4253 = vunpack.c.l.b16 %v3872
      %v4254 = vunpack.c.h.b16 %v3872
      %v4255 = vunpack.c.l.b16 %v3873
      %v4256 = vunpack.c.h.b16 %v3873
      %v4257 = vunpack.c.l.b16 %v3874
      %v4258 = vunpack.c.h.b16 %v3874
      %v4259 = vunpack.c.l.b16 %v3875
      %v4260 = vunpack.c.h.b16 %v3875
      %v4261 = vunpack.c.l.b16 %v3876
      %v4262 = vunpack.c.h.b16 %v3876
      %v4263 = vunpack.c.l.b16 %v3877
      %v4264 = vunpack.c.h.b16 %v3877
      %v4265 = vunpack.c.l.b16 %v3878
      %v4266 = vunpack.c.h.b16 %v3878
      %v4267 = vunpack.c.l.b16 %v3879
      %v4268 = vunpack.c.h.b16 %v3879
      %v4269 = vunpack.c.l.b16 %v3880
      %v4270 = vunpack.c.h.b16 %v3880
      %v4271 = vunpack.c.l.b16 %v3881
      %v4272 = vunpack.c.h.b16 %v3881
      %v4273 = vunpack.c.l.b16 %v3882
      %v4274 = vunpack.c.h.b16 %v3882
      %v4275 = vunpack.c.l.b16 %v3883
      %v4276 = vunpack.c.h.b16 %v3883
      %v4277 = vunpack.c.l.b16 %v3884
      %v4278 = vunpack.c.h.b16 %v3884
      %v4279 = vunpack.c.l.b16 %v3885
      %v4280 = vunpack.c.h.b16 %v3885
      %v4281 = vunpack.c.l.b16 %v3886
      %v4282 = vunpack.c.h.b16 %v3886
      %v4283 = vunpack.c.l.b16 %v3887
      %v4284 = vunpack.c.h.b16 %v3887
      %v4285 = vunpack.c.l.b16 %v3888
      %v4286 = vunpack.c.h.b16 %v3888
      %v4287 = vunpack.c.l.b16 %v3889
      %v4288 = vunpack.c.h.b16 %v3889
      %v4289 = vunpack.c.l.b16 %v3890
      %v4290 = vunpack.c.h.b16 %v3890
      %v4291 = vpack.c.b16 %v4197, %v4195
      %v4292 = vpack.c.b16 %v4198, %v4196
      %v4293 = vpack.c.b16 %v4201, %v4199
      %v4294 = vpack.c.b16 %v4202, %v4200
      %v4295 = vpack.c.b16 %v4205, %v4203
      %v4296 = vpack.c.b16 %v4206, %v4204
      %v4297 = vpack.c.b16 %v4209, %v4207
      %v4298 = vpack.c.b16 %v4210, %v4208
      %v4299 = vpack.c.b16 %v4213, %v4211
      %v4300 = vpack.c.b16 %v4214, %v4212
      %v4301 = vpack.c.b16 %v4217, %v4215
      %v4302 = vpack.c.b16 %v4218, %v4216
      %v4303 = vpack.c.b16 %v4221, %v4219
      %v4304 = vpack.c.b16 %v4222, %v4220
      %v4305 = vpack.c.b16 %v4225, %v4223
      %v4306 = vpack.c.b16 %v4226, %v4224
      %v4307 = vpack.c.b16 %v4229, %v4227
      %v4308 = vpack.c.b16 %v4230, %v4228
      %v4309 = vpack.c.b16 %v4233, %v4231
      %v4310 = vpack.c.b16 %v4234, %v4232
      %v4311 = vpack.c.b16 %v4237, %v4235
      %v4312 = vpack.c.b16 %v4238, %v4236
      %v4313 = vpack.c.b16 %v4241, %v4239
      %v4314 = vpack.c.b16 %v4242, %v4240
      %v4315 = vpack.c.b16 %v4245, %v4243
      %v4316 = vpack.c.b16 %v4246, %v4244
      %v4317 = vpack.c.b16 %v4249, %v4247
      %v4318 = vpack.c.b16 %v4250, %v4248
      %v4319 = vpack.c.b16 %v4253, %v4251
      %v4320 = vpack.c.b16 %v4254, %v4252
      %v4321 = vpack.c.b16 %v4257, %v4255
      %v4322 = vpack.c.b16 %v4258, %v4256
      %v4323 = vpack.c.b16 %v4261, %v4259
      %v4324 = vpack.c.b16 %v4262, %v4260
      %v4325 = vpack.c.b16 %v4265, %v4263
      %v4326 = vpack.c.b16 %v4266, %v4264
      %v4327 = vpack.c.b16 %v4269, %v4267
      %v4328 = vpack.c.b16 %v4270, %v4268
      %v4329 = vpack.c.b16 %v4273, %v4271
      %v4330 = vpack.c.b16 %v4274, %v4272
      %v4331 = vpack.c.b16 %v4277, %v4275
      %v4332 = vpack.c.b16 %v4278, %v4276
      %v4333 = vpack.c.b16 %v4281, %v4279
      %v4334 = vpack.c.b16 %v4282, %v4280
      %v4335 = vpack.c.b16 %v4285, %v4283
      %v4336 = vpack.c.b16 %v4286, %v4284
      %v4337 = vpack.c.b16 %v4289, %v4287
      %v4338 = vpack.c.b16 %v4290, %v4288
      %4387 = vmatpush.bf16.msra.mxu0 %v4305
      %4388 = vmatpush.bf16.msra.mxu0 %v4303
      %4389 = vmatpush.bf16.msra.mxu0 %v4301
      %4390 = vmatpush.bf16.msra.mxu0 %v4299
      %4391 = vmatpush.bf16.msra.mxu0 %v4297
      %4392 = vmatpush.bf16.msra.mxu0 %v4295
      %4393 = vmatpush.bf16.msra.mxu0 %v4293
      %4394 = vmatpush.bf16.msra.mxu0 %v4291
      %4395 = vmatmul.bf16.gmra.mxu0 %v4051
      %v4396 = vpop.f32.mrf.mxu0
      %v4397 = vadd.f32 0.0, %v4396
      %v4398 = vpop.f32.mrf.mxu0
      %v4399 = vadd.f32 0.0, %v4398
      %4400 = vmatmul.bf16.gmra.mxu0 %v4054
      %v4401 = vpop.f32.mrf.mxu0
      %v4402 = vadd.f32 0.0, %v4401
      %v4403 = vpop.f32.mrf.mxu0
      %v4404 = vadd.f32 0.0, %v4403
      %4405 = vmatmul.bf16.gmra.mxu0 %v4057
      %v4406 = vpop.f32.mrf.mxu0
      %v4407 = vadd.f32 0.0, %v4406
      %v4408 = vpop.f32.mrf.mxu0
      %v4409 = vadd.f32 0.0, %v4408
      %4410 = vmatmul.bf16.gmra.mxu0 %v4060
      %v4411 = vpop.f32.mrf.mxu0
      %v4412 = vadd.f32 0.0, %v4411
      %v4413 = vpop.f32.mrf.mxu0
      %v4414 = vadd.f32 0.0, %v4413
      %4415 = vmatmul.bf16.gmra.mxu0 %v4063
      %v4416 = vpop.f32.mrf.mxu0
      %v4417 = vadd.f32 0.0, %v4416
      %v4418 = vpop.f32.mrf.mxu0
      %v4419 = vadd.f32 0.0, %v4418
      %4420 = vmatmul.bf16.gmra.mxu0 %v4066
      %v4421 = vpop.f32.mrf.mxu0
      %v4422 = vadd.f32 0.0, %v4421
      %v4423 = vpop.f32.mrf.mxu0
      %v4424 = vadd.f32 0.0, %v4423
      %4425 = vmatmul.bf16.gmra.mxu0 %v4069
      %v4426 = vpop.f32.mrf.mxu0
      %v4427 = vadd.f32 0.0, %v4426
      %v4428 = vpop.f32.mrf.mxu0
      %v4429 = vadd.f32 0.0, %v4428
      %4430 = vmatmul.bf16.gmra.mxu0 %v4072
      %v4431 = vpop.f32.mrf.mxu0
      %v4432 = vadd.f32 0.0, %v4431
      %v4433 = vpop.f32.mrf.mxu0
      %v4434 = vadd.f32 0.0, %v4433
      %4435 = vmatmul.bf16.gmra.mxu0 %v4075
      %v4436 = vpop.f32.mrf.mxu0
      %v4437 = vadd.f32 0.0, %v4436
      %v4438 = vpop.f32.mrf.mxu0
      %v4439 = vadd.f32 0.0, %v4438
      %4440 = vmatmul.bf16.gmra.mxu0 %v4078
      %v4441 = vpop.f32.mrf.mxu0
      %v4442 = vadd.f32 0.0, %v4441
      %v4443 = vpop.f32.mrf.mxu0
      %v4444 = vadd.f32 0.0, %v4443
      %4445 = vmatmul.bf16.gmra.mxu0 %v4081
      %v4446 = vpop.f32.mrf.mxu0
      %v4447 = vadd.f32 0.0, %v4446
      %v4448 = vpop.f32.mrf.mxu0
      %v4449 = vadd.f32 0.0, %v4448
      %4450 = vmatmul.bf16.gmra.mxu0 %v4084
      %v4451 = vpop.f32.mrf.mxu0
      %v4452 = vadd.f32 0.0, %v4451
      %v4453 = vpop.f32.mrf.mxu0
      %v4454 = vadd.f32 0.0, %v4453
      %4455 = vmatmul.bf16.gmra.mxu0 %v4087
      %v4456 = vpop.f32.mrf.mxu0
      %v4457 = vadd.f32 0.0, %v4456
      %v4458 = vpop.f32.mrf.mxu0
      %v4459 = vadd.f32 0.0, %v4458
      %4460 = vmatmul.bf16.gmra.mxu0 %v4090
      %v4461 = vpop.f32.mrf.mxu0
      %v4462 = vadd.f32 0.0, %v4461
      %v4463 = vpop.f32.mrf.mxu0
      %v4464 = vadd.f32 0.0, %v4463
      %4465 = vmatmul.bf16.gmra.mxu0 %v4093
      %v4466 = vpop.f32.mrf.mxu0
      %v4467 = vadd.f32 0.0, %v4466
      %v4468 = vpop.f32.mrf.mxu0
      %v4469 = vadd.f32 0.0, %v4468
      %4470 = vmatmul.bf16.gmra.mxu0 %v4096
      %v4471 = vpop.f32.mrf.mxu0
      %v4472 = vadd.f32 0.0, %v4471
      %v4473 = vpop.f32.mrf.mxu0
      %v4474 = vadd.f32 0.0, %v4473
      %4475 = vdwg.mxu0
      %4476 = vmatpush.bf16.msra.mxu0 %v4321
      %4477 = vmatpush.bf16.msra.mxu0 %v4319
      %4478 = vmatpush.bf16.msra.mxu0 %v4317
      %4479 = vmatpush.bf16.msra.mxu0 %v4315
      %4480 = vmatpush.bf16.msra.mxu0 %v4313
      %4481 = vmatpush.bf16.msra.mxu0 %v4311
      %4482 = vmatpush.bf16.msra.mxu0 %v4309
      %4483 = vmatpush.bf16.msra.mxu0 %v4307
      %4484 = vmatmul.bf16.gmra.mxu0 %v4052
      %v4485 = vpop.f32.mrf.mxu0
      %v4486 = vadd.f32 %v4397, %v4485
      %v4487 = vpop.f32.mrf.mxu0
      %v4488 = vadd.f32 %v4399, %v4487
      %4489 = vmatmul.bf16.gmra.mxu0 %v4055
      %v4490 = vpop.f32.mrf.mxu0
      %v4491 = vadd.f32 %v4402, %v4490
      %v4492 = vpop.f32.mrf.mxu0
      %v4493 = vadd.f32 %v4404, %v4492
      %4494 = vmatmul.bf16.gmra.mxu0 %v4058
      %v4495 = vpop.f32.mrf.mxu0
      %v4496 = vadd.f32 %v4407, %v4495
      %v4497 = vpop.f32.mrf.mxu0
      %v4498 = vadd.f32 %v4409, %v4497
      %4499 = vmatmul.bf16.gmra.mxu0 %v4061
      %v4500 = vpop.f32.mrf.mxu0
      %v4501 = vadd.f32 %v4412, %v4500
      %v4502 = vpop.f32.mrf.mxu0
      %v4503 = vadd.f32 %v4414, %v4502
      %4504 = vmatmul.bf16.gmra.mxu0 %v4064
      %v4505 = vpop.f32.mrf.mxu0
      %v4506 = vadd.f32 %v4417, %v4505
      %v4507 = vpop.f32.mrf.mxu0
      %v4508 = vadd.f32 %v4419, %v4507
      %4509 = vmatmul.bf16.gmra.mxu0 %v4067
      %v4510 = vpop.f32.mrf.mxu0
      %v4511 = vadd.f32 %v4422, %v4510
      %v4512 = vpop.f32.mrf.mxu0
      %v4513 = vadd.f32 %v4424, %v4512
      %4514 = vmatmul.bf16.gmra.mxu0 %v4070
      %v4515 = vpop.f32.mrf.mxu0
      %v4516 = vadd.f32 %v4427, %v4515
      %v4517 = vpop.f32.mrf.mxu0
      %v4518 = vadd.f32 %v4429, %v4517
      %4519 = vmatmul.bf16.gmra.mxu0 %v4073
      %v4520 = vpop.f32.mrf.mxu0
      %v4521 = vadd.f32 %v4432, %v4520
      %v4522 = vpop.f32.mrf.mxu0
      %v4523 = vadd.f32 %v4434, %v4522
      %4524 = vmatmul.bf16.gmra.mxu0 %v4076
      %v4525 = vpop.f32.mrf.mxu0
      %v4526 = vadd.f32 %v4437, %v4525
      %v4527 = vpop.f32.mrf.mxu0
      %v4528 = vadd.f32 %v4439, %v4527
      %4529 = vmatmul.bf16.gmra.mxu0 %v4079
      %v4530 = vpop.f32.mrf.mxu0
      %v4531 = vadd.f32 %v4442, %v4530
      %v4532 = vpop.f32.mrf.mxu0
      %v4533 = vadd.f32 %v4444, %v4532
      %4534 = vmatmul.bf16.gmra.mxu0 %v4082
      %v4535 = vpop.f32.mrf.mxu0
      %v4536 = vadd.f32 %v4447, %v4535
      %v4537 = vpop.f32.mrf.mxu0
      %v4538 = vadd.f32 %v4449, %v4537
      %4539 = vmatmul.bf16.gmra.mxu0 %v4085
      %v4540 = vpop.f32.mrf.mxu0
      %v4541 = vadd.f32 %v4452, %v4540
      %v4542 = vpop.f32.mrf.mxu0
      %v4543 = vadd.f32 %v4454, %v4542
      %4544 = vmatmul.bf16.gmra.mxu0 %v4088
      %v4545 = vpop.f32.mrf.mxu0
      %v4546 = vadd.f32 %v4457, %v4545
      %v4547 = vpop.f32.mrf.mxu0
      %v4548 = vadd.f32 %v4459, %v4547
      %4549 = vmatmul.bf16.gmra.mxu0 %v4091
      %v4550 = vpop.f32.mrf.mxu0
      %v4551 = vadd.f32 %v4462, %v4550
      %v4552 = vpop.f32.mrf.mxu0
      %v4553 = vadd.f32 %v4464, %v4552
      %4554 = vmatmul.bf16.gmra.mxu0 %v4094
      %v4555 = vpop.f32.mrf.mxu0
      %v4556 = vadd.f32 %v4467, %v4555
      %v4557 = vpop.f32.mrf.mxu0
      %v4558 = vadd.f32 %v4469, %v4557
      %4559 = vmatmul.bf16.gmra.mxu0 %v4097
      %v4560 = vpop.f32.mrf.mxu0
      %v4561 = vadd.f32 %v4472, %v4560
      %v4562 = vpop.f32.mrf.mxu0
      %v4563 = vadd.f32 %v4474, %v4562
      %4564 = vdwg.mxu0
      %4565 = vmatpush.bf16.msra.mxu0 %v4337
      %4566 = vmatpush.bf16.msra.mxu0 %v4335
      %4567 = vmatpush.bf16.msra.mxu0 %v4333
      %4568 = vmatpush.bf16.msra.mxu0 %v4331
      %4569 = vmatpush.bf16.msra.mxu0 %v4329
      %4570 = vmatpush.bf16.msra.mxu0 %v4327
      %4571 = vmatpush.bf16.msra.mxu0 %v4325
      %4572 = vmatpush.bf16.msra.mxu0 %v4323
      %4573 = vmatmul.bf16.gmra.mxu0 %v4053
      %v4574 = vpop.f32.mrf.mxu0
      %v4575 = vadd.f32 %v4486, %v4574
      %v4576 = vpop.f32.mrf.mxu0
      %v4577 = vadd.f32 %v4488, %v4576
      %4578 = vmatmul.bf16.gmra.mxu0 %v4056
      %v4579 = vpop.f32.mrf.mxu0
      %v4580 = vadd.f32 %v4491, %v4579
      %v4581 = vpop.f32.mrf.mxu0
      %v4582 = vadd.f32 %v4493, %v4581
      %4583 = vmatmul.bf16.gmra.mxu0 %v4059
      %v4584 = vpop.f32.mrf.mxu0
      %v4585 = vadd.f32 %v4496, %v4584
      %v4586 = vpop.f32.mrf.mxu0
      %v4587 = vadd.f32 %v4498, %v4586
      %4588 = vmatmul.bf16.gmra.mxu0 %v4062
      %v4589 = vpop.f32.mrf.mxu0
      %v4590 = vadd.f32 %v4501, %v4589
      %v4591 = vpop.f32.mrf.mxu0
      %v4592 = vadd.f32 %v4503, %v4591
      %4593 = vmatmul.bf16.gmra.mxu0 %v4065
      %v4594 = vpop.f32.mrf.mxu0
      %v4595 = vadd.f32 %v4506, %v4594
      %v4596 = vpop.f32.mrf.mxu0
      %v4597 = vadd.f32 %v4508, %v4596
      %4598 = vmatmul.bf16.gmra.mxu0 %v4068
      %v4599 = vpop.f32.mrf.mxu0
      %v4600 = vadd.f32 %v4511, %v4599
      %v4601 = vpop.f32.mrf.mxu0
      %v4602 = vadd.f32 %v4513, %v4601
      %4603 = vmatmul.bf16.gmra.mxu0 %v4071
      %v4604 = vpop.f32.mrf.mxu0
      %v4605 = vadd.f32 %v4516, %v4604
      %v4606 = vpop.f32.mrf.mxu0
      %v4607 = vadd.f32 %v4518, %v4606
      %4608 = vmatmul.bf16.gmra.mxu0 %v4074
      %v4609 = vpop.f32.mrf.mxu0
      %v4610 = vadd.f32 %v4521, %v4609
      %v4611 = vpop.f32.mrf.mxu0
      %v4612 = vadd.f32 %v4523, %v4611
      %4613 = vmatmul.bf16.gmra.mxu0 %v4077
      %v4614 = vpop.f32.mrf.mxu0
      %v4615 = vadd.f32 %v4526, %v4614
      %v4616 = vpop.f32.mrf.mxu0
      %v4617 = vadd.f32 %v4528, %v4616
      %4618 = vmatmul.bf16.gmra.mxu0 %v4080
      %v4619 = vpop.f32.mrf.mxu0
      %v4620 = vadd.f32 %v4531, %v4619
      %v4621 = vpop.f32.mrf.mxu0
      %v4622 = vadd.f32 %v4533, %v4621
      %4623 = vmatmul.bf16.gmra.mxu0 %v4083
      %v4624 = vpop.f32.mrf.mxu0
      %v4625 = vadd.f32 %v4536, %v4624
      %v4626 = vpop.f32.mrf.mxu0
      %v4627 = vadd.f32 %v4538, %v4626
      %4628 = vmatmul.bf16.gmra.mxu0 %v4086
      %v4629 = vpop.f32.mrf.mxu0
      %v4630 = vadd.f32 %v4541, %v4629
      %v4631 = vpop.f32.mrf.mxu0
      %v4632 = vadd.f32 %v4543, %v4631
      %4633 = vmatmul.bf16.gmra.mxu0 %v4089
      %v4634 = vpop.f32.mrf.mxu0
      %v4635 = vadd.f32 %v4546, %v4634
      %v4636 = vpop.f32.mrf.mxu0
      %v4637 = vadd.f32 %v4548, %v4636
      %4638 = vmatmul.bf16.gmra.mxu0 %v4092
      %v4639 = vpop.f32.mrf.mxu0
      %v4640 = vadd.f32 %v4551, %v4639
      %v4641 = vpop.f32.mrf.mxu0
      %v4642 = vadd.f32 %v4553, %v4641
      %4643 = vmatmul.bf16.gmra.mxu0 %v4095
      %v4644 = vpop.f32.mrf.mxu0
      %v4645 = vadd.f32 %v4556, %v4644
      %v4646 = vpop.f32.mrf.mxu0
      %v4647 = vadd.f32 %v4558, %v4646
      %4648 = vmatmul.bf16.gmra.mxu0 %v4098
      %v4649 = vpop.f32.mrf.mxu0
      %v4650 = vadd.f32 %v4561, %v4649
      %v4651 = vpop.f32.mrf.mxu0
      %v4652 = vadd.f32 %v4563, %v4651
      %4653 = vdwg.mxu0
      %4654 = vmatpush.bf16.msra.mxu0 %v4306
      %4655 = vmatpush.bf16.msra.mxu0 %v4304
      %4656 = vmatpush.bf16.msra.mxu0 %v4302
      %4657 = vmatpush.bf16.msra.mxu0 %v4300
      %4658 = vmatpush.bf16.msra.mxu0 %v4298
      %4659 = vmatpush.bf16.msra.mxu0 %v4296
      %4660 = vmatpush.bf16.msra.mxu0 %v4294
      %4661 = vmatpush.bf16.msra.mxu0 %v4292
      %4662 = vmatmul.bf16.gmra.mxu0 %v4051
      %v4663 = vpop.f32.mrf.mxu0
      %v4664 = vadd.f32 0.0, %v4663
      %v4665 = vpop.f32.mrf.mxu0
      %v4666 = vadd.f32 0.0, %v4665
      %4667 = vmatmul.bf16.gmra.mxu0 %v4054
      %v4668 = vpop.f32.mrf.mxu0
      %v4669 = vadd.f32 0.0, %v4668
      %v4670 = vpop.f32.mrf.mxu0
      %v4671 = vadd.f32 0.0, %v4670
      %4672 = vmatmul.bf16.gmra.mxu0 %v4057
      %v4673 = vpop.f32.mrf.mxu0
      %v4674 = vadd.f32 0.0, %v4673
      %v4675 = vpop.f32.mrf.mxu0
      %v4676 = vadd.f32 0.0, %v4675
      %4677 = vmatmul.bf16.gmra.mxu0 %v4060
      %v4678 = vpop.f32.mrf.mxu0
      %v4679 = vadd.f32 0.0, %v4678
      %v4680 = vpop.f32.mrf.mxu0
      %v4681 = vadd.f32 0.0, %v4680
      %4682 = vmatmul.bf16.gmra.mxu0 %v4063
      %v4683 = vpop.f32.mrf.mxu0
      %v4684 = vadd.f32 0.0, %v4683
      %v4685 = vpop.f32.mrf.mxu0
      %v4686 = vadd.f32 0.0, %v4685
      %4687 = vmatmul.bf16.gmra.mxu0 %v4066
      %v4688 = vpop.f32.mrf.mxu0
      %v4689 = vadd.f32 0.0, %v4688
      %v4690 = vpop.f32.mrf.mxu0
      %v4691 = vadd.f32 0.0, %v4690
      %4692 = vmatmul.bf16.gmra.mxu0 %v4069
      %v4693 = vpop.f32.mrf.mxu0
      %v4694 = vadd.f32 0.0, %v4693
      %v4695 = vpop.f32.mrf.mxu0
      %v4696 = vadd.f32 0.0, %v4695
      %4697 = vmatmul.bf16.gmra.mxu0 %v4072
      %v4698 = vpop.f32.mrf.mxu0
      %v4699 = vadd.f32 0.0, %v4698
      %v4700 = vpop.f32.mrf.mxu0
      %v4701 = vadd.f32 0.0, %v4700
      %4702 = vmatmul.bf16.gmra.mxu0 %v4075
      %v4703 = vpop.f32.mrf.mxu0
      %v4704 = vadd.f32 0.0, %v4703
      %v4705 = vpop.f32.mrf.mxu0
      %v4706 = vadd.f32 0.0, %v4705
      %4707 = vmatmul.bf16.gmra.mxu0 %v4078
      %v4708 = vpop.f32.mrf.mxu0
      %v4709 = vadd.f32 0.0, %v4708
      %v4710 = vpop.f32.mrf.mxu0
      %v4711 = vadd.f32 0.0, %v4710
      %4712 = vmatmul.bf16.gmra.mxu0 %v4081
      %v4713 = vpop.f32.mrf.mxu0
      %v4714 = vadd.f32 0.0, %v4713
      %v4715 = vpop.f32.mrf.mxu0
      %v4716 = vadd.f32 0.0, %v4715
      %4717 = vmatmul.bf16.gmra.mxu0 %v4084
      %v4718 = vpop.f32.mrf.mxu0
      %v4719 = vadd.f32 0.0, %v4718
      %v4720 = vpop.f32.mrf.mxu0
      %v4721 = vadd.f32 0.0, %v4720
      %4722 = vmatmul.bf16.gmra.mxu0 %v4087
      %v4723 = vpop.f32.mrf.mxu0
      %v4724 = vadd.f32 0.0, %v4723
      %v4725 = vpop.f32.mrf.mxu0
      %v4726 = vadd.f32 0.0, %v4725
      %4727 = vmatmul.bf16.gmra.mxu0 %v4090
      %v4728 = vpop.f32.mrf.mxu0
      %v4729 = vadd.f32 0.0, %v4728
      %v4730 = vpop.f32.mrf.mxu0
      %v4731 = vadd.f32 0.0, %v4730
      %4732 = vmatmul.bf16.gmra.mxu0 %v4093
      %v4733 = vpop.f32.mrf.mxu0
      %v4734 = vadd.f32 0.0, %v4733
      %v4735 = vpop.f32.mrf.mxu0
      %v4736 = vadd.f32 0.0, %v4735
      %4737 = vmatmul.bf16.gmra.mxu0 %v4096
      %v4738 = vpop.f32.mrf.mxu0
      %v4739 = vadd.f32 0.0, %v4738
      %v4740 = vpop.f32.mrf.mxu0
      %v4741 = vadd.f32 0.0, %v4740
      %4742 = vdwg.mxu0
      %4743 = vmatpush.bf16.msra.mxu0 %v4322
      %4744 = vmatpush.bf16.msra.mxu0 %v4320
      %4745 = vmatpush.bf16.msra.mxu0 %v4318
      %4746 = vmatpush.bf16.msra.mxu0 %v4316
      %4747 = vmatpush.bf16.msra.mxu0 %v4314
      %4748 = vmatpush.bf16.msra.mxu0 %v4312
      %4749 = vmatpush.bf16.msra.mxu0 %v4310
      %4750 = vmatpush.bf16.msra.mxu0 %v4308
      %4751 = vmatmul.bf16.gmra.mxu0 %v4052
      %v4752 = vpop.f32.mrf.mxu0
      %v4753 = vadd.f32 %v4664, %v4752
      %v4754 = vpop.f32.mrf.mxu0
      %v4755 = vadd.f32 %v4666, %v4754
      %4756 = vmatmul.bf16.gmra.mxu0 %v4055
      %v4757 = vpop.f32.mrf.mxu0
      %v4758 = vadd.f32 %v4669, %v4757
      %v4759 = vpop.f32.mrf.mxu0
      %v4760 = vadd.f32 %v4671, %v4759
      %4761 = vmatmul.bf16.gmra.mxu0 %v4058
      %v4762 = vpop.f32.mrf.mxu0
      %v4763 = vadd.f32 %v4674, %v4762
      %v4764 = vpop.f32.mrf.mxu0
      %v4765 = vadd.f32 %v4676, %v4764
      %4766 = vmatmul.bf16.gmra.mxu0 %v4061
      %v4767 = vpop.f32.mrf.mxu0
      %v4768 = vadd.f32 %v4679, %v4767
      %v4769 = vpop.f32.mrf.mxu0
      %v4770 = vadd.f32 %v4681, %v4769
      %4771 = vmatmul.bf16.gmra.mxu0 %v4064
      %v4772 = vpop.f32.mrf.mxu0
      %v4773 = vadd.f32 %v4684, %v4772
      %v4774 = vpop.f32.mrf.mxu0
      %v4775 = vadd.f32 %v4686, %v4774
      %4776 = vmatmul.bf16.gmra.mxu0 %v4067
      %v4777 = vpop.f32.mrf.mxu0
      %v4778 = vadd.f32 %v4689, %v4777
      %v4779 = vpop.f32.mrf.mxu0
      %v4780 = vadd.f32 %v4691, %v4779
      %4781 = vmatmul.bf16.gmra.mxu0 %v4070
      %v4782 = vpop.f32.mrf.mxu0
      %v4783 = vadd.f32 %v4694, %v4782
      %v4784 = vpop.f32.mrf.mxu0
      %v4785 = vadd.f32 %v4696, %v4784
      %4786 = vmatmul.bf16.gmra.mxu0 %v4073
      %v4787 = vpop.f32.mrf.mxu0
      %v4788 = vadd.f32 %v4699, %v4787
      %v4789 = vpop.f32.mrf.mxu0
      %v4790 = vadd.f32 %v4701, %v4789
      %4791 = vmatmul.bf16.gmra.mxu0 %v4076
      %v4792 = vpop.f32.mrf.mxu0
      %v4793 = vadd.f32 %v4704, %v4792
      %v4794 = vpop.f32.mrf.mxu0
      %v4795 = vadd.f32 %v4706, %v4794
      %4796 = vmatmul.bf16.gmra.mxu0 %v4079
      %v4797 = vpop.f32.mrf.mxu0
      %v4798 = vadd.f32 %v4709, %v4797
      %v4799 = vpop.f32.mrf.mxu0
      %v4800 = vadd.f32 %v4711, %v4799
      %4801 = vmatmul.bf16.gmra.mxu0 %v4082
      %v4802 = vpop.f32.mrf.mxu0
      %v4803 = vadd.f32 %v4714, %v4802
      %v4804 = vpop.f32.mrf.mxu0
      %v4805 = vadd.f32 %v4716, %v4804
      %4806 = vmatmul.bf16.gmra.mxu0 %v4085
      %v4807 = vpop.f32.mrf.mxu0
      %v4808 = vadd.f32 %v4719, %v4807
      %v4809 = vpop.f32.mrf.mxu0
      %v4810 = vadd.f32 %v4721, %v4809
      %4811 = vmatmul.bf16.gmra.mxu0 %v4088
      %v4812 = vpop.f32.mrf.mxu0
      %v4813 = vadd.f32 %v4724, %v4812
      %v4814 = vpop.f32.mrf.mxu0
      %v4815 = vadd.f32 %v4726, %v4814
      %4816 = vmatmul.bf16.gmra.mxu0 %v4091
      %v4817 = vpop.f32.mrf.mxu0
      %v4818 = vadd.f32 %v4729, %v4817
      %v4819 = vpop.f32.mrf.mxu0
      %v4820 = vadd.f32 %v4731, %v4819
      %4821 = vmatmul.bf16.gmra.mxu0 %v4094
      %v4822 = vpop.f32.mrf.mxu0
      %v4823 = vadd.f32 %v4734, %v4822
      %v4824 = vpop.f32.mrf.mxu0
      %v4825 = vadd.f32 %v4736, %v4824
      %4826 = vmatmul.bf16.gmra.mxu0 %v4097
      %v4827 = vpop.f32.mrf.mxu0
      %v4828 = vadd.f32 %v4739, %v4827
      %v4829 = vpop.f32.mrf.mxu0
      %v4830 = vadd.f32 %v4741, %v4829
      %4831 = vdwg.mxu0
      %4832 = vmatpush.bf16.msra.mxu0 %v4338
      %4833 = vmatpush.bf16.msra.mxu0 %v4336
      %4834 = vmatpush.bf16.msra.mxu0 %v4334
      %4835 = vmatpush.bf16.msra.mxu0 %v4332
      %4836 = vmatpush.bf16.msra.mxu0 %v4330
      %4837 = vmatpush.bf16.msra.mxu0 %v4328
      %4838 = vmatpush.bf16.msra.mxu0 %v4326
      %4839 = vmatpush.bf16.msra.mxu0 %v4324
      %4840 = vmatmul.bf16.gmra.mxu0 %v4053
      %v4841 = vpop.f32.mrf.mxu0
      %v4842 = vadd.f32 %v4753, %v4841
      %v4843 = vpop.f32.mrf.mxu0
      %v4844 = vadd.f32 %v4755, %v4843
      %4845 = vmatmul.bf16.gmra.mxu0 %v4056
      %v4846 = vpop.f32.mrf.mxu0
      %v4847 = vadd.f32 %v4758, %v4846
      %v4848 = vpop.f32.mrf.mxu0
      %v4849 = vadd.f32 %v4760, %v4848
      %4850 = vmatmul.bf16.gmra.mxu0 %v4059
      %v4851 = vpop.f32.mrf.mxu0
      %v4852 = vadd.f32 %v4763, %v4851
      %v4853 = vpop.f32.mrf.mxu0
      %v4854 = vadd.f32 %v4765, %v4853
      %4855 = vmatmul.bf16.gmra.mxu0 %v4062
      %v4856 = vpop.f32.mrf.mxu0
      %v4857 = vadd.f32 %v4768, %v4856
      %v4858 = vpop.f32.mrf.mxu0
      %v4859 = vadd.f32 %v4770, %v4858
      %4860 = vmatmul.bf16.gmra.mxu0 %v4065
      %v4861 = vpop.f32.mrf.mxu0
      %v4862 = vadd.f32 %v4773, %v4861
      %v4863 = vpop.f32.mrf.mxu0
      %v4864 = vadd.f32 %v4775, %v4863
      %4865 = vmatmul.bf16.gmra.mxu0 %v4068
      %v4866 = vpop.f32.mrf.mxu0
      %v4867 = vadd.f32 %v4778, %v4866
      %v4868 = vpop.f32.mrf.mxu0
      %v4869 = vadd.f32 %v4780, %v4868
      %4870 = vmatmul.bf16.gmra.mxu0 %v4071
      %v4871 = vpop.f32.mrf.mxu0
      %v4872 = vadd.f32 %v4783, %v4871
      %v4873 = vpop.f32.mrf.mxu0
      %v4874 = vadd.f32 %v4785, %v4873
      %4875 = vmatmul.bf16.gmra.mxu0 %v4074
      %v4876 = vpop.f32.mrf.mxu0
      %v4877 = vadd.f32 %v4788, %v4876
      %v4878 = vpop.f32.mrf.mxu0
      %v4879 = vadd.f32 %v4790, %v4878
      %4880 = vmatmul.bf16.gmra.mxu0 %v4077
      %v4881 = vpop.f32.mrf.mxu0
      %v4882 = vadd.f32 %v4793, %v4881
      %v4883 = vpop.f32.mrf.mxu0
      %v4884 = vadd.f32 %v4795, %v4883
      %4885 = vmatmul.bf16.gmra.mxu0 %v4080
      %v4886 = vpop.f32.mrf.mxu0
      %v4887 = vadd.f32 %v4798, %v4886
      %v4888 = vpop.f32.mrf.mxu0
      %v4889 = vadd.f32 %v4800, %v4888
      %4890 = vmatmul.bf16.gmra.mxu0 %v4083
      %v4891 = vpop.f32.mrf.mxu0
      %v4892 = vadd.f32 %v4803, %v4891
      %v4893 = vpop.f32.mrf.mxu0
      %v4894 = vadd.f32 %v4805, %v4893
      %4895 = vmatmul.bf16.gmra.mxu0 %v4086
      %v4896 = vpop.f32.mrf.mxu0
      %v4897 = vadd.f32 %v4808, %v4896
      %v4898 = vpop.f32.mrf.mxu0
      %v4899 = vadd.f32 %v4810, %v4898
      %4900 = vmatmul.bf16.gmra.mxu0 %v4089
      %v4901 = vpop.f32.mrf.mxu0
      %v4902 = vadd.f32 %v4813, %v4901
      %v4903 = vpop.f32.mrf.mxu0
      %v4904 = vadd.f32 %v4815, %v4903
      %4905 = vmatmul.bf16.gmra.mxu0 %v4092
      %v4906 = vpop.f32.mrf.mxu0
      %v4907 = vadd.f32 %v4818, %v4906
      %v4908 = vpop.f32.mrf.mxu0
      %v4909 = vadd.f32 %v4820, %v4908
      %4910 = vmatmul.bf16.gmra.mxu0 %v4095
      %v4911 = vpop.f32.mrf.mxu0
      %v4912 = vadd.f32 %v4823, %v4911
      %v4913 = vpop.f32.mrf.mxu0
      %v4914 = vadd.f32 %v4825, %v4913
      %4915 = vmatmul.bf16.gmra.mxu0 %v4098
      %v4916 = vpop.f32.mrf.mxu0
      %v4917 = vadd.f32 %v4828, %v4916
      %v4918 = vpop.f32.mrf.mxu0
      %v4919 = vadd.f32 %v4830, %v4918
      %4920 = vdwg.mxu0
      %v4921 = vadd.f32 %v3431, %v4575
      %v4922 = vadd.f32 %v3698, %v4842
      %v4923 = vadd.f32 %v3433, %v4577
      %v4924 = vadd.f32 %v3700, %v4844
      %v4925 = vadd.f32 %v3436, %v4580
      %v4926 = vadd.f32 %v3703, %v4847
      %v4927 = vadd.f32 %v3438, %v4582
      %v4928 = vadd.f32 %v3705, %v4849
      %v4929 = vadd.f32 %v3441, %v4585
      %v4930 = vadd.f32 %v3708, %v4852
      %v4931 = vadd.f32 %v3443, %v4587
      %v4932 = vadd.f32 %v3710, %v4854
      %v4933 = vadd.f32 %v3446, %v4590
      %v4934 = vadd.f32 %v3713, %v4857
      %v4935 = vadd.f32 %v3448, %v4592
      %v4936 = vadd.f32 %v3715, %v4859
      %v4937 = vadd.f32 %v3451, %v4595
      %v4938 = vadd.f32 %v3718, %v4862
      %v4939 = vadd.f32 %v3453, %v4597
      %v4940 = vadd.f32 %v3720, %v4864
      %v4941 = vadd.f32 %v3456, %v4600
      %v4942 = vadd.f32 %v3723, %v4867
      %v4943 = vadd.f32 %v3458, %v4602
      %v4944 = vadd.f32 %v3725, %v4869
      %v4945 = vadd.f32 %v3461, %v4605
      %v4946 = vadd.f32 %v3728, %v4872
      %v4947 = vadd.f32 %v3463, %v4607
      %v4948 = vadd.f32 %v3730, %v4874
      %v4949 = vadd.f32 %v3466, %v4610
      %v4950 = vadd.f32 %v3733, %v4877
      %v4951 = vadd.f32 %v3468, %v4612
      %v4952 = vadd.f32 %v3735, %v4879
      %v4953 = vadd.f32 %v3471, %v4615
      %v4954 = vadd.f32 %v3738, %v4882
      %v4955 = vadd.f32 %v3473, %v4617
      %v4956 = vadd.f32 %v3740, %v4884
      %v4957 = vadd.f32 %v3476, %v4620
      %v4958 = vadd.f32 %v3743, %v4887
      %v4959 = vadd.f32 %v3478, %v4622
      %v4960 = vadd.f32 %v3745, %v4889
      %v4961 = vadd.f32 %v3481, %v4625
      %v4962 = vadd.f32 %v3748, %v4892
      %v4963 = vadd.f32 %v3483, %v4627
      %v4964 = vadd.f32 %v3750, %v4894
      %v4965 = vadd.f32 %v3486, %v4630
      %v4966 = vadd.f32 %v3753, %v4897
      %v4967 = vadd.f32 %v3488, %v4632
      %v4968 = vadd.f32 %v3755, %v4899
      %v4969 = vadd.f32 %v3491, %v4635
      %v4970 = vadd.f32 %v3758, %v4902
      %v4971 = vadd.f32 %v3493, %v4637
      %v4972 = vadd.f32 %v3760, %v4904
      %v4973 = vadd.f32 %v3496, %v4640
      %v4974 = vadd.f32 %v3763, %v4907
      %v4975 = vadd.f32 %v3498, %v4642
      %v4976 = vadd.f32 %v3765, %v4909
      %v4977 = vadd.f32 %v3501, %v4645
      %v4978 = vadd.f32 %v3768, %v4912
      %v4979 = vadd.f32 %v3503, %v4647
      %v4980 = vadd.f32 %v3770, %v4914
      %v4981 = vadd.f32 %v3506, %v4650
      %v4982 = vadd.f32 %v3773, %v4917
      %v4983 = vadd.f32 %v3508, %v4652
      %v4984 = vadd.f32 %v3775, %v4919
      %v4985 = vld [vmem:[%s6] sm:$0x3]
      %v4987 = vperm.slane %v4985, 0
      %v4988 = vperm.slane %v4985, 1
      %v4991 = vadd.f32 %v4921, %v4987
      %v4992 = vadd.f32 %v4922, %v4988
      %v4993 = vadd.f32 %v4923, %v4987
      %v4994 = vadd.f32 %v4924, %v4988
      %v4995 = vadd.f32 %v4925, %v4987
      %v4996 = vadd.f32 %v4926, %v4988
      %v4997 = vadd.f32 %v4927, %v4987
      %v4998 = vadd.f32 %v4928, %v4988
      %v4999 = vadd.f32 %v4929, %v4987
      %v5000 = vadd.f32 %v4930, %v4988
      %v5001 = vadd.f32 %v4931, %v4987
      %v5002 = vadd.f32 %v4932, %v4988
      %v5003 = vadd.f32 %v4933, %v4987
      %v5004 = vadd.f32 %v4934, %v4988
      %v5005 = vadd.f32 %v4935, %v4987
      %v5006 = vadd.f32 %v4936, %v4988
      %v5007 = vadd.f32 %v4937, %v4987
      %v5008 = vadd.f32 %v4938, %v4988
      %v5009 = vadd.f32 %v4939, %v4987
      %v5010 = vadd.f32 %v4940, %v4988
      %v5011 = vadd.f32 %v4941, %v4987
      %v5012 = vadd.f32 %v4942, %v4988
      %v5013 = vadd.f32 %v4943, %v4987
      %v5014 = vadd.f32 %v4944, %v4988
      %v5015 = vadd.f32 %v4945, %v4987
      %v5016 = vadd.f32 %v4946, %v4988
      %v5017 = vadd.f32 %v4947, %v4987
      %v5018 = vadd.f32 %v4948, %v4988
      %v5019 = vadd.f32 %v4949, %v4987
      %v5020 = vadd.f32 %v4950, %v4988
      %v5021 = vadd.f32 %v4951, %v4987
      %v5022 = vadd.f32 %v4952, %v4988
      %v5023 = vadd.f32 %v4953, %v4987
      %v5024 = vadd.f32 %v4954, %v4988
      %v5025 = vadd.f32 %v4955, %v4987
      %v5026 = vadd.f32 %v4956, %v4988
      %v5027 = vadd.f32 %v4957, %v4987
      %v5028 = vadd.f32 %v4958, %v4988
      %v5029 = vadd.f32 %v4959, %v4987
      %v5030 = vadd.f32 %v4960, %v4988
      %v5031 = vadd.f32 %v4961, %v4987
      %v5032 = vadd.f32 %v4962, %v4988
      %v5033 = vadd.f32 %v4963, %v4987
      %v5034 = vadd.f32 %v4964, %v4988
      %v5035 = vadd.f32 %v4965, %v4987
      %v5036 = vadd.f32 %v4966, %v4988
      %v5037 = vadd.f32 %v4967, %v4987
      %v5038 = vadd.f32 %v4968, %v4988
      %v5039 = vadd.f32 %v4969, %v4987
      %v5040 = vadd.f32 %v4970, %v4988
      %v5041 = vadd.f32 %v4971, %v4987
      %v5042 = vadd.f32 %v4972, %v4988
      %v5043 = vadd.f32 %v4973, %v4987
      %v5044 = vadd.f32 %v4974, %v4988
      %v5045 = vadd.f32 %v4975, %v4987
      %v5046 = vadd.f32 %v4976, %v4988
      %v5047 = vadd.f32 %v4977, %v4987
      %v5048 = vadd.f32 %v4978, %v4988
      %v5049 = vadd.f32 %v4979, %v4987
      %v5050 = vadd.f32 %v4980, %v4988
      %v5051 = vadd.f32 %v4981, %v4987
      %v5052 = vadd.f32 %v4982, %v4988
      %v5053 = vadd.f32 %v4983, %v4987
      %v5054 = vadd.f32 %v4984, %v4988
      %v5055 = vld [vmem:[%s348] sm:$0x1]
      %v5056 = vld [vmem:[%s348 + $0x1] sm:$0x1]
      %v5057 = vld [vmem:[%s343] sm:$0xff]
      %v5058 = vld [vmem:[%s343 + $0x8] sm:$0xff]
      %v5059 = vld [vmem:[%s343 + $0x10] sm:$0xff]
      %v5060 = vld [vmem:[%s343 + $0x18] sm:$0xff]
      %v5061 = vld [vmem:[%s343 + $0x20] sm:$0xff]
      %v5062 = vld [vmem:[%s343 + $0x28] sm:$0xff]
      %v5063 = vld [vmem:[%s343 + $0x30] sm:$0xff]
      %v5064 = vld [vmem:[%s343 + $0x38] sm:$0xff]
      %v5065 = vld [vmem:[%s343 + $0x40] sm:$0xff]
      %v5066 = vld [vmem:[%s343 + $0x48] sm:$0xff]
      %v5067 = vld [vmem:[%s343 + $0x50] sm:$0xff]
      %v5068 = vld [vmem:[%s343 + $0x58] sm:$0xff]
      %v5069 = vld [vmem:[%s343 + $0x60] sm:$0xff]
      %v5070 = vld [vmem:[%s343 + $0x68] sm:$0xff]
      %v5071 = vld [vmem:[%s343 + $0x70] sm:$0xff]
      %v5072 = vld [vmem:[%s343 + $0x78] sm:$0xff]
      %v5073 = vld [vmem:[%s343 + $0x80] sm:$0xff]
      %v5074 = vld [vmem:[%s343 + $0x88] sm:$0xff]
      %v5075 = vld [vmem:[%s343 + $0x90] sm:$0xff]
      %v5076 = vld [vmem:[%s343 + $0x98] sm:$0xff]
      %v5077 = vld [vmem:[%s343 + $0xa0] sm:$0xff]
      %v5078 = vld [vmem:[%s343 + $0xa8] sm:$0xff]
      %v5079 = vld [vmem:[%s343 + $0xb0] sm:$0xff]
      %v5080 = vld [vmem:[%s343 + $0xb8] sm:$0xff]
      %v5081 = vld [vmem:[%s343 + $0xc0] sm:$0xff]
      %v5082 = vld [vmem:[%s343 + $0xc8] sm:$0xff]
      %v5083 = vld [vmem:[%s343 + $0xd0] sm:$0xff]
      %v5084 = vld [vmem:[%s343 + $0xd8] sm:$0xff]
      %v5085 = vld [vmem:[%s343 + $0xe0] sm:$0xff]
      %v5086 = vld [vmem:[%s343 + $0xe8] sm:$0xff]
      %v5087 = vld [vmem:[%s343 + $0xf0] sm:$0xff]
      %v5088 = vld [vmem:[%s343 + $0xf8] sm:$0xff]
      %v5089 = vperm.slane %v5055, 0
      %v5090 = vsub.f32 %v5057, %v5089
      %v5091 = vsub.f32 %v5058, %v5089
      %v5092 = vsub.f32 %v5059, %v5089
      %v5093 = vsub.f32 %v5060, %v5089
      %v5094 = vsub.f32 %v5061, %v5089
      %v5095 = vsub.f32 %v5062, %v5089
      %v5096 = vsub.f32 %v5063, %v5089
      %v5097 = vsub.f32 %v5064, %v5089
      %v5098 = vsub.f32 %v5065, %v5089
      %v5099 = vsub.f32 %v5066, %v5089
      %v5100 = vsub.f32 %v5067, %v5089
      %v5101 = vsub.f32 %v5068, %v5089
      %v5102 = vsub.f32 %v5069, %v5089
      %v5103 = vsub.f32 %v5070, %v5089
      %v5104 = vsub.f32 %v5071, %v5089
      %v5105 = vsub.f32 %v5072, %v5089
      %v5106 = vsub.f32 %v5073, %v5089
      %v5107 = vsub.f32 %v5074, %v5089
      %v5108 = vsub.f32 %v5075, %v5089
      %v5109 = vsub.f32 %v5076, %v5089
      %v5110 = vsub.f32 %v5077, %v5089
      %v5111 = vsub.f32 %v5078, %v5089
      %v5112 = vsub.f32 %v5079, %v5089
      %v5113 = vsub.f32 %v5080, %v5089
      %v5114 = vsub.f32 %v5081, %v5089
      %v5115 = vsub.f32 %v5082, %v5089
      %v5116 = vsub.f32 %v5083, %v5089
      %v5117 = vsub.f32 %v5084, %v5089
      %v5118 = vsub.f32 %v5085, %v5089
      %v5119 = vsub.f32 %v5086, %v5089
      %v5120 = vsub.f32 %v5087, %v5089
      %v5121 = vsub.f32 %v5088, %v5089
      %v5122 = vperm.slane %v5056, 0
      %v5123 = vmul.f32 %v5090, %v5122
      %v5124 = vmul.f32 %v5091, %v5122
      %v5125 = vmul.f32 %v5092, %v5122
      %v5126 = vmul.f32 %v5093, %v5122
      %v5127 = vmul.f32 %v5094, %v5122
      %v5128 = vmul.f32 %v5095, %v5122
      %v5129 = vmul.f32 %v5096, %v5122
      %v5130 = vmul.f32 %v5097, %v5122
      %v5131 = vmul.f32 %v5098, %v5122
      %v5132 = vmul.f32 %v5099, %v5122
      %v5133 = vmul.f32 %v5100, %v5122
      %v5134 = vmul.f32 %v5101, %v5122
      %v5135 = vmul.f32 %v5102, %v5122
      %v5136 = vmul.f32 %v5103, %v5122
      %v5137 = vmul.f32 %v5104, %v5122
      %v5138 = vmul.f32 %v5105, %v5122
      %v5139 = vmul.f32 %v5106, %v5122
      %v5140 = vmul.f32 %v5107, %v5122
      %v5141 = vmul.f32 %v5108, %v5122
      %v5142 = vmul.f32 %v5109, %v5122
      %v5143 = vmul.f32 %v5110, %v5122
      %v5144 = vmul.f32 %v5111, %v5122
      %v5145 = vmul.f32 %v5112, %v5122
      %v5146 = vmul.f32 %v5113, %v5122
      %v5147 = vmul.f32 %v5114, %v5122
      %v5148 = vmul.f32 %v5115, %v5122
      %v5149 = vmul.f32 %v5116, %v5122
      %v5150 = vmul.f32 %v5117, %v5122
      %v5151 = vmul.f32 %v5118, %v5122
      %v5152 = vmul.f32 %v5119, %v5122
      %v5153 = vmul.f32 %v5120, %v5122
      %v5154 = vmul.f32 %v5121, %v5122
      %v5155 = vadd.f32 %v4991, 1.0
      %v5156 = vadd.f32 %v4993, 1.0
      %v5157 = vadd.f32 %v4995, 1.0
      %v5158 = vadd.f32 %v4997, 1.0
      %v5159 = vadd.f32 %v4999, 1.0
      %v5160 = vadd.f32 %v5001, 1.0
      %v5161 = vadd.f32 %v5003, 1.0
      %v5162 = vadd.f32 %v5005, 1.0
      %v5163 = vadd.f32 %v5007, 1.0
      %v5164 = vadd.f32 %v5009, 1.0
      %v5165 = vadd.f32 %v5011, 1.0
      %v5166 = vadd.f32 %v5013, 1.0
      %v5167 = vadd.f32 %v5015, 1.0
      %v5168 = vadd.f32 %v5017, 1.0
      %v5169 = vadd.f32 %v5019, 1.0
      %v5170 = vadd.f32 %v5021, 1.0
      %v5171 = vadd.f32 %v5023, 1.0
      %v5172 = vadd.f32 %v5025, 1.0
      %v5173 = vadd.f32 %v5027, 1.0
      %v5174 = vadd.f32 %v5029, 1.0
      %v5175 = vadd.f32 %v5031, 1.0
      %v5176 = vadd.f32 %v5033, 1.0
      %v5177 = vadd.f32 %v5035, 1.0
      %v5178 = vadd.f32 %v5037, 1.0
      %v5179 = vadd.f32 %v5039, 1.0
      %v5180 = vadd.f32 %v5041, 1.0
      %v5181 = vadd.f32 %v5043, 1.0
      %v5182 = vadd.f32 %v5045, 1.0
      %v5183 = vadd.f32 %v5047, 1.0
      %v5184 = vadd.f32 %v5049, 1.0
      %v5185 = vadd.f32 %v5051, 1.0
      %v5186 = vadd.f32 %v5053, 1.0
      %v5187 = vmul.f32 %v5123, %v5155
      %v5188 = vmul.f32 %v5124, %v5156
      %v5189 = vmul.f32 %v5125, %v5157
      %v5190 = vmul.f32 %v5126, %v5158
      %v5191 = vmul.f32 %v5127, %v5159
      %v5192 = vmul.f32 %v5128, %v5160
      %v5193 = vmul.f32 %v5129, %v5161
      %v5194 = vmul.f32 %v5130, %v5162
      %v5195 = vmul.f32 %v5131, %v5163
      %v5196 = vmul.f32 %v5132, %v5164
      %v5197 = vmul.f32 %v5133, %v5165
      %v5198 = vmul.f32 %v5134, %v5166
      %v5199 = vmul.f32 %v5135, %v5167
      %v5200 = vmul.f32 %v5136, %v5168
      %v5201 = vmul.f32 %v5137, %v5169
      %v5202 = vmul.f32 %v5138, %v5170
      %v5203 = vmul.f32 %v5139, %v5171
      %v5204 = vmul.f32 %v5140, %v5172
      %v5205 = vmul.f32 %v5141, %v5173
      %v5206 = vmul.f32 %v5142, %v5174
      %v5207 = vmul.f32 %v5143, %v5175
      %v5208 = vmul.f32 %v5144, %v5176
      %v5209 = vmul.f32 %v5145, %v5177
      %v5210 = vmul.f32 %v5146, %v5178
      %v5211 = vmul.f32 %v5147, %v5179
      %v5212 = vmul.f32 %v5148, %v5180
      %v5213 = vmul.f32 %v5149, %v5181
      %v5214 = vmul.f32 %v5150, %v5182
      %v5215 = vmul.f32 %v5151, %v5183
      %v5216 = vmul.f32 %v5152, %v5184
      %v5217 = vmul.f32 %v5153, %v5185
      %v5218 = vmul.f32 %v5154, %v5186
      %v5219 = vadd.f32 %v5187, %v4992
      %v5220 = vadd.f32 %v5188, %v4994
      %v5221 = vadd.f32 %v5189, %v4996
      %v5222 = vadd.f32 %v5190, %v4998
      %v5223 = vadd.f32 %v5191, %v5000
      %v5224 = vadd.f32 %v5192, %v5002
      %v5225 = vadd.f32 %v5193, %v5004
      %v5226 = vadd.f32 %v5194, %v5006
      %v5227 = vadd.f32 %v5195, %v5008
      %v5228 = vadd.f32 %v5196, %v5010
      %v5229 = vadd.f32 %v5197, %v5012
      %v5230 = vadd.f32 %v5198, %v5014
      %v5231 = vadd.f32 %v5199, %v5016
      %v5232 = vadd.f32 %v5200, %v5018
      %v5233 = vadd.f32 %v5201, %v5020
      %v5234 = vadd.f32 %v5202, %v5022
      %v5235 = vadd.f32 %v5203, %v5024
      %v5236 = vadd.f32 %v5204, %v5026
      %v5237 = vadd.f32 %v5205, %v5028
      %v5238 = vadd.f32 %v5206, %v5030
      %v5239 = vadd.f32 %v5207, %v5032
      %v5240 = vadd.f32 %v5208, %v5034
      %v5241 = vadd.f32 %v5209, %v5036
      %v5242 = vadd.f32 %v5210, %v5038
      %v5243 = vadd.f32 %v5211, %v5040
      %v5244 = vadd.f32 %v5212, %v5042
      %v5245 = vadd.f32 %v5213, %v5044
      %v5246 = vadd.f32 %v5214, %v5046
      %v5247 = vadd.f32 %v5215, %v5048
      %v5248 = vadd.f32 %v5216, %v5050
      %v5249 = vadd.f32 %v5217, %v5052
      %v5250 = vadd.f32 %v5218, %v5054
      %5251 = vst [vmem:[%s358] sm:$0xff] %v5219
      %5252 = vst [vmem:[%s358 + $0x8] sm:$0xff] %v5220
      %5253 = vst [vmem:[%s358 + $0x10] sm:$0xff] %v5221
      %5254 = vst [vmem:[%s358 + $0x18] sm:$0xff] %v5222
      %5255 = vst [vmem:[%s358 + $0x20] sm:$0xff] %v5223
      %5256 = vst [vmem:[%s358 + $0x28] sm:$0xff] %v5224
      %5257 = vst [vmem:[%s358 + $0x30] sm:$0xff] %v5225
      %5258 = vst [vmem:[%s358 + $0x38] sm:$0xff] %v5226
      %5259 = vst [vmem:[%s358 + $0x40] sm:$0xff] %v5227
      %5260 = vst [vmem:[%s358 + $0x48] sm:$0xff] %v5228
      %5261 = vst [vmem:[%s358 + $0x50] sm:$0xff] %v5229
      %5262 = vst [vmem:[%s358 + $0x58] sm:$0xff] %v5230
      %5263 = vst [vmem:[%s358 + $0x60] sm:$0xff] %v5231
      %5264 = vst [vmem:[%s358 + $0x68] sm:$0xff] %v5232
      %5265 = vst [vmem:[%s358 + $0x70] sm:$0xff] %v5233
      %5266 = vst [vmem:[%s358 + $0x78] sm:$0xff] %v5234
      %5267 = vst [vmem:[%s358 + $0x80] sm:$0xff] %v5235
      %5268 = vst [vmem:[%s358 + $0x88] sm:$0xff] %v5236
      %5269 = vst [vmem:[%s358 + $0x90] sm:$0xff] %v5237
      %5270 = vst [vmem:[%s358 + $0x98] sm:$0xff] %v5238
      %5271 = vst [vmem:[%s358 + $0xa0] sm:$0xff] %v5239
      %5272 = vst [vmem:[%s358 + $0xa8] sm:$0xff] %v5240
      %5273 = vst [vmem:[%s358 + $0xb0] sm:$0xff] %v5241
      %5274 = vst [vmem:[%s358 + $0xb8] sm:$0xff] %v5242
      %5275 = vst [vmem:[%s358 + $0xc0] sm:$0xff] %v5243
      %5276 = vst [vmem:[%s358 + $0xc8] sm:$0xff] %v5244
      %5277 = vst [vmem:[%s358 + $0xd0] sm:$0xff] %v5245
      %5278 = vst [vmem:[%s358 + $0xd8] sm:$0xff] %v5246
      %5279 = vst [vmem:[%s358 + $0xe0] sm:$0xff] %v5247
      %5280 = vst [vmem:[%s358 + $0xe8] sm:$0xff] %v5248
      %5281 = vst [vmem:[%s358 + $0xf0] sm:$0xff] %v5249
      %5282 = vst [vmem:[%s358 + $0xf8] sm:$0xff] %v5250
      %s5283 = smul.u32 16, %s23
      %p5284 = scmp.lt.s32.totalorder %s22, 1
      %s5285 = scalar_select %p5284, %s22, 1
      %p5286 = scmp.lt.s32.totalorder %s5283, 15
      %s5287 = scalar_select %p5286, %s5283, 15
      %s5288 = smul.addr %s5287, 2
      %s5289 = smul.addr %s5285, 32
      %s5290 = sadd.s32 %s5288, %s5289
      %s5291 = smul.addr %s5290, 8
      %s5292 = scalar_lea.vmem %s7, %s5291
      // Predicated region
      $region53: #{spade_forward.1} parent=47 // pred_check
        %p5293 = pneg %p214
      $region54: #{spade_forward.1} parent=47 // pred_check_branch
        %5295 = sbr.rel (%p5293) target = $region56
      $region55: #{spade_forward.1} parent=47 // pred_region
        %s5296 = smul.u32 16, %s23
      $region56: #{spade_forward.1} parent=47 // pred_fallthru
        _
    $region48: #{spade_forward.1} parent=5 // pred_fallthru
      _
    %p5297 = scmp.le.s32.totalorder 2, %s13
    // Predicated region
    $region57: #{spade_forward.1} parent=5 // pred_check
      %p5298 = pneg %p5297
    $region58: #{spade_forward.1} parent=5 // pred_check_branch
      %5300 = sbr.rel (%p5298) target = $region60
    $region59: #{spade_forward.1} parent=5 // pred_region
      %s5301 = ssub.s32 %s13, 2
      // Predicated region
      $region61: #{spade_forward.1} parent=59 // pred_check
        %p5302 = pneg %p220
      $region62: #{spade_forward.1} parent=59 // pred_check_branch
        %5304 = sbr.rel (%p5302) target = $region64
      $region63: #{spade_forward.1} parent=59 // pred_region
        %s5305 = smul.u32 16, %s25
        %p5306 = scmp.lt.s32.totalorder %s24, 1
        %s5307 = scalar_select %p5306, %s24, 1
        %p5308 = scmp.lt.s32.totalorder %s5305, 15
        %s5309 = scalar_select %p5308, %s5305, 15
        %s5310 = smul.addr %s5309, 2
        %s5311 = smul.addr %s5307, 32
        %s5312 = sadd.s32 %s5310, %s5311
        %s5313 = smul.addr %s5312, 8
        %s5314 = scalar_lea.vmem %s7, %s5313
      $region64: #{spade_forward.1} parent=59 // pred_fallthru
        _
    $region60: #{spade_forward.1} parent=5 // pred_fallthru
      _
  $region6: #{spade_forward.1} parent=0 // loop_footer
    %s17 = sadd.s32 1, %s13
  $region7: #{spade_forward.1} parent=0 // loop_footer_branch
    %12 = sbr.rel target = $region3
  $region8: #{spade_forward.1} parent=0 // loop_exit
    _

</llo_original>
